<compile_context>
chip_gen: v6e
topology: v6e:2x2x1
jax: 0.10.0
libtpu: 0.0.40
codegen_flags: <defaults>
</compile_context>

<pallas_src>
import jax
import jax.numpy as jnp
from jax.experimental import pallas as pl
from jax.experimental.pallas import tpu as pltpu

D_IN = 2
HIDDEN = (512, 512, 512, 512)
D_OUT = 1

_LANE = 128  # batch is padded to a multiple of the lane width


def _silu(z):
    return z * jax.nn.sigmoid(z)


def classifier_kernel(x_ref,
                      w1_ref, b1_ref,
                      w2_ref, b2_ref,
                      w3_ref, b3_ref,
                      w4_ref, b4_ref,
                      w5_ref, b5_ref,
                      out_ref):
    """One batch tile of the full forward pass."""
    xb = x_ref[...].astype(jnp.float32)                         # (tile_b, 2)

    # ---- Layer 1 (K = 2): VPU broadcast-FMA, skip the MXU entirely. -------
    w1 = w1_ref[...]                                            # (2, 512) f32
    z1 = xb[:, 0:1] * w1[0:1, :] + xb[:, 1:2] * w1[1:2, :] + b1_ref[...]
    h = _silu(z1).astype(jnp.bfloat16)                          # (tile_b, 512)

    # ---- Layers 2-4: bf16 MXU matmuls, f32 accumulation, f32 SiLU. --------
    for w_ref, b_ref in ((w2_ref, b2_ref), (w3_ref, b3_ref), (w4_ref, b4_ref)):
        z = jnp.dot(h, w_ref[...],
                    preferred_element_type=jnp.float32) + b_ref[...]
        h = _silu(z).astype(jnp.bfloat16)

    # ---- Layer 5 (N = 1): cross-lane reduce; keep the output lane-dense. --
    logits = jnp.sum(h.astype(jnp.float32) * w5_ref[...], axis=-1)  # (tile_b,)
    logits = logits[None, :] + b5_ref[...]                      # (1, tile_b)
    out_ref[...] = jax.nn.sigmoid(logits).astype(out_ref.dtype)


def _pick_tile_b(b_pad):
    """Largest tile dividing b_pad that still leaves >= 2 grid steps.

    The >=2-step constraint keeps both v7x TensorCores busy (grid axis is
    marked "parallel").  When b_pad == 128 there is only one tile's worth of
    work, so a single-step grid is unavoidable (and harmless).
    """
    for t in (2048, 1024, 512, 256, 128):
        if b_pad % t == 0 and b_pad // t >= 2:
            return t
    return min(b_pad, 2048)


@jax.jit
def classifier_forward(x, params):
    """x: (B, 2) float32.  params: list of (W, b) with W=(in, out), b=(1, out)."""
    B = x.shape[0]
    b_pad = -(-B // _LANE) * _LANE
    tile_b = _pick_tile_b(b_pad)
    num_tiles = b_pad // tile_b

    if b_pad != B:
        x = jnp.pad(x, ((0, b_pad - B), (0, 0)))

    (w1, b1), (w2, b2), (w3, b3), (w4, b4), (w5, b5) = params

    # Cast MXU-layer weights to bf16 once, outside the kernel.
    w1 = w1.astype(jnp.float32)
    w2 = w2.astype(jnp.bfloat16)
    w3 = w3.astype(jnp.bfloat16)
    w4 = w4.astype(jnp.bfloat16)
    # Final layer as a lane-dense row vector + scalar-ish bias.
    w5r = w5.reshape(1, HIDDEN[-1]).astype(jnp.float32)         # (1, 512)
    b5r = b5.reshape(1, 1).astype(jnp.float32)                  # (1, 1)

    weights = (w1, b1, w2, b2, w3, b3, w4, b4, w5r, b5r)

    def full_spec(arr):
        # Constant index map -> DMA'd once, reused across all grid steps.
        return pl.BlockSpec(arr.shape, lambda i: (0, 0))

    # Advisory cost hint for XLA scheduling around the kernel.
    flops = 2 * b_pad * (D_IN * HIDDEN[0]
                         + HIDDEN[0] * HIDDEN[1]
                         + HIDDEN[1] * HIDDEN[2]
                         + HIDDEN[2] * HIDDEN[3]
                         + HIDDEN[3] * D_OUT)
    transcendentals = b_pad * (sum(HIDDEN) + D_OUT)     # one exp per SiLU/sigmoid
    bytes_accessed = (b_pad * D_IN * 4 + b_pad * 4
                      + sum(int(a.size) * a.dtype.itemsize for a in weights))
    cost = pl.CostEstimate(flops=flops,
                           transcendentals=transcendentals,
                           bytes_accessed=bytes_accessed)

    out2d = pl.pallas_call(
        classifier_kernel,
        out_shape=jax.ShapeDtypeStruct((1, b_pad), jnp.float32),
        grid_spec=pltpu.PrefetchScalarGridSpec(
            num_scalar_prefetch=0,
            grid=(num_tiles,),
            in_specs=[
                # Per-tile x block: O(tile_b) VMEM, DMA hidden by the pipeline.
                pl.BlockSpec((tile_b, D_IN), lambda i: (i, 0)),
                full_spec(w1), full_spec(b1),
                full_spec(w2), full_spec(b2),
                full_spec(w3), full_spec(b3),
                full_spec(w4), full_spec(b4),
                full_spec(w5r), full_spec(b5r),
            ],
            # Lane-dense output: batch lives in the lane dimension.
            out_specs=pl.BlockSpec((1, tile_b), lambda i: (0, i)),
        ),
        compiler_params=pltpu.CompilerParams(
            dimension_semantics=("parallel",),
            vmem_limit_bytes=32 * 1024 * 1024),
        cost_estimate=cost,
    )(x, *weights)

    return out2d.reshape(-1)[:B, None]                          # (B, 1)


def init_params(key):
    """Deterministic init mimicking PyTorch nn.Linear default U[-1/sqrt(fan_in), +]."""
    dims = [D_IN, *HIDDEN, D_OUT]
    params = []
    for in_d, out_d in zip(dims[:-1], dims[1:]):
        key, kw, kb = jax.random.split(key, 3)
        bound = 1.0 / jnp.sqrt(jnp.float32(in_d))
        w = jax.random.uniform(kw, (in_d, out_d), jnp.float32, -bound, bound)
        b = jax.random.uniform(kb, (1, out_d), jnp.float32, -bound, bound)
        params.append((w, b))
    return params


def reference_forward_f32(x, params):
    """Pure-f32 JAX reference of the PyTorch forward."""
    h = x
    for w, b in params[:-1]:
        h = _silu(h @ w + b)
    w, b = params[-1]
    return jax.nn.sigmoid(h @ w + b)


def reference_forward_mixed(x, params):
    """Reference that emulates the kernel's precision (bf16 activations/MXU, f32 edges)."""
    (w1, b1), (w2, b2), (w3, b3), (w4, b4), (w5, b5) = params
    h = _silu(x @ w1 + b1).astype(jnp.bfloat16)
    for w, b in ((w2, b2), (w3, b3), (w4, b4)):
        z = jnp.dot(h, w.astype(jnp.bfloat16),
                    preferred_element_type=jnp.float32) + b
        h = _silu(z).astype(jnp.bfloat16)
    return jax.nn.sigmoid(h.astype(jnp.float32) @ w5 + b5)


if __name__ == "__main__":
    key = jax.random.PRNGKey(0)
    kp, kx = jax.random.split(key)

    params = init_params(kp)
    x = jax.random.normal(kx, (128, D_IN), jnp.float32)   # batch=128, d=2

    out = jax.block_until_ready(classifier_forward(x, params))
    assert out.shape == (128, 1), out.shape

    ref_mixed = reference_forward_mixed(x, params)
    ref_f32 = reference_forward_f32(x, params)
    # Tight check against the precision-matched reference.
    assert jnp.allclose(out, ref_mixed, atol=2e-3, rtol=2e-3), (
        float(jnp.max(jnp.abs(out - ref_mixed))))
    # Loose sanity check against the pure-f32 reference (bf16 matmul inputs).
    assert jnp.allclose(out, ref_f32, atol=3e-2, rtol=3e-2), (
        float(jnp.max(jnp.abs(out - ref_f32))))

    print("KERNEL_OK")
</pallas_src>

<mosaic_0001>
module attributes {stable_mosaic.version = 11 : i64} {
  func.func @classifier_kernel(%arg0: i32, %arg1: memref<128x2xf32, #tpu.memory_space<vmem>>, %arg2: memref<2x512xf32, #tpu.memory_space<vmem>>, %arg3: memref<1x512xf32, #tpu.memory_space<vmem>>, %arg4: memref<512x512xbf16, #tpu.memory_space<vmem>>, %arg5: memref<1x512xf32, #tpu.memory_space<vmem>>, %arg6: memref<512x512xbf16, #tpu.memory_space<vmem>>, %arg7: memref<1x512xf32, #tpu.memory_space<vmem>>, %arg8: memref<512x512xbf16, #tpu.memory_space<vmem>>, %arg9: memref<1x512xf32, #tpu.memory_space<vmem>>, %arg10: memref<1x512xf32, #tpu.memory_space<vmem>>, %arg11: memref<1x1xf32, #tpu.memory_space<vmem>>, %arg12: memref<1x128xf32, #tpu.memory_space<vmem>>) attributes {dimension_semantics = [#tpu.dimension_semantics<parallel>], iteration_bounds = array<i64: 1>, scalar_prefetch = 0 : i64, scratch_operands = 0 : i64, tpu.core_type = #tpu.core_type<tc>, window_params = [{transform_indices = @transform_0, window_bounds = array<i64: 128, 2>}, {pipeline_mode = #tpu.pipeline_mode<synchronous>, transform_indices = @transform_1, window_bounds = array<i64: 2, 512>}, {pipeline_mode = #tpu.pipeline_mode<synchronous>, transform_indices = @transform_2, window_bounds = array<i64: 1, 512>}, {pipeline_mode = #tpu.pipeline_mode<synchronous>, transform_indices = @transform_3, window_bounds = array<i64: 512, 512>}, {pipeline_mode = #tpu.pipeline_mode<synchronous>, transform_indices = @transform_4, window_bounds = array<i64: 1, 512>}, {pipeline_mode = #tpu.pipeline_mode<synchronous>, transform_indices = @transform_5, window_bounds = array<i64: 512, 512>}, {pipeline_mode = #tpu.pipeline_mode<synchronous>, transform_indices = @transform_6, window_bounds = array<i64: 1, 512>}, {pipeline_mode = #tpu.pipeline_mode<synchronous>, transform_indices = @transform_7, window_bounds = array<i64: 512, 512>}, {pipeline_mode = #tpu.pipeline_mode<synchronous>, transform_indices = @transform_8, window_bounds = array<i64: 1, 512>}, {pipeline_mode = #tpu.pipeline_mode<synchronous>, transform_indices = @transform_9, window_bounds = array<i64: 1, 512>}, {pipeline_mode = #tpu.pipeline_mode<synchronous>, transform_indices = @transform_10, window_bounds = array<i64: 1, 1>}, {transform_indices = @transform_11, window_bounds = array<i64: 1, 128>}]} {
    %c0 = arith.constant 0 : index
    %c0_0 = arith.constant 0 : index
    %0 = vector.load %arg1[%c0, %c0_0] : memref<128x2xf32, #tpu.memory_space<vmem>>, vector<128x2xf32>
    %c0_1 = arith.constant 0 : index
    %c0_2 = arith.constant 0 : index
    %1 = vector.load %arg2[%c0_1, %c0_2] : memref<2x512xf32, #tpu.memory_space<vmem>>, vector<2x512xf32>
    %2 = vector.extract_strided_slice %0 {offsets = [0, 0], sizes = [128, 1], strides = [1, 1]} : vector<128x2xf32> to vector<128x1xf32>
    %3 = vector.extract_strided_slice %1 {offsets = [0, 0], sizes = [1, 512], strides = [1, 1]} : vector<2x512xf32> to vector<1x512xf32>
    %4 = vector.broadcast %2 : vector<128x1xf32> to vector<128x512xf32>
    %5 = vector.broadcast %3 : vector<1x512xf32> to vector<128x512xf32>
    %6 = arith.mulf %4, %5 : vector<128x512xf32>
    %7 = vector.extract_strided_slice %0 {offsets = [0, 1], sizes = [128, 1], strides = [1, 1]} : vector<128x2xf32> to vector<128x1xf32>
    %8 = vector.extract_strided_slice %1 {offsets = [1, 0], sizes = [1, 512], strides = [1, 1]} : vector<2x512xf32> to vector<1x512xf32>
    %9 = vector.broadcast %7 : vector<128x1xf32> to vector<128x512xf32>
    %10 = vector.broadcast %8 : vector<1x512xf32> to vector<128x512xf32>
    %11 = arith.mulf %9, %10 : vector<128x512xf32>
    %12 = arith.addf %6, %11 : vector<128x512xf32>
    %c0_3 = arith.constant 0 : index
    %c0_4 = arith.constant 0 : index
    %13 = vector.load %arg3[%c0_3, %c0_4] : memref<1x512xf32, #tpu.memory_space<vmem>>, vector<1x512xf32>
    %14 = vector.broadcast %13 : vector<1x512xf32> to vector<128x512xf32>
    %15 = arith.addf %12, %14 : vector<128x512xf32>
    %16 = arith.negf %15 : vector<128x512xf32>
    %17 = math.exp %16 : vector<128x512xf32>
    %cst = arith.constant 1.000000e+00 : f32
    %18 = vector.broadcast %cst : f32 to vector<128x512xf32>
    %19 = arith.addf %18, %17 : vector<128x512xf32>
    %20 = arith.divf %18, %19 : vector<128x512xf32>
    %21 = arith.mulf %15, %20 : vector<128x512xf32>
    %22 = arith.truncf %21 : vector<128x512xf32> to vector<128x512xbf16>
    %c0_5 = arith.constant 0 : index
    %c0_6 = arith.constant 0 : index
    %23 = vector.load %arg4[%c0_5, %c0_6] : memref<512x512xbf16, #tpu.memory_space<vmem>>, vector<512x512xbf16>
    %cst_7 = arith.constant dense<0.000000e+00> : vector<128x512xf32>
    %24 = tpu.matmul %22, %23, %cst_7 {dimension_numbers = #tpu.dot_dimension_numbers<[1], [0], [0], [1], [0, 0, 1, 1], [], []>} : vector<128x512xbf16>, vector<512x512xbf16>, vector<128x512xf32> -> vector<128x512xf32>
    %c0_8 = arith.constant 0 : index
    %c0_9 = arith.constant 0 : index
    %25 = vector.load %arg5[%c0_8, %c0_9] : memref<1x512xf32, #tpu.memory_space<vmem>>, vector<1x512xf32>
    %26 = vector.broadcast %25 : vector<1x512xf32> to vector<128x512xf32>
    %27 = arith.addf %24, %26 : vector<128x512xf32>
    %28 = arith.negf %27 : vector<128x512xf32>
    %29 = math.exp %28 : vector<128x512xf32>
    %cst_10 = arith.constant 1.000000e+00 : f32
    %30 = vector.broadcast %cst_10 : f32 to vector<128x512xf32>
    %31 = arith.addf %30, %29 : vector<128x512xf32>
    %32 = arith.divf %30, %31 : vector<128x512xf32>
    %33 = arith.mulf %27, %32 : vector<128x512xf32>
    %34 = arith.truncf %33 : vector<128x512xf32> to vector<128x512xbf16>
    %c0_11 = arith.constant 0 : index
    %c0_12 = arith.constant 0 : index
    %35 = vector.load %arg6[%c0_11, %c0_12] : memref<512x512xbf16, #tpu.memory_space<vmem>>, vector<512x512xbf16>
    %cst_13 = arith.constant dense<0.000000e+00> : vector<128x512xf32>
    %36 = tpu.matmul %34, %35, %cst_13 {dimension_numbers = #tpu.dot_dimension_numbers<[1], [0], [0], [1], [0, 0, 1, 1], [], []>} : vector<128x512xbf16>, vector<512x512xbf16>, vector<128x512xf32> -> vector<128x512xf32>
    %c0_14 = arith.constant 0 : index
    %c0_15 = arith.constant 0 : index
    %37 = vector.load %arg7[%c0_14, %c0_15] : memref<1x512xf32, #tpu.memory_space<vmem>>, vector<1x512xf32>
    %38 = vector.broadcast %37 : vector<1x512xf32> to vector<128x512xf32>
    %39 = arith.addf %36, %38 : vector<128x512xf32>
    %40 = arith.negf %39 : vector<128x512xf32>
    %41 = math.exp %40 : vector<128x512xf32>
    %cst_16 = arith.constant 1.000000e+00 : f32
    %42 = vector.broadcast %cst_16 : f32 to vector<128x512xf32>
    %43 = arith.addf %42, %41 : vector<128x512xf32>
    %44 = arith.divf %42, %43 : vector<128x512xf32>
    %45 = arith.mulf %39, %44 : vector<128x512xf32>
    %46 = arith.truncf %45 : vector<128x512xf32> to vector<128x512xbf16>
    %c0_17 = arith.constant 0 : index
    %c0_18 = arith.constant 0 : index
    %47 = vector.load %arg8[%c0_17, %c0_18] : memref<512x512xbf16, #tpu.memory_space<vmem>>, vector<512x512xbf16>
    %cst_19 = arith.constant dense<0.000000e+00> : vector<128x512xf32>
    %48 = tpu.matmul %46, %47, %cst_19 {dimension_numbers = #tpu.dot_dimension_numbers<[1], [0], [0], [1], [0, 0, 1, 1], [], []>} : vector<128x512xbf16>, vector<512x512xbf16>, vector<128x512xf32> -> vector<128x512xf32>
    %c0_20 = arith.constant 0 : index
    %c0_21 = arith.constant 0 : index
    %49 = vector.load %arg9[%c0_20, %c0_21] : memref<1x512xf32, #tpu.memory_space<vmem>>, vector<1x512xf32>
    %50 = vector.broadcast %49 : vector<1x512xf32> to vector<128x512xf32>
    %51 = arith.addf %48, %50 : vector<128x512xf32>
    %52 = arith.negf %51 : vector<128x512xf32>
    %53 = math.exp %52 : vector<128x512xf32>
    %cst_22 = arith.constant 1.000000e+00 : f32
    %54 = vector.broadcast %cst_22 : f32 to vector<128x512xf32>
    %55 = arith.addf %54, %53 : vector<128x512xf32>
    %56 = arith.divf %54, %55 : vector<128x512xf32>
    %57 = arith.mulf %51, %56 : vector<128x512xf32>
    %58 = arith.truncf %57 : vector<128x512xf32> to vector<128x512xbf16>
    %59 = arith.extf %58 : vector<128x512xbf16> to vector<128x512xf32>
    %c0_23 = arith.constant 0 : index
    %c0_24 = arith.constant 0 : index
    %60 = vector.load %arg10[%c0_23, %c0_24] : memref<1x512xf32, #tpu.memory_space<vmem>>, vector<1x512xf32>
    %61 = vector.broadcast %60 : vector<1x512xf32> to vector<128x512xf32>
    %62 = arith.mulf %59, %61 : vector<128x512xf32>
    %cst_25 = arith.constant dense<0.000000e+00> : vector<128xf32>
    %63 = vector.multi_reduction <add>, %62, %cst_25 [1] : vector<128x512xf32> to vector<128xf32>
    %64 = vector.shape_cast %63 : vector<128xf32> to vector<1x128xf32>
    %c0_26 = arith.constant 0 : index
    %c0_27 = arith.constant 0 : index
    %65 = vector.load %arg11[%c0_26, %c0_27] : memref<1x1xf32, #tpu.memory_space<vmem>>, vector<1x1xf32>
    %66 = vector.broadcast %65 : vector<1x1xf32> to vector<1x128xf32>
    %67 = arith.addf %64, %66 : vector<1x128xf32>
    %68 = arith.negf %67 : vector<1x128xf32>
    %69 = math.exp %68 : vector<1x128xf32>
    %cst_28 = arith.constant 1.000000e+00 : f32
    %70 = vector.broadcast %cst_28 : f32 to vector<1x128xf32>
    %71 = arith.addf %70, %69 : vector<1x128xf32>
    %72 = arith.divf %70, %71 : vector<1x128xf32>
    %c0_29 = arith.constant 0 : index
    %c0_30 = arith.constant 0 : index
    %73 = vector.load %arg12[%c0_29, %c0_30] : memref<1x128xf32, #tpu.memory_space<vmem>>, vector<1x128xf32>
    tpu.vector_store %arg12[%c0_29, %c0_30], %72 {strides = array<i32>} : memref<1x128xf32, #tpu.memory_space<vmem>>, vector<1x128xf32>,
    return
  }
  func.func @transform_0(%arg0: i32) -> (i32, i32) {
    %c0_i32 = arith.constant 0 : i32
    %c0_i32_0 = arith.constant 0 : i32
    return %arg0, %c0_i32 : i32, i32
  }
  func.func @transform_1(%arg0: i32) -> (i32, i32) {
    %c0_i32 = arith.constant 0 : i32
    %c0_i32_0 = arith.constant 0 : i32
    %c0_i32_1 = arith.constant 0 : i32
    return %c0_i32, %c0_i32_0 : i32, i32
  }
  func.func @transform_2(%arg0: i32) -> (i32, i32) {
    %c0_i32 = arith.constant 0 : i32
    %c0_i32_0 = arith.constant 0 : i32
    %c0_i32_1 = arith.constant 0 : i32
    return %c0_i32, %c0_i32_0 : i32, i32
  }
  func.func @transform_3(%arg0: i32) -> (i32, i32) {
    %c0_i32 = arith.constant 0 : i32
    %c0_i32_0 = arith.constant 0 : i32
    %c0_i32_1 = arith.constant 0 : i32
    return %c0_i32, %c0_i32_0 : i32, i32
  }
  func.func @transform_4(%arg0: i32) -> (i32, i32) {
    %c0_i32 = arith.constant 0 : i32
    %c0_i32_0 = arith.constant 0 : i32
    %c0_i32_1 = arith.constant 0 : i32
    return %c0_i32, %c0_i32_0 : i32, i32
  }
  func.func @transform_5(%arg0: i32) -> (i32, i32) {
    %c0_i32 = arith.constant 0 : i32
    %c0_i32_0 = arith.constant 0 : i32
    %c0_i32_1 = arith.constant 0 : i32
    return %c0_i32, %c0_i32_0 : i32, i32
  }
  func.func @transform_6(%arg0: i32) -> (i32, i32) {
    %c0_i32 = arith.constant 0 : i32
    %c0_i32_0 = arith.constant 0 : i32
    %c0_i32_1 = arith.constant 0 : i32
    return %c0_i32, %c0_i32_0 : i32, i32
  }
  func.func @transform_7(%arg0: i32) -> (i32, i32) {
    %c0_i32 = arith.constant 0 : i32
    %c0_i32_0 = arith.constant 0 : i32
    %c0_i32_1 = arith.constant 0 : i32
    return %c0_i32, %c0_i32_0 : i32, i32
  }
  func.func @transform_8(%arg0: i32) -> (i32, i32) {
    %c0_i32 = arith.constant 0 : i32
    %c0_i32_0 = arith.constant 0 : i32
    %c0_i32_1 = arith.constant 0 : i32
    return %c0_i32, %c0_i32_0 : i32, i32
  }
  func.func @transform_9(%arg0: i32) -> (i32, i32) {
    %c0_i32 = arith.constant 0 : i32
    %c0_i32_0 = arith.constant 0 : i32
    %c0_i32_1 = arith.constant 0 : i32
    return %c0_i32, %c0_i32_0 : i32, i32
  }
  func.func @transform_10(%arg0: i32) -> (i32, i32) {
    %c0_i32 = arith.constant 0 : i32
    %c0_i32_0 = arith.constant 0 : i32
    %c0_i32_1 = arith.constant 0 : i32
    return %c0_i32, %c0_i32_0 : i32, i32
  }
  func.func @transform_11(%arg0: i32) -> (i32, i32) {
    %c0_i32 = arith.constant 0 : i32
    %c0_i32_0 = arith.constant 0 : i32
    return %c0_i32, %arg0 : i32, i32
  }
}

</mosaic_0001>

<llo_original>
// kernel: classifier_forward.1
$region0: #{classifier_forward.1}
  #allocation0 [shape = 'u32[]', space=smem, size = 0x4, offset = 0x4, fixed_abs, tag = 'smem constant byte address 0x4 - core index']
  #allocation1 [shape = 'u32[144,128]{1,0:T(1,128)}', space=vmem, size = 0x12000, scoped, tag = 'internal scratch']
  #allocation2 [shape = 'f32[1,1]{1,0:T(1,128)S(1)}', space=vmem, size = 0x200, scoped, tag = 'scoped memory for classifier_forward.1']
  %s0 = inlined_call_operand.vmem [shape: f32[128,2], index: 0, kind: input, shape index: {}]
  %s1 = inlined_call_operand.vmem [shape: f32[2,512], index: 1, kind: input, shape index: {}]
  %s2 = inlined_call_operand.vmem [shape: f32[1,512], index: 2, kind: input, shape index: {}]
  %s3 = inlined_call_operand.vmem [shape: bf16[512,512], index: 3, kind: input, shape index: {}]
  %s4 = inlined_call_operand.vmem [shape: f32[1,512], index: 4, kind: input, shape index: {}]
  %s5 = inlined_call_operand.vmem [shape: bf16[512,512], index: 5, kind: input, shape index: {}]
  %s6 = inlined_call_operand.vmem [shape: f32[1,512], index: 6, kind: input, shape index: {}]
  %s7 = inlined_call_operand.vmem [shape: bf16[512,512], index: 7, kind: input, shape index: {}]
  %s8 = inlined_call_operand.vmem [shape: f32[1,512], index: 8, kind: input, shape index: {}]
  %s9 = inlined_call_operand.vmem [shape: f32[1,512], index: 9, kind: input, shape index: {}]
  %s10 = inlined_call_operand.<no memory space> [shape: f32[1,1], index: 10, kind: input, shape index: {}]
  %s11 = inlined_call_operand.hbm [shape: f32[1,128], index: 11, kind: output, shape index: {}]
  %s12 = sld [smem:[#allocation0]]
  $region54: #{classifier_forward.1} parent=0
    _
  %s14 = ssub.s32 1, %s12
  %s15 = scalar_select 0, %s14, %s12
  %v16 = vstv %s10
  %17 = vst [vmem:[#allocation2] sm:$0x1] %v16
  $region1: #{classifier_forward.1} parent=0
    #allocation3 [shape = 'u8[512]{0}', space=vmem, size = 0x400, scoped, tag = 'output window, operand 0, single buffered']
    #allocation4 [shape = 's32[1]{0}', space=sflag, size = 0x4, scoped, tag = 'scoped memory for classifier_forward.1']
    %18 = vsyncpa [#allocation4], 0
    // Predicated region
    $region2: #{classifier_forward.1} parent=1 // pred_check
      _
    $region3: #{classifier_forward.1} parent=1 // pred_check_branch
      %20 = sbr.rel (0) target = $region5
    $region4: #{classifier_forward.1} parent=1 // pred_region
      _
    $region5: #{classifier_forward.1} parent=1 // pred_fallthru
      _
    // Predicated region
    $region6: #{classifier_forward.1} parent=1 // pred_check
      _
    $region7: #{classifier_forward.1} parent=1 // pred_check_branch
      %22 = sbr.rel (0) target = $region9
    $region8: #{classifier_forward.1} parent=1 // pred_region
      _
    $region9: #{classifier_forward.1} parent=1 // pred_fallthru
      _
    // Predicated region
    $region10: #{classifier_forward.1} parent=1 // pred_check
      _
    $region11: #{classifier_forward.1} parent=1 // pred_check_branch
      %24 = sbr.rel (0) target = $region13
    $region12: #{classifier_forward.1} parent=1 // pred_region
      _
    $region13: #{classifier_forward.1} parent=1 // pred_fallthru
      _
    // Predicated region
    $region14: #{classifier_forward.1} parent=1 // pred_check
      _
    $region15: #{classifier_forward.1} parent=1 // pred_check_branch
      %26 = sbr.rel (0) target = $region17
    $region16: #{classifier_forward.1} parent=1 // pred_region
      _
    $region17: #{classifier_forward.1} parent=1 // pred_fallthru
      _
    // Predicated region
    $region18: #{classifier_forward.1} parent=1 // pred_check
      _
    $region19: #{classifier_forward.1} parent=1 // pred_check_branch
      %28 = sbr.rel (0) target = $region21
    $region20: #{classifier_forward.1} parent=1 // pred_region
      _
    $region21: #{classifier_forward.1} parent=1 // pred_fallthru
      _
    // Predicated region
    $region22: #{classifier_forward.1} parent=1 // pred_check
      _
    $region23: #{classifier_forward.1} parent=1 // pred_check_branch
      %30 = sbr.rel (0) target = $region25
    $region24: #{classifier_forward.1} parent=1 // pred_region
      _
    $region25: #{classifier_forward.1} parent=1 // pred_fallthru
      _
    // Predicated region
    $region26: #{classifier_forward.1} parent=1 // pred_check
      _
    $region27: #{classifier_forward.1} parent=1 // pred_check_branch
      %32 = sbr.rel (0) target = $region29
    $region28: #{classifier_forward.1} parent=1 // pred_region
      _
    $region29: #{classifier_forward.1} parent=1 // pred_fallthru
      _
    // Predicated region
    $region30: #{classifier_forward.1} parent=1 // pred_check
      _
    $region31: #{classifier_forward.1} parent=1 // pred_check_branch
      %34 = sbr.rel (0) target = $region33
    $region32: #{classifier_forward.1} parent=1 // pred_region
      _
    $region33: #{classifier_forward.1} parent=1 // pred_fallthru
      _
    // Predicated region
    $region34: #{classifier_forward.1} parent=1 // pred_check
      _
    $region35: #{classifier_forward.1} parent=1 // pred_check_branch
      %36 = sbr.rel (0) target = $region37
    $region36: #{classifier_forward.1} parent=1 // pred_region
      _
    $region37: #{classifier_forward.1} parent=1 // pred_fallthru
      _
    // Predicated region
    $region38: #{classifier_forward.1} parent=1 // pred_check
      _
    $region39: #{classifier_forward.1} parent=1 // pred_check_branch
      %38 = sbr.rel (0) target = $region41
    $region40: #{classifier_forward.1} parent=1 // pred_region
      _
    $region41: #{classifier_forward.1} parent=1 // pred_fallthru
      _
    // Predicated region
    $region42: #{classifier_forward.1} parent=1 // pred_check
      _
    $region43: #{classifier_forward.1} parent=1 // pred_check_branch
      %40 = sbr.rel (0) target = $region45
    $region44: #{classifier_forward.1} parent=1 // pred_region
      _
    $region45: #{classifier_forward.1} parent=1 // pred_fallthru
      _
    %v41 = vld [vmem:[%s0] sm:$0xff]
    %v42 = vld [vmem:[%s0 + $0x8] sm:$0xff]
    %v43 = vld [vmem:[%s0 + $0x10] sm:$0xff]
    %v44 = vld [vmem:[%s0 + $0x18] sm:$0xff]
    %v45 = vld [vmem:[%s0 + $0x20] sm:$0xff]
    %v46 = vld [vmem:[%s0 + $0x28] sm:$0xff]
    %v47 = vld [vmem:[%s0 + $0x30] sm:$0xff]
    %v48 = vld [vmem:[%s0 + $0x38] sm:$0xff]
    %v49 = vld [vmem:[%s0 + $0x40] sm:$0xff]
    %v50 = vld [vmem:[%s0 + $0x48] sm:$0xff]
    %v51 = vld [vmem:[%s0 + $0x50] sm:$0xff]
    %v52 = vld [vmem:[%s0 + $0x58] sm:$0xff]
    %v53 = vld [vmem:[%s0 + $0x60] sm:$0xff]
    %v54 = vld [vmem:[%s0 + $0x68] sm:$0xff]
    %v55 = vld [vmem:[%s0 + $0x70] sm:$0xff]
    %v56 = vld [vmem:[%s0 + $0x78] sm:$0xff]
    %v57 = vld [vmem:[%s1] sm:$0xff]
    %59 = vset.pattern.permute.xlu0 0
    %60 = vperm.xlu0 %59, %v41
    %v61 = vpop.permute.xlu0 %60
    %64 = vset.pattern.permute.xlu0 0
    %65 = vperm.xlu0 %64, %v42
    %v66 = vpop.permute.xlu0 %65
    %69 = vset.pattern.permute.xlu0 0
    %70 = vperm.xlu0 %69, %v43
    %v71 = vpop.permute.xlu0 %70
    %74 = vset.pattern.permute.xlu0 0
    %75 = vperm.xlu0 %74, %v44
    %v76 = vpop.permute.xlu0 %75
    %79 = vset.pattern.permute.xlu0 0
    %80 = vperm.xlu0 %79, %v45
    %v81 = vpop.permute.xlu0 %80
    %84 = vset.pattern.permute.xlu0 0
    %85 = vperm.xlu0 %84, %v46
    %v86 = vpop.permute.xlu0 %85
    %89 = vset.pattern.permute.xlu0 0
    %90 = vperm.xlu0 %89, %v47
    %v91 = vpop.permute.xlu0 %90
    %94 = vset.pattern.permute.xlu0 0
    %95 = vperm.xlu0 %94, %v48
    %v96 = vpop.permute.xlu0 %95
    %99 = vset.pattern.permute.xlu0 0
    %100 = vperm.xlu0 %99, %v49
    %v101 = vpop.permute.xlu0 %100
    %104 = vset.pattern.permute.xlu0 0
    %105 = vperm.xlu0 %104, %v50
    %v106 = vpop.permute.xlu0 %105
    %109 = vset.pattern.permute.xlu0 0
    %110 = vperm.xlu0 %109, %v51
    %v111 = vpop.permute.xlu0 %110
    %114 = vset.pattern.permute.xlu0 0
    %115 = vperm.xlu0 %114, %v52
    %v116 = vpop.permute.xlu0 %115
    %119 = vset.pattern.permute.xlu0 0
    %120 = vperm.xlu0 %119, %v53
    %v121 = vpop.permute.xlu0 %120
    %124 = vset.pattern.permute.xlu0 0
    %125 = vperm.xlu0 %124, %v54
    %v126 = vpop.permute.xlu0 %125
    %129 = vset.pattern.permute.xlu0 0
    %130 = vperm.xlu0 %129, %v55
    %v131 = vpop.permute.xlu0 %130
    %134 = vset.pattern.permute.xlu0 0
    %135 = vperm.xlu0 %134, %v56
    %v136 = vpop.permute.xlu0 %135
    %v139 = vlaneseq
    %v140 = vshrl.u32 %v139, 7
    %v141 = vsub.s32 0, %v140
    %v142 = vrot.slane %v57, %v141
    %v143 = vlaneseq
    %v144 = vshrl.u32 %v143, 7
    %v145 = vsub.s32 2, %v144
    %v146 = vrot.slane %v57, %v145
    %v147 = vlaneseq
    %v148 = vshrl.u32 %v147, 7
    %v149 = vsub.s32 4, %v148
    %v150 = vrot.slane %v57, %v149
    %v151 = vlaneseq
    %v152 = vshrl.u32 %v151, 7
    %v153 = vsub.s32 6, %v152
    %v154 = vrot.slane %v57, %v153
    %v159 = vlaneseq
    %v160 = vshrl.u32 %v159, 7
    %v161 = vsub.s32 0, %v160
    %v162 = vrot.slane %v142, %v161
    %v163 = vlaneseq
    %v164 = vshrl.u32 %v163, 7
    %v165 = vsub.s32 0, %v164
    %v166 = vrot.slane %v146, %v165
    %v167 = vlaneseq
    %v168 = vshrl.u32 %v167, 7
    %v169 = vsub.s32 0, %v168
    %v170 = vrot.slane %v150, %v169
    %v171 = vlaneseq
    %v172 = vshrl.u32 %v171, 7
    %v173 = vsub.s32 0, %v172
    %v174 = vrot.slane %v154, %v173
    %v175 = vmul.f32 %v61, %v162
    %v176 = vmul.f32 %v61, %v166
    %v177 = vmul.f32 %v61, %v170
    %v178 = vmul.f32 %v61, %v174
    %v179 = vmul.f32 %v66, %v162
    %v180 = vmul.f32 %v66, %v166
    %v181 = vmul.f32 %v66, %v170
    %v182 = vmul.f32 %v66, %v174
    %v183 = vmul.f32 %v71, %v162
    %v184 = vmul.f32 %v71, %v166
    %v185 = vmul.f32 %v71, %v170
    %v186 = vmul.f32 %v71, %v174
    %v187 = vmul.f32 %v76, %v162
    %v188 = vmul.f32 %v76, %v166
    %v189 = vmul.f32 %v76, %v170
    %v190 = vmul.f32 %v76, %v174
    %v191 = vmul.f32 %v81, %v162
    %v192 = vmul.f32 %v81, %v166
    %v193 = vmul.f32 %v81, %v170
    %v194 = vmul.f32 %v81, %v174
    %v195 = vmul.f32 %v86, %v162
    %v196 = vmul.f32 %v86, %v166
    %v197 = vmul.f32 %v86, %v170
    %v198 = vmul.f32 %v86, %v174
    %v199 = vmul.f32 %v91, %v162
    %v200 = vmul.f32 %v91, %v166
    %v201 = vmul.f32 %v91, %v170
    %v202 = vmul.f32 %v91, %v174
    %v203 = vmul.f32 %v96, %v162
    %v204 = vmul.f32 %v96, %v166
    %v205 = vmul.f32 %v96, %v170
    %v206 = vmul.f32 %v96, %v174
    %v207 = vmul.f32 %v101, %v162
    %v208 = vmul.f32 %v101, %v166
    %v209 = vmul.f32 %v101, %v170
    %v210 = vmul.f32 %v101, %v174
    %v211 = vmul.f32 %v106, %v162
    %v212 = vmul.f32 %v106, %v166
    %v213 = vmul.f32 %v106, %v170
    %v214 = vmul.f32 %v106, %v174
    %v215 = vmul.f32 %v111, %v162
    %v216 = vmul.f32 %v111, %v166
    %v217 = vmul.f32 %v111, %v170
    %v218 = vmul.f32 %v111, %v174
    %v219 = vmul.f32 %v116, %v162
    %v220 = vmul.f32 %v116, %v166
    %v221 = vmul.f32 %v116, %v170
    %v222 = vmul.f32 %v116, %v174
    %v223 = vmul.f32 %v121, %v162
    %v224 = vmul.f32 %v121, %v166
    %v225 = vmul.f32 %v121, %v170
    %v226 = vmul.f32 %v121, %v174
    %v227 = vmul.f32 %v126, %v162
    %v228 = vmul.f32 %v126, %v166
    %v229 = vmul.f32 %v126, %v170
    %v230 = vmul.f32 %v126, %v174
    %v231 = vmul.f32 %v131, %v162
    %v232 = vmul.f32 %v131, %v166
    %v233 = vmul.f32 %v131, %v170
    %v234 = vmul.f32 %v131, %v174
    %v235 = vmul.f32 %v136, %v162
    %v236 = vmul.f32 %v136, %v166
    %v237 = vmul.f32 %v136, %v170
    %v238 = vmul.f32 %v136, %v174
    %239 = vset.pattern.permute.xlu0 1
    %240 = vperm.xlu0 %239, %v41
    %v241 = vpop.permute.xlu0 %240
    %243 = vset.pattern.permute.xlu0 1
    %244 = vperm.xlu0 %243, %v42
    %v245 = vpop.permute.xlu0 %244
    %247 = vset.pattern.permute.xlu0 1
    %248 = vperm.xlu0 %247, %v43
    %v249 = vpop.permute.xlu0 %248
    %251 = vset.pattern.permute.xlu0 1
    %252 = vperm.xlu0 %251, %v44
    %v253 = vpop.permute.xlu0 %252
    %255 = vset.pattern.permute.xlu0 1
    %256 = vperm.xlu0 %255, %v45
    %v257 = vpop.permute.xlu0 %256
    %259 = vset.pattern.permute.xlu0 1
    %260 = vperm.xlu0 %259, %v46
    %v261 = vpop.permute.xlu0 %260
    %263 = vset.pattern.permute.xlu0 1
    %264 = vperm.xlu0 %263, %v47
    %v265 = vpop.permute.xlu0 %264
    %267 = vset.pattern.permute.xlu0 1
    %268 = vperm.xlu0 %267, %v48
    %v269 = vpop.permute.xlu0 %268
    %271 = vset.pattern.permute.xlu0 1
    %272 = vperm.xlu0 %271, %v49
    %v273 = vpop.permute.xlu0 %272
    %275 = vset.pattern.permute.xlu0 1
    %276 = vperm.xlu0 %275, %v50
    %v277 = vpop.permute.xlu0 %276
    %279 = vset.pattern.permute.xlu0 1
    %280 = vperm.xlu0 %279, %v51
    %v281 = vpop.permute.xlu0 %280
    %283 = vset.pattern.permute.xlu0 1
    %284 = vperm.xlu0 %283, %v52
    %v285 = vpop.permute.xlu0 %284
    %287 = vset.pattern.permute.xlu0 1
    %288 = vperm.xlu0 %287, %v53
    %v289 = vpop.permute.xlu0 %288
    %291 = vset.pattern.permute.xlu0 1
    %292 = vperm.xlu0 %291, %v54
    %v293 = vpop.permute.xlu0 %292
    %295 = vset.pattern.permute.xlu0 1
    %296 = vperm.xlu0 %295, %v55
    %v297 = vpop.permute.xlu0 %296
    %299 = vset.pattern.permute.xlu0 1
    %300 = vperm.xlu0 %299, %v56
    %v301 = vpop.permute.xlu0 %300
    %v303 = vlaneseq
    %v304 = vshrl.u32 %v303, 7
    %v305 = vsub.s32 1, %v304
    %v306 = vrot.slane %v57, %v305
    %v307 = vlaneseq
    %v308 = vshrl.u32 %v307, 7
    %v309 = vsub.s32 3, %v308
    %v310 = vrot.slane %v57, %v309
    %v311 = vlaneseq
    %v312 = vshrl.u32 %v311, 7
    %v313 = vsub.s32 5, %v312
    %v314 = vrot.slane %v57, %v313
    %v315 = vlaneseq
    %v316 = vshrl.u32 %v315, 7
    %v317 = vsub.s32 7, %v316
    %v318 = vrot.slane %v57, %v317
    %v323 = vlaneseq
    %v324 = vshrl.u32 %v323, 7
    %v325 = vsub.s32 1, %v324
    %v326 = vrot.slane %v306, %v325
    %v327 = vlaneseq
    %v328 = vshrl.u32 %v327, 7
    %v329 = vsub.s32 1, %v328
    %v330 = vrot.slane %v310, %v329
    %v331 = vlaneseq
    %v332 = vshrl.u32 %v331, 7
    %v333 = vsub.s32 1, %v332
    %v334 = vrot.slane %v314, %v333
    %v335 = vlaneseq
    %v336 = vshrl.u32 %v335, 7
    %v337 = vsub.s32 1, %v336
    %v338 = vrot.slane %v318, %v337
    %v339 = vmul.f32 %v241, %v326
    %v340 = vmul.f32 %v241, %v330
    %v341 = vmul.f32 %v241, %v334
    %v342 = vmul.f32 %v241, %v338
    %v343 = vmul.f32 %v245, %v326
    %v344 = vmul.f32 %v245, %v330
    %v345 = vmul.f32 %v245, %v334
    %v346 = vmul.f32 %v245, %v338
    %v347 = vmul.f32 %v249, %v326
    %v348 = vmul.f32 %v249, %v330
    %v349 = vmul.f32 %v249, %v334
    %v350 = vmul.f32 %v249, %v338
    %v351 = vmul.f32 %v253, %v326
    %v352 = vmul.f32 %v253, %v330
    %v353 = vmul.f32 %v253, %v334
    %v354 = vmul.f32 %v253, %v338
    %v355 = vmul.f32 %v257, %v326
    %v356 = vmul.f32 %v257, %v330
    %v357 = vmul.f32 %v257, %v334
    %v358 = vmul.f32 %v257, %v338
    %v359 = vmul.f32 %v261, %v326
    %v360 = vmul.f32 %v261, %v330
    %v361 = vmul.f32 %v261, %v334
    %v362 = vmul.f32 %v261, %v338
    %v363 = vmul.f32 %v265, %v326
    %v364 = vmul.f32 %v265, %v330
    %v365 = vmul.f32 %v265, %v334
    %v366 = vmul.f32 %v265, %v338
    %v367 = vmul.f32 %v269, %v326
    %v368 = vmul.f32 %v269, %v330
    %v369 = vmul.f32 %v269, %v334
    %v370 = vmul.f32 %v269, %v338
    %v371 = vmul.f32 %v273, %v326
    %v372 = vmul.f32 %v273, %v330
    %v373 = vmul.f32 %v273, %v334
    %v374 = vmul.f32 %v273, %v338
    %v375 = vmul.f32 %v277, %v326
    %v376 = vmul.f32 %v277, %v330
    %v377 = vmul.f32 %v277, %v334
    %v378 = vmul.f32 %v277, %v338
    %v379 = vmul.f32 %v281, %v326
    %v380 = vmul.f32 %v281, %v330
    %v381 = vmul.f32 %v281, %v334
    %v382 = vmul.f32 %v281, %v338
    %v383 = vmul.f32 %v285, %v326
    %v384 = vmul.f32 %v285, %v330
    %v385 = vmul.f32 %v285, %v334
    %v386 = vmul.f32 %v285, %v338
    %v387 = vmul.f32 %v289, %v326
    %v388 = vmul.f32 %v289, %v330
    %v389 = vmul.f32 %v289, %v334
    %v390 = vmul.f32 %v289, %v338
    %v391 = vmul.f32 %v293, %v326
    %v392 = vmul.f32 %v293, %v330
    %v393 = vmul.f32 %v293, %v334
    %v394 = vmul.f32 %v293, %v338
    %v395 = vmul.f32 %v297, %v326
    %v396 = vmul.f32 %v297, %v330
    %v397 = vmul.f32 %v297, %v334
    %v398 = vmul.f32 %v297, %v338
    %v399 = vmul.f32 %v301, %v326
    %v400 = vmul.f32 %v301, %v330
    %v401 = vmul.f32 %v301, %v334
    %v402 = vmul.f32 %v301, %v338
    %v403 = vadd.f32 %v175, %v339
    %v404 = vadd.f32 %v176, %v340
    %v405 = vadd.f32 %v177, %v341
    %v406 = vadd.f32 %v178, %v342
    %v407 = vadd.f32 %v179, %v343
    %v408 = vadd.f32 %v180, %v344
    %v409 = vadd.f32 %v181, %v345
    %v410 = vadd.f32 %v182, %v346
    %v411 = vadd.f32 %v183, %v347
    %v412 = vadd.f32 %v184, %v348
    %v413 = vadd.f32 %v185, %v349
    %v414 = vadd.f32 %v186, %v350
    %v415 = vadd.f32 %v187, %v351
    %v416 = vadd.f32 %v188, %v352
    %v417 = vadd.f32 %v189, %v353
    %v418 = vadd.f32 %v190, %v354
    %v419 = vadd.f32 %v191, %v355
    %v420 = vadd.f32 %v192, %v356
    %v421 = vadd.f32 %v193, %v357
    %v422 = vadd.f32 %v194, %v358
    %v423 = vadd.f32 %v195, %v359
    %v424 = vadd.f32 %v196, %v360
    %v425 = vadd.f32 %v197, %v361
    %v426 = vadd.f32 %v198, %v362
    %v427 = vadd.f32 %v199, %v363
    %v428 = vadd.f32 %v200, %v364
    %v429 = vadd.f32 %v201, %v365
    %v430 = vadd.f32 %v202, %v366
    %v431 = vadd.f32 %v203, %v367
    %v432 = vadd.f32 %v204, %v368
    %v433 = vadd.f32 %v205, %v369
    %v434 = vadd.f32 %v206, %v370
    %v435 = vadd.f32 %v207, %v371
    %v436 = vadd.f32 %v208, %v372
    %v437 = vadd.f32 %v209, %v373
    %v438 = vadd.f32 %v210, %v374
    %v439 = vadd.f32 %v211, %v375
    %v440 = vadd.f32 %v212, %v376
    %v441 = vadd.f32 %v213, %v377
    %v442 = vadd.f32 %v214, %v378
    %v443 = vadd.f32 %v215, %v379
    %v444 = vadd.f32 %v216, %v380
    %v445 = vadd.f32 %v217, %v381
    %v446 = vadd.f32 %v218, %v382
    %v447 = vadd.f32 %v219, %v383
    %v448 = vadd.f32 %v220, %v384
    %v449 = vadd.f32 %v221, %v385
    %v450 = vadd.f32 %v222, %v386
    %v451 = vadd.f32 %v223, %v387
    %v452 = vadd.f32 %v224, %v388
    %v453 = vadd.f32 %v225, %v389
    %v454 = vadd.f32 %v226, %v390
    %v455 = vadd.f32 %v227, %v391
    %v456 = vadd.f32 %v228, %v392
    %v457 = vadd.f32 %v229, %v393
    %v458 = vadd.f32 %v230, %v394
    %v459 = vadd.f32 %v231, %v395
    %v460 = vadd.f32 %v232, %v396
    %v461 = vadd.f32 %v233, %v397
    %v462 = vadd.f32 %v234, %v398
    %v463 = vadd.f32 %v235, %v399
    %v464 = vadd.f32 %v236, %v400
    %v465 = vadd.f32 %v237, %v401
    %v466 = vadd.f32 %v238, %v402
    %v467 = vld [vmem:[%s2] sm:$0xf]
    %v469 = vlaneseq
    %v470 = vshrl.u32 %v469, 7
    %v471 = vsub.s32 0, %v470
    %v472 = vrot.slane %v467, %v471
    %v473 = vlaneseq
    %v474 = vshrl.u32 %v473, 7
    %v475 = vsub.s32 1, %v474
    %v476 = vrot.slane %v467, %v475
    %v477 = vlaneseq
    %v478 = vshrl.u32 %v477, 7
    %v479 = vsub.s32 2, %v478
    %v480 = vrot.slane %v467, %v479
    %v481 = vlaneseq
    %v482 = vshrl.u32 %v481, 7
    %v483 = vsub.s32 3, %v482
    %v484 = vrot.slane %v467, %v483
    %v489 = vadd.f32 %v403, %v472
    %v490 = vadd.f32 %v404, %v476
    %v491 = vadd.f32 %v405, %v480
    %v492 = vadd.f32 %v406, %v484
    %v493 = vadd.f32 %v407, %v472
    %v494 = vadd.f32 %v408, %v476
    %v495 = vadd.f32 %v409, %v480
    %v496 = vadd.f32 %v410, %v484
    %v497 = vadd.f32 %v411, %v472
    %v498 = vadd.f32 %v412, %v476
    %v499 = vadd.f32 %v413, %v480
    %v500 = vadd.f32 %v414, %v484
    %v501 = vadd.f32 %v415, %v472
    %v502 = vadd.f32 %v416, %v476
    %v503 = vadd.f32 %v417, %v480
    %v504 = vadd.f32 %v418, %v484
    %v505 = vadd.f32 %v419, %v472
    %v506 = vadd.f32 %v420, %v476
    %v507 = vadd.f32 %v421, %v480
    %v508 = vadd.f32 %v422, %v484
    %v509 = vadd.f32 %v423, %v472
    %v510 = vadd.f32 %v424, %v476
    %v511 = vadd.f32 %v425, %v480
    %v512 = vadd.f32 %v426, %v484
    %v513 = vadd.f32 %v427, %v472
    %v514 = vadd.f32 %v428, %v476
    %v515 = vadd.f32 %v429, %v480
    %v516 = vadd.f32 %v430, %v484
    %v517 = vadd.f32 %v431, %v472
    %v518 = vadd.f32 %v432, %v476
    %v519 = vadd.f32 %v433, %v480
    %v520 = vadd.f32 %v434, %v484
    %v521 = vadd.f32 %v435, %v472
    %v522 = vadd.f32 %v436, %v476
    %v523 = vadd.f32 %v437, %v480
    %v524 = vadd.f32 %v438, %v484
    %v525 = vadd.f32 %v439, %v472
    %v526 = vadd.f32 %v440, %v476
    %v527 = vadd.f32 %v441, %v480
    %v528 = vadd.f32 %v442, %v484
    %v529 = vadd.f32 %v443, %v472
    %v530 = vadd.f32 %v444, %v476
    %v531 = vadd.f32 %v445, %v480
    %v532 = vadd.f32 %v446, %v484
    %v533 = vadd.f32 %v447, %v472
    %v534 = vadd.f32 %v448, %v476
    %v535 = vadd.f32 %v449, %v480
    %v536 = vadd.f32 %v450, %v484
    %v537 = vadd.f32 %v451, %v472
    %v538 = vadd.f32 %v452, %v476
    %v539 = vadd.f32 %v453, %v480
    %v540 = vadd.f32 %v454, %v484
    %v541 = vadd.f32 %v455, %v472
    %v542 = vadd.f32 %v456, %v476
    %v543 = vadd.f32 %v457, %v480
    %v544 = vadd.f32 %v458, %v484
    %v545 = vadd.f32 %v459, %v472
    %v546 = vadd.f32 %v460, %v476
    %v547 = vadd.f32 %v461, %v480
    %v548 = vadd.f32 %v462, %v484
    %v549 = vadd.f32 %v463, %v472
    %v550 = vadd.f32 %v464, %v476
    %v551 = vadd.f32 %v465, %v480
    %v552 = vadd.f32 %v466, %v484
    %v553 = vxor.u32 %v489, 2147483648
    %v554 = vxor.u32 %v490, 2147483648
    %v555 = vxor.u32 %v491, 2147483648
    %v556 = vxor.u32 %v492, 2147483648
    %v557 = vxor.u32 %v493, 2147483648
    %v558 = vxor.u32 %v494, 2147483648
    %v559 = vxor.u32 %v495, 2147483648
    %v560 = vxor.u32 %v496, 2147483648
    %v561 = vxor.u32 %v497, 2147483648
    %v562 = vxor.u32 %v498, 2147483648
    %v563 = vxor.u32 %v499, 2147483648
    %v564 = vxor.u32 %v500, 2147483648
    %v565 = vxor.u32 %v501, 2147483648
    %v566 = vxor.u32 %v502, 2147483648
    %v567 = vxor.u32 %v503, 2147483648
    %v568 = vxor.u32 %v504, 2147483648
    %v569 = vxor.u32 %v505, 2147483648
    %v570 = vxor.u32 %v506, 2147483648
    %v571 = vxor.u32 %v507, 2147483648
    %v572 = vxor.u32 %v508, 2147483648
    %v573 = vxor.u32 %v509, 2147483648
    %v574 = vxor.u32 %v510, 2147483648
    %v575 = vxor.u32 %v511, 2147483648
    %v576 = vxor.u32 %v512, 2147483648
    %v577 = vxor.u32 %v513, 2147483648
    %v578 = vxor.u32 %v514, 2147483648
    %v579 = vxor.u32 %v515, 2147483648
    %v580 = vxor.u32 %v516, 2147483648
    %v581 = vxor.u32 %v517, 2147483648
    %v582 = vxor.u32 %v518, 2147483648
    %v583 = vxor.u32 %v519, 2147483648
    %v584 = vxor.u32 %v520, 2147483648
    %v585 = vxor.u32 %v521, 2147483648
    %v586 = vxor.u32 %v522, 2147483648
    %v587 = vxor.u32 %v523, 2147483648
    %v588 = vxor.u32 %v524, 2147483648
    %v589 = vxor.u32 %v525, 2147483648
    %v590 = vxor.u32 %v526, 2147483648
    %v591 = vxor.u32 %v527, 2147483648
    %v592 = vxor.u32 %v528, 2147483648
    %v593 = vxor.u32 %v529, 2147483648
    %v594 = vxor.u32 %v530, 2147483648
    %v595 = vxor.u32 %v531, 2147483648
    %v596 = vxor.u32 %v532, 2147483648
    %v597 = vxor.u32 %v533, 2147483648
    %v598 = vxor.u32 %v534, 2147483648
    %v599 = vxor.u32 %v535, 2147483648
    %v600 = vxor.u32 %v536, 2147483648
    %v601 = vxor.u32 %v537, 2147483648
    %v602 = vxor.u32 %v538, 2147483648
    %v603 = vxor.u32 %v539, 2147483648
    %v604 = vxor.u32 %v540, 2147483648
    %v605 = vxor.u32 %v541, 2147483648
    %v606 = vxor.u32 %v542, 2147483648
    %v607 = vxor.u32 %v543, 2147483648
    %v608 = vxor.u32 %v544, 2147483648
    %v609 = vxor.u32 %v545, 2147483648
    %v610 = vxor.u32 %v546, 2147483648
    %v611 = vxor.u32 %v547, 2147483648
    %v612 = vxor.u32 %v548, 2147483648
    %v613 = vxor.u32 %v549, 2147483648
    %v614 = vxor.u32 %v550, 2147483648
    %v615 = vxor.u32 %v551, 2147483648
    %v616 = vxor.u32 %v552, 2147483648
    %v617 = vmul.f32 %v553, 1.442695
    %v618 = vpow.pop %v617
    %v619 = vmul.f32 %v554, 1.442695
    %v620 = vpow.pop %v619
    %v621 = vmul.f32 %v555, 1.442695
    %v622 = vpow.pop %v621
    %v623 = vmul.f32 %v556, 1.442695
    %v624 = vpow.pop %v623
    %v625 = vmul.f32 %v557, 1.442695
    %v626 = vpow.pop %v625
    %v627 = vmul.f32 %v558, 1.442695
    %v628 = vpow.pop %v627
    %v629 = vmul.f32 %v559, 1.442695
    %v630 = vpow.pop %v629
    %v631 = vmul.f32 %v560, 1.442695
    %v632 = vpow.pop %v631
    %v633 = vmul.f32 %v561, 1.442695
    %v634 = vpow.pop %v633
    %v635 = vmul.f32 %v562, 1.442695
    %v636 = vpow.pop %v635
    %v637 = vmul.f32 %v563, 1.442695
    %v638 = vpow.pop %v637
    %v639 = vmul.f32 %v564, 1.442695
    %v640 = vpow.pop %v639
    %v641 = vmul.f32 %v565, 1.442695
    %v642 = vpow.pop %v641
    %v643 = vmul.f32 %v566, 1.442695
    %v644 = vpow.pop %v643
    %v645 = vmul.f32 %v567, 1.442695
    %v646 = vpow.pop %v645
    %v647 = vmul.f32 %v568, 1.442695
    %v648 = vpow.pop %v647
    %v649 = vmul.f32 %v569, 1.442695
    %v650 = vpow.pop %v649
    %v651 = vmul.f32 %v570, 1.442695
    %v652 = vpow.pop %v651
    %v653 = vmul.f32 %v571, 1.442695
    %v654 = vpow.pop %v653
    %v655 = vmul.f32 %v572, 1.442695
    %v656 = vpow.pop %v655
    %v657 = vmul.f32 %v573, 1.442695
    %v658 = vpow.pop %v657
    %v659 = vmul.f32 %v574, 1.442695
    %v660 = vpow.pop %v659
    %v661 = vmul.f32 %v575, 1.442695
    %v662 = vpow.pop %v661
    %v663 = vmul.f32 %v576, 1.442695
    %v664 = vpow.pop %v663
    %v665 = vmul.f32 %v577, 1.442695
    %v666 = vpow.pop %v665
    %v667 = vmul.f32 %v578, 1.442695
    %v668 = vpow.pop %v667
    %v669 = vmul.f32 %v579, 1.442695
    %v670 = vpow.pop %v669
    %v671 = vmul.f32 %v580, 1.442695
    %v672 = vpow.pop %v671
    %v673 = vmul.f32 %v581, 1.442695
    %v674 = vpow.pop %v673
    %v675 = vmul.f32 %v582, 1.442695
    %v676 = vpow.pop %v675
    %v677 = vmul.f32 %v583, 1.442695
    %v678 = vpow.pop %v677
    %v679 = vmul.f32 %v584, 1.442695
    %v680 = vpow.pop %v679
    %v681 = vmul.f32 %v585, 1.442695
    %v682 = vpow.pop %v681
    %v683 = vmul.f32 %v586, 1.442695
    %v684 = vpow.pop %v683
    %v685 = vmul.f32 %v587, 1.442695
    %v686 = vpow.pop %v685
    %v687 = vmul.f32 %v588, 1.442695
    %v688 = vpow.pop %v687
    %v689 = vmul.f32 %v589, 1.442695
    %v690 = vpow.pop %v689
    %v691 = vmul.f32 %v590, 1.442695
    %v692 = vpow.pop %v691
    %v693 = vmul.f32 %v591, 1.442695
    %v694 = vpow.pop %v693
    %v695 = vmul.f32 %v592, 1.442695
    %v696 = vpow.pop %v695
    %v697 = vmul.f32 %v593, 1.442695
    %v698 = vpow.pop %v697
    %v699 = vmul.f32 %v594, 1.442695
    %v700 = vpow.pop %v699
    %v701 = vmul.f32 %v595, 1.442695
    %v702 = vpow.pop %v701
    %v703 = vmul.f32 %v596, 1.442695
    %v704 = vpow.pop %v703
    %v705 = vmul.f32 %v597, 1.442695
    %v706 = vpow.pop %v705
    %v707 = vmul.f32 %v598, 1.442695
    %v708 = vpow.pop %v707
    %v709 = vmul.f32 %v599, 1.442695
    %v710 = vpow.pop %v709
    %v711 = vmul.f32 %v600, 1.442695
    %v712 = vpow.pop %v711
    %v713 = vmul.f32 %v601, 1.442695
    %v714 = vpow.pop %v713
    %v715 = vmul.f32 %v602, 1.442695
    %v716 = vpow.pop %v715
    %v717 = vmul.f32 %v603, 1.442695
    %v718 = vpow.pop %v717
    %v719 = vmul.f32 %v604, 1.442695
    %v720 = vpow.pop %v719
    %v721 = vmul.f32 %v605, 1.442695
    %v722 = vpow.pop %v721
    %v723 = vmul.f32 %v606, 1.442695
    %v724 = vpow.pop %v723
    %v725 = vmul.f32 %v607, 1.442695
    %v726 = vpow.pop %v725
    %v727 = vmul.f32 %v608, 1.442695
    %v728 = vpow.pop %v727
    %v729 = vmul.f32 %v609, 1.442695
    %v730 = vpow.pop %v729
    %v731 = vmul.f32 %v610, 1.442695
    %v732 = vpow.pop %v731
    %v733 = vmul.f32 %v611, 1.442695
    %v734 = vpow.pop %v733
    %v735 = vmul.f32 %v612, 1.442695
    %v736 = vpow.pop %v735
    %v737 = vmul.f32 %v613, 1.442695
    %v738 = vpow.pop %v737
    %v739 = vmul.f32 %v614, 1.442695
    %v740 = vpow.pop %v739
    %v741 = vmul.f32 %v615, 1.442695
    %v742 = vpow.pop %v741
    %v743 = vmul.f32 %v616, 1.442695
    %v744 = vpow.pop %v743
    %v745 = vadd.f32 %v618, 1.0
    %v746 = vadd.f32 %v620, 1.0
    %v747 = vadd.f32 %v622, 1.0
    %v748 = vadd.f32 %v624, 1.0
    %v749 = vadd.f32 %v626, 1.0
    %v750 = vadd.f32 %v628, 1.0
    %v751 = vadd.f32 %v630, 1.0
    %v752 = vadd.f32 %v632, 1.0
    %v753 = vadd.f32 %v634, 1.0
    %v754 = vadd.f32 %v636, 1.0
    %v755 = vadd.f32 %v638, 1.0
    %v756 = vadd.f32 %v640, 1.0
    %v757 = vadd.f32 %v642, 1.0
    %v758 = vadd.f32 %v644, 1.0
    %v759 = vadd.f32 %v646, 1.0
    %v760 = vadd.f32 %v648, 1.0
    %v761 = vadd.f32 %v650, 1.0
    %v762 = vadd.f32 %v652, 1.0
    %v763 = vadd.f32 %v654, 1.0
    %v764 = vadd.f32 %v656, 1.0
    %v765 = vadd.f32 %v658, 1.0
    %v766 = vadd.f32 %v660, 1.0
    %v767 = vadd.f32 %v662, 1.0
    %v768 = vadd.f32 %v664, 1.0
    %v769 = vadd.f32 %v666, 1.0
    %v770 = vadd.f32 %v668, 1.0
    %v771 = vadd.f32 %v670, 1.0
    %v772 = vadd.f32 %v672, 1.0
    %v773 = vadd.f32 %v674, 1.0
    %v774 = vadd.f32 %v676, 1.0
    %v775 = vadd.f32 %v678, 1.0
    %v776 = vadd.f32 %v680, 1.0
    %v777 = vadd.f32 %v682, 1.0
    %v778 = vadd.f32 %v684, 1.0
    %v779 = vadd.f32 %v686, 1.0
    %v780 = vadd.f32 %v688, 1.0
    %v781 = vadd.f32 %v690, 1.0
    %v782 = vadd.f32 %v692, 1.0
    %v783 = vadd.f32 %v694, 1.0
    %v784 = vadd.f32 %v696, 1.0
    %v785 = vadd.f32 %v698, 1.0
    %v786 = vadd.f32 %v700, 1.0
    %v787 = vadd.f32 %v702, 1.0
    %v788 = vadd.f32 %v704, 1.0
    %v789 = vadd.f32 %v706, 1.0
    %v790 = vadd.f32 %v708, 1.0
    %v791 = vadd.f32 %v710, 1.0
    %v792 = vadd.f32 %v712, 1.0
    %v793 = vadd.f32 %v714, 1.0
    %v794 = vadd.f32 %v716, 1.0
    %v795 = vadd.f32 %v718, 1.0
    %v796 = vadd.f32 %v720, 1.0
    %v797 = vadd.f32 %v722, 1.0
    %v798 = vadd.f32 %v724, 1.0
    %v799 = vadd.f32 %v726, 1.0
    %v800 = vadd.f32 %v728, 1.0
    %v801 = vadd.f32 %v730, 1.0
    %v802 = vadd.f32 %v732, 1.0
    %v803 = vadd.f32 %v734, 1.0
    %v804 = vadd.f32 %v736, 1.0
    %v805 = vadd.f32 %v738, 1.0
    %v806 = vadd.f32 %v740, 1.0
    %v807 = vadd.f32 %v742, 1.0
    %v808 = vadd.f32 %v744, 1.0
    %v809 = vrcp.pop %v745
    %v810 = vmul.f32 1.0, %v809
    %v811 = vrcp.pop %v746
    %v812 = vmul.f32 1.0, %v811
    %v813 = vrcp.pop %v747
    %v814 = vmul.f32 1.0, %v813
    %v815 = vrcp.pop %v748
    %v816 = vmul.f32 1.0, %v815
    %v817 = vrcp.pop %v749
    %v818 = vmul.f32 1.0, %v817
    %v819 = vrcp.pop %v750
    %v820 = vmul.f32 1.0, %v819
    %v821 = vrcp.pop %v751
    %v822 = vmul.f32 1.0, %v821
    %v823 = vrcp.pop %v752
    %v824 = vmul.f32 1.0, %v823
    %v825 = vrcp.pop %v753
    %v826 = vmul.f32 1.0, %v825
    %v827 = vrcp.pop %v754
    %v828 = vmul.f32 1.0, %v827
    %v829 = vrcp.pop %v755
    %v830 = vmul.f32 1.0, %v829
    %v831 = vrcp.pop %v756
    %v832 = vmul.f32 1.0, %v831
    %v833 = vrcp.pop %v757
    %v834 = vmul.f32 1.0, %v833
    %v835 = vrcp.pop %v758
    %v836 = vmul.f32 1.0, %v835
    %v837 = vrcp.pop %v759
    %v838 = vmul.f32 1.0, %v837
    %v839 = vrcp.pop %v760
    %v840 = vmul.f32 1.0, %v839
    %v841 = vrcp.pop %v761
    %v842 = vmul.f32 1.0, %v841
    %v843 = vrcp.pop %v762
    %v844 = vmul.f32 1.0, %v843
    %v845 = vrcp.pop %v763
    %v846 = vmul.f32 1.0, %v845
    %v847 = vrcp.pop %v764
    %v848 = vmul.f32 1.0, %v847
    %v849 = vrcp.pop %v765
    %v850 = vmul.f32 1.0, %v849
    %v851 = vrcp.pop %v766
    %v852 = vmul.f32 1.0, %v851
    %v853 = vrcp.pop %v767
    %v854 = vmul.f32 1.0, %v853
    %v855 = vrcp.pop %v768
    %v856 = vmul.f32 1.0, %v855
    %v857 = vrcp.pop %v769
    %v858 = vmul.f32 1.0, %v857
    %v859 = vrcp.pop %v770
    %v860 = vmul.f32 1.0, %v859
    %v861 = vrcp.pop %v771
    %v862 = vmul.f32 1.0, %v861
    %v863 = vrcp.pop %v772
    %v864 = vmul.f32 1.0, %v863
    %v865 = vrcp.pop %v773
    %v866 = vmul.f32 1.0, %v865
    %v867 = vrcp.pop %v774
    %v868 = vmul.f32 1.0, %v867
    %v869 = vrcp.pop %v775
    %v870 = vmul.f32 1.0, %v869
    %v871 = vrcp.pop %v776
    %v872 = vmul.f32 1.0, %v871
    %v873 = vrcp.pop %v777
    %v874 = vmul.f32 1.0, %v873
    %v875 = vrcp.pop %v778
    %v876 = vmul.f32 1.0, %v875
    %v877 = vrcp.pop %v779
    %v878 = vmul.f32 1.0, %v877
    %v879 = vrcp.pop %v780
    %v880 = vmul.f32 1.0, %v879
    %v881 = vrcp.pop %v781
    %v882 = vmul.f32 1.0, %v881
    %v883 = vrcp.pop %v782
    %v884 = vmul.f32 1.0, %v883
    %v885 = vrcp.pop %v783
    %v886 = vmul.f32 1.0, %v885
    %v887 = vrcp.pop %v784
    %v888 = vmul.f32 1.0, %v887
    %v889 = vrcp.pop %v785
    %v890 = vmul.f32 1.0, %v889
    %v891 = vrcp.pop %v786
    %v892 = vmul.f32 1.0, %v891
    %v893 = vrcp.pop %v787
    %v894 = vmul.f32 1.0, %v893
    %v895 = vrcp.pop %v788
    %v896 = vmul.f32 1.0, %v895
    %v897 = vrcp.pop %v789
    %v898 = vmul.f32 1.0, %v897
    %v899 = vrcp.pop %v790
    %v900 = vmul.f32 1.0, %v899
    %v901 = vrcp.pop %v791
    %v902 = vmul.f32 1.0, %v901
    %v903 = vrcp.pop %v792
    %v904 = vmul.f32 1.0, %v903
    %v905 = vrcp.pop %v793
    %v906 = vmul.f32 1.0, %v905
    %v907 = vrcp.pop %v794
    %v908 = vmul.f32 1.0, %v907
    %v909 = vrcp.pop %v795
    %v910 = vmul.f32 1.0, %v909
    %v911 = vrcp.pop %v796
    %v912 = vmul.f32 1.0, %v911
    %v913 = vrcp.pop %v797
    %v914 = vmul.f32 1.0, %v913
    %v915 = vrcp.pop %v798
    %v916 = vmul.f32 1.0, %v915
    %v917 = vrcp.pop %v799
    %v918 = vmul.f32 1.0, %v917
    %v919 = vrcp.pop %v800
    %v920 = vmul.f32 1.0, %v919
    %v921 = vrcp.pop %v801
    %v922 = vmul.f32 1.0, %v921
    %v923 = vrcp.pop %v802
    %v924 = vmul.f32 1.0, %v923
    %v925 = vrcp.pop %v803
    %v926 = vmul.f32 1.0, %v925
    %v927 = vrcp.pop %v804
    %v928 = vmul.f32 1.0, %v927
    %v929 = vrcp.pop %v805
    %v930 = vmul.f32 1.0, %v929
    %v931 = vrcp.pop %v806
    %v932 = vmul.f32 1.0, %v931
    %v933 = vrcp.pop %v807
    %v934 = vmul.f32 1.0, %v933
    %v935 = vrcp.pop %v808
    %v936 = vmul.f32 1.0, %v935
    %v937 = vmul.f32 %v489, %v810
    %v938 = vmul.f32 %v490, %v812
    %v939 = vmul.f32 %v491, %v814
    %v940 = vmul.f32 %v492, %v816
    %v941 = vmul.f32 %v493, %v818
    %v942 = vmul.f32 %v494, %v820
    %v943 = vmul.f32 %v495, %v822
    %v944 = vmul.f32 %v496, %v824
    %v945 = vmul.f32 %v497, %v826
    %v946 = vmul.f32 %v498, %v828
    %v947 = vmul.f32 %v499, %v830
    %v948 = vmul.f32 %v500, %v832
    %v949 = vmul.f32 %v501, %v834
    %v950 = vmul.f32 %v502, %v836
    %v951 = vmul.f32 %v503, %v838
    %v952 = vmul.f32 %v504, %v840
    %v953 = vmul.f32 %v505, %v842
    %v954 = vmul.f32 %v506, %v844
    %v955 = vmul.f32 %v507, %v846
    %v956 = vmul.f32 %v508, %v848
    %v957 = vmul.f32 %v509, %v850
    %v958 = vmul.f32 %v510, %v852
    %v959 = vmul.f32 %v511, %v854
    %v960 = vmul.f32 %v512, %v856
    %v961 = vmul.f32 %v513, %v858
    %v962 = vmul.f32 %v514, %v860
    %v963 = vmul.f32 %v515, %v862
    %v964 = vmul.f32 %v516, %v864
    %v965 = vmul.f32 %v517, %v866
    %v966 = vmul.f32 %v518, %v868
    %v967 = vmul.f32 %v519, %v870
    %v968 = vmul.f32 %v520, %v872
    %v969 = vmul.f32 %v521, %v874
    %v970 = vmul.f32 %v522, %v876
    %v971 = vmul.f32 %v523, %v878
    %v972 = vmul.f32 %v524, %v880
    %v973 = vmul.f32 %v525, %v882
    %v974 = vmul.f32 %v526, %v884
    %v975 = vmul.f32 %v527, %v886
    %v976 = vmul.f32 %v528, %v888
    %v977 = vmul.f32 %v529, %v890
    %v978 = vmul.f32 %v530, %v892
    %v979 = vmul.f32 %v531, %v894
    %v980 = vmul.f32 %v532, %v896
    %v981 = vmul.f32 %v533, %v898
    %v982 = vmul.f32 %v534, %v900
    %v983 = vmul.f32 %v535, %v902
    %v984 = vmul.f32 %v536, %v904
    %v985 = vmul.f32 %v537, %v906
    %v986 = vmul.f32 %v538, %v908
    %v987 = vmul.f32 %v539, %v910
    %v988 = vmul.f32 %v540, %v912
    %v989 = vmul.f32 %v541, %v914
    %v990 = vmul.f32 %v542, %v916
    %v991 = vmul.f32 %v543, %v918
    %v992 = vmul.f32 %v544, %v920
    %v993 = vmul.f32 %v545, %v922
    %v994 = vmul.f32 %v546, %v924
    %v995 = vmul.f32 %v547, %v926
    %v996 = vmul.f32 %v548, %v928
    %v997 = vmul.f32 %v549, %v930
    %v998 = vmul.f32 %v550, %v932
    %v999 = vmul.f32 %v551, %v934
    %v1000 = vmul.f32 %v552, %v936
    %v1001 = vpack.c.bf16 %v941, %v937
    %v1002 = vpack.c.bf16 %v942, %v938
    %v1003 = vpack.c.bf16 %v943, %v939
    %v1004 = vpack.c.bf16 %v944, %v940
    %v1005 = vpack.c.bf16 %v949, %v945
    %v1006 = vpack.c.bf16 %v950, %v946
    %v1007 = vpack.c.bf16 %v951, %v947
    %v1008 = vpack.c.bf16 %v952, %v948
    %v1009 = vpack.c.bf16 %v957, %v953
    %v1010 = vpack.c.bf16 %v958, %v954
    %v1011 = vpack.c.bf16 %v959, %v955
    %v1012 = vpack.c.bf16 %v960, %v956
    %v1013 = vpack.c.bf16 %v965, %v961
    %v1014 = vpack.c.bf16 %v966, %v962
    %v1015 = vpack.c.bf16 %v967, %v963
    %v1016 = vpack.c.bf16 %v968, %v964
    %v1017 = vpack.c.bf16 %v973, %v969
    %v1018 = vpack.c.bf16 %v974, %v970
    %v1019 = vpack.c.bf16 %v975, %v971
    %v1020 = vpack.c.bf16 %v976, %v972
    %v1021 = vpack.c.bf16 %v981, %v977
    %v1022 = vpack.c.bf16 %v982, %v978
    %v1023 = vpack.c.bf16 %v983, %v979
    %v1024 = vpack.c.bf16 %v984, %v980
    %v1025 = vpack.c.bf16 %v989, %v985
    %v1026 = vpack.c.bf16 %v990, %v986
    %v1027 = vpack.c.bf16 %v991, %v987
    %v1028 = vpack.c.bf16 %v992, %v988
    %v1029 = vpack.c.bf16 %v997, %v993
    %v1030 = vpack.c.bf16 %v998, %v994
    %v1031 = vpack.c.bf16 %v999, %v995
    %v1032 = vpack.c.bf16 %v1000, %v996
    %v1033 = vld [vmem:[%s3] sm:$0xff]
    %v1034 = vld [vmem:[%s3 + $0x8] sm:$0xff]
    %v1035 = vld [vmem:[%s3 + $0x10] sm:$0xff]
    %v1036 = vld [vmem:[%s3 + $0x18] sm:$0xff]
    %v1037 = vld [vmem:[%s3 + $0x20] sm:$0xff]
    %v1038 = vld [vmem:[%s3 + $0x28] sm:$0xff]
    %v1039 = vld [vmem:[%s3 + $0x30] sm:$0xff]
    %v1040 = vld [vmem:[%s3 + $0x38] sm:$0xff]
    %v1041 = vld [vmem:[%s3 + $0x40] sm:$0xff]
    %v1042 = vld [vmem:[%s3 + $0x48] sm:$0xff]
    %v1043 = vld [vmem:[%s3 + $0x50] sm:$0xff]
    %v1044 = vld [vmem:[%s3 + $0x58] sm:$0xff]
    %v1045 = vld [vmem:[%s3 + $0x60] sm:$0xff]
    %v1046 = vld [vmem:[%s3 + $0x68] sm:$0xff]
    %v1047 = vld [vmem:[%s3 + $0x70] sm:$0xff]
    %v1048 = vld [vmem:[%s3 + $0x78] sm:$0xff]
    %v1049 = vld [vmem:[%s3 + $0x80] sm:$0xff]
    %v1050 = vld [vmem:[%s3 + $0x88] sm:$0xff]
    %v1051 = vld [vmem:[%s3 + $0x90] sm:$0xff]
    %v1052 = vld [vmem:[%s3 + $0x98] sm:$0xff]
    %v1053 = vld [vmem:[%s3 + $0xa0] sm:$0xff]
    %v1054 = vld [vmem:[%s3 + $0xa8] sm:$0xff]
    %v1055 = vld [vmem:[%s3 + $0xb0] sm:$0xff]
    %v1056 = vld [vmem:[%s3 + $0xb8] sm:$0xff]
    %v1057 = vld [vmem:[%s3 + $0xc0] sm:$0xff]
    %v1058 = vld [vmem:[%s3 + $0xc8] sm:$0xff]
    %v1059 = vld [vmem:[%s3 + $0xd0] sm:$0xff]
    %v1060 = vld [vmem:[%s3 + $0xd8] sm:$0xff]
    %v1061 = vld [vmem:[%s3 + $0xe0] sm:$0xff]
    %v1062 = vld [vmem:[%s3 + $0xe8] sm:$0xff]
    %v1063 = vld [vmem:[%s3 + $0xf0] sm:$0xff]
    %v1064 = vld [vmem:[%s3 + $0xf8] sm:$0xff]
    %v1065 = vld [vmem:[%s3 + $0x100] sm:$0xff]
    %v1066 = vld [vmem:[%s3 + $0x108] sm:$0xff]
    %v1067 = vld [vmem:[%s3 + $0x110] sm:$0xff]
    %v1068 = vld [vmem:[%s3 + $0x118] sm:$0xff]
    %v1069 = vld [vmem:[%s3 + $0x120] sm:$0xff]
    %v1070 = vld [vmem:[%s3 + $0x128] sm:$0xff]
    %v1071 = vld [vmem:[%s3 + $0x130] sm:$0xff]
    %v1072 = vld [vmem:[%s3 + $0x138] sm:$0xff]
    %v1073 = vld [vmem:[%s3 + $0x140] sm:$0xff]
    %v1074 = vld [vmem:[%s3 + $0x148] sm:$0xff]
    %v1075 = vld [vmem:[%s3 + $0x150] sm:$0xff]
    %v1076 = vld [vmem:[%s3 + $0x158] sm:$0xff]
    %v1077 = vld [vmem:[%s3 + $0x160] sm:$0xff]
    %v1078 = vld [vmem:[%s3 + $0x168] sm:$0xff]
    %v1079 = vld [vmem:[%s3 + $0x170] sm:$0xff]
    %v1080 = vld [vmem:[%s3 + $0x178] sm:$0xff]
    %v1081 = vld [vmem:[%s3 + $0x180] sm:$0xff]
    %v1082 = vld [vmem:[%s3 + $0x188] sm:$0xff]
    %v1083 = vld [vmem:[%s3 + $0x190] sm:$0xff]
    %v1084 = vld [vmem:[%s3 + $0x198] sm:$0xff]
    %v1085 = vld [vmem:[%s3 + $0x1a0] sm:$0xff]
    %v1086 = vld [vmem:[%s3 + $0x1a8] sm:$0xff]
    %v1087 = vld [vmem:[%s3 + $0x1b0] sm:$0xff]
    %v1088 = vld [vmem:[%s3 + $0x1b8] sm:$0xff]
    %v1089 = vld [vmem:[%s3 + $0x1c0] sm:$0xff]
    %v1090 = vld [vmem:[%s3 + $0x1c8] sm:$0xff]
    %v1091 = vld [vmem:[%s3 + $0x1d0] sm:$0xff]
    %v1092 = vld [vmem:[%s3 + $0x1d8] sm:$0xff]
    %v1093 = vld [vmem:[%s3 + $0x1e0] sm:$0xff]
    %v1094 = vld [vmem:[%s3 + $0x1e8] sm:$0xff]
    %v1095 = vld [vmem:[%s3 + $0x1f0] sm:$0xff]
    %v1096 = vld [vmem:[%s3 + $0x1f8] sm:$0xff]
    %v1097 = vld [vmem:[%s3 + $0x200] sm:$0xff]
    %v1098 = vld [vmem:[%s3 + $0x208] sm:$0xff]
    %v1099 = vld [vmem:[%s3 + $0x210] sm:$0xff]
    %v1100 = vld [vmem:[%s3 + $0x218] sm:$0xff]
    %v1101 = vld [vmem:[%s3 + $0x220] sm:$0xff]
    %v1102 = vld [vmem:[%s3 + $0x228] sm:$0xff]
    %v1103 = vld [vmem:[%s3 + $0x230] sm:$0xff]
    %v1104 = vld [vmem:[%s3 + $0x238] sm:$0xff]
    %v1105 = vld [vmem:[%s3 + $0x240] sm:$0xff]
    %v1106 = vld [vmem:[%s3 + $0x248] sm:$0xff]
    %v1107 = vld [vmem:[%s3 + $0x250] sm:$0xff]
    %v1108 = vld [vmem:[%s3 + $0x258] sm:$0xff]
    %v1109 = vld [vmem:[%s3 + $0x260] sm:$0xff]
    %v1110 = vld [vmem:[%s3 + $0x268] sm:$0xff]
    %v1111 = vld [vmem:[%s3 + $0x270] sm:$0xff]
    %v1112 = vld [vmem:[%s3 + $0x278] sm:$0xff]
    %v1113 = vld [vmem:[%s3 + $0x280] sm:$0xff]
    %v1114 = vld [vmem:[%s3 + $0x288] sm:$0xff]
    %v1115 = vld [vmem:[%s3 + $0x290] sm:$0xff]
    %v1116 = vld [vmem:[%s3 + $0x298] sm:$0xff]
    %v1117 = vld [vmem:[%s3 + $0x2a0] sm:$0xff]
    %v1118 = vld [vmem:[%s3 + $0x2a8] sm:$0xff]
    %v1119 = vld [vmem:[%s3 + $0x2b0] sm:$0xff]
    %v1120 = vld [vmem:[%s3 + $0x2b8] sm:$0xff]
    %v1121 = vld [vmem:[%s3 + $0x2c0] sm:$0xff]
    %v1122 = vld [vmem:[%s3 + $0x2c8] sm:$0xff]
    %v1123 = vld [vmem:[%s3 + $0x2d0] sm:$0xff]
    %v1124 = vld [vmem:[%s3 + $0x2d8] sm:$0xff]
    %v1125 = vld [vmem:[%s3 + $0x2e0] sm:$0xff]
    %v1126 = vld [vmem:[%s3 + $0x2e8] sm:$0xff]
    %v1127 = vld [vmem:[%s3 + $0x2f0] sm:$0xff]
    %v1128 = vld [vmem:[%s3 + $0x2f8] sm:$0xff]
    %v1129 = vld [vmem:[%s3 + $0x300] sm:$0xff]
    %v1130 = vld [vmem:[%s3 + $0x308] sm:$0xff]
    %v1131 = vld [vmem:[%s3 + $0x310] sm:$0xff]
    %v1132 = vld [vmem:[%s3 + $0x318] sm:$0xff]
    %v1133 = vld [vmem:[%s3 + $0x320] sm:$0xff]
    %v1134 = vld [vmem:[%s3 + $0x328] sm:$0xff]
    %v1135 = vld [vmem:[%s3 + $0x330] sm:$0xff]
    %v1136 = vld [vmem:[%s3 + $0x338] sm:$0xff]
    %v1137 = vld [vmem:[%s3 + $0x340] sm:$0xff]
    %v1138 = vld [vmem:[%s3 + $0x348] sm:$0xff]
    %v1139 = vld [vmem:[%s3 + $0x350] sm:$0xff]
    %v1140 = vld [vmem:[%s3 + $0x358] sm:$0xff]
    %v1141 = vld [vmem:[%s3 + $0x360] sm:$0xff]
    %v1142 = vld [vmem:[%s3 + $0x368] sm:$0xff]
    %v1143 = vld [vmem:[%s3 + $0x370] sm:$0xff]
    %v1144 = vld [vmem:[%s3 + $0x378] sm:$0xff]
    %v1145 = vld [vmem:[%s3 + $0x380] sm:$0xff]
    %v1146 = vld [vmem:[%s3 + $0x388] sm:$0xff]
    %v1147 = vld [vmem:[%s3 + $0x390] sm:$0xff]
    %v1148 = vld [vmem:[%s3 + $0x398] sm:$0xff]
    %v1149 = vld [vmem:[%s3 + $0x3a0] sm:$0xff]
    %v1150 = vld [vmem:[%s3 + $0x3a8] sm:$0xff]
    %v1151 = vld [vmem:[%s3 + $0x3b0] sm:$0xff]
    %v1152 = vld [vmem:[%s3 + $0x3b8] sm:$0xff]
    %v1153 = vld [vmem:[%s3 + $0x3c0] sm:$0xff]
    %v1154 = vld [vmem:[%s3 + $0x3c8] sm:$0xff]
    %v1155 = vld [vmem:[%s3 + $0x3d0] sm:$0xff]
    %v1156 = vld [vmem:[%s3 + $0x3d8] sm:$0xff]
    %v1157 = vld [vmem:[%s3 + $0x3e0] sm:$0xff]
    %v1158 = vld [vmem:[%s3 + $0x3e8] sm:$0xff]
    %v1159 = vld [vmem:[%s3 + $0x3f0] sm:$0xff]
    %v1160 = vld [vmem:[%s3 + $0x3f8] sm:$0xff]
    %v1161 = vld [vmem:[%s4] sm:$0xf]
    %v1163 = vlaneseq
    %v1164 = vshrl.u32 %v1163, 7
    %v1165 = vsub.s32 0, %v1164
    %v1166 = vrot.slane %v1161, %v1165
    %v1167 = vlaneseq
    %v1168 = vshrl.u32 %v1167, 7
    %v1169 = vsub.s32 1, %v1168
    %v1170 = vrot.slane %v1161, %v1169
    %v1171 = vlaneseq
    %v1172 = vshrl.u32 %v1171, 7
    %v1173 = vsub.s32 2, %v1172
    %v1174 = vrot.slane %v1161, %v1173
    %v1175 = vlaneseq
    %v1176 = vshrl.u32 %v1175, 7
    %v1177 = vsub.s32 3, %v1176
    %v1178 = vrot.slane %v1161, %v1177
    %v1311 = vunpack.c.l.b16 %v1033
    %v1312 = vunpack.c.h.b16 %v1033
    %v1313 = vunpack.c.l.b16 %v1034
    %v1314 = vunpack.c.h.b16 %v1034
    %v1315 = vunpack.c.l.b16 %v1035
    %v1316 = vunpack.c.h.b16 %v1035
    %v1317 = vunpack.c.l.b16 %v1036
    %v1318 = vunpack.c.h.b16 %v1036
    %v1319 = vunpack.c.l.b16 %v1037
    %v1320 = vunpack.c.h.b16 %v1037
    %v1321 = vunpack.c.l.b16 %v1038
    %v1322 = vunpack.c.h.b16 %v1038
    %v1323 = vunpack.c.l.b16 %v1039
    %v1324 = vunpack.c.h.b16 %v1039
    %v1325 = vunpack.c.l.b16 %v1040
    %v1326 = vunpack.c.h.b16 %v1040
    %v1327 = vunpack.c.l.b16 %v1041
    %v1328 = vunpack.c.h.b16 %v1041
    %v1329 = vunpack.c.l.b16 %v1042
    %v1330 = vunpack.c.h.b16 %v1042
    %v1331 = vunpack.c.l.b16 %v1043
    %v1332 = vunpack.c.h.b16 %v1043
    %v1333 = vunpack.c.l.b16 %v1044
    %v1334 = vunpack.c.h.b16 %v1044
    %v1335 = vunpack.c.l.b16 %v1045
    %v1336 = vunpack.c.h.b16 %v1045
    %v1337 = vunpack.c.l.b16 %v1046
    %v1338 = vunpack.c.h.b16 %v1046
    %v1339 = vunpack.c.l.b16 %v1047
    %v1340 = vunpack.c.h.b16 %v1047
    %v1341 = vunpack.c.l.b16 %v1048
    %v1342 = vunpack.c.h.b16 %v1048
    %v1343 = vunpack.c.l.b16 %v1049
    %v1344 = vunpack.c.h.b16 %v1049
    %v1345 = vunpack.c.l.b16 %v1050
    %v1346 = vunpack.c.h.b16 %v1050
    %v1347 = vunpack.c.l.b16 %v1051
    %v1348 = vunpack.c.h.b16 %v1051
    %v1349 = vunpack.c.l.b16 %v1052
    %v1350 = vunpack.c.h.b16 %v1052
    %v1351 = vunpack.c.l.b16 %v1053
    %v1352 = vunpack.c.h.b16 %v1053
    %v1353 = vunpack.c.l.b16 %v1054
    %v1354 = vunpack.c.h.b16 %v1054
    %v1355 = vunpack.c.l.b16 %v1055
    %v1356 = vunpack.c.h.b16 %v1055
    %v1357 = vunpack.c.l.b16 %v1056
    %v1358 = vunpack.c.h.b16 %v1056
    %v1359 = vunpack.c.l.b16 %v1057
    %v1360 = vunpack.c.h.b16 %v1057
    %v1361 = vunpack.c.l.b16 %v1058
    %v1362 = vunpack.c.h.b16 %v1058
    %v1363 = vunpack.c.l.b16 %v1059
    %v1364 = vunpack.c.h.b16 %v1059
    %v1365 = vunpack.c.l.b16 %v1060
    %v1366 = vunpack.c.h.b16 %v1060
    %v1367 = vunpack.c.l.b16 %v1061
    %v1368 = vunpack.c.h.b16 %v1061
    %v1369 = vunpack.c.l.b16 %v1062
    %v1370 = vunpack.c.h.b16 %v1062
    %v1371 = vunpack.c.l.b16 %v1063
    %v1372 = vunpack.c.h.b16 %v1063
    %v1373 = vunpack.c.l.b16 %v1064
    %v1374 = vunpack.c.h.b16 %v1064
    %v1375 = vunpack.c.l.b16 %v1065
    %v1376 = vunpack.c.h.b16 %v1065
    %v1377 = vunpack.c.l.b16 %v1066
    %v1378 = vunpack.c.h.b16 %v1066
    %v1379 = vunpack.c.l.b16 %v1067
    %v1380 = vunpack.c.h.b16 %v1067
    %v1381 = vunpack.c.l.b16 %v1068
    %v1382 = vunpack.c.h.b16 %v1068
    %v1383 = vunpack.c.l.b16 %v1069
    %v1384 = vunpack.c.h.b16 %v1069
    %v1385 = vunpack.c.l.b16 %v1070
    %v1386 = vunpack.c.h.b16 %v1070
    %v1387 = vunpack.c.l.b16 %v1071
    %v1388 = vunpack.c.h.b16 %v1071
    %v1389 = vunpack.c.l.b16 %v1072
    %v1390 = vunpack.c.h.b16 %v1072
    %v1391 = vunpack.c.l.b16 %v1073
    %v1392 = vunpack.c.h.b16 %v1073
    %v1393 = vunpack.c.l.b16 %v1074
    %v1394 = vunpack.c.h.b16 %v1074
    %v1395 = vunpack.c.l.b16 %v1075
    %v1396 = vunpack.c.h.b16 %v1075
    %v1397 = vunpack.c.l.b16 %v1076
    %v1398 = vunpack.c.h.b16 %v1076
    %v1399 = vunpack.c.l.b16 %v1077
    %v1400 = vunpack.c.h.b16 %v1077
    %v1401 = vunpack.c.l.b16 %v1078
    %v1402 = vunpack.c.h.b16 %v1078
    %v1403 = vunpack.c.l.b16 %v1079
    %v1404 = vunpack.c.h.b16 %v1079
    %v1405 = vunpack.c.l.b16 %v1080
    %v1406 = vunpack.c.h.b16 %v1080
    %v1407 = vunpack.c.l.b16 %v1081
    %v1408 = vunpack.c.h.b16 %v1081
    %v1409 = vunpack.c.l.b16 %v1082
    %v1410 = vunpack.c.h.b16 %v1082
    %v1411 = vunpack.c.l.b16 %v1083
    %v1412 = vunpack.c.h.b16 %v1083
    %v1413 = vunpack.c.l.b16 %v1084
    %v1414 = vunpack.c.h.b16 %v1084
    %v1415 = vunpack.c.l.b16 %v1085
    %v1416 = vunpack.c.h.b16 %v1085
    %v1417 = vunpack.c.l.b16 %v1086
    %v1418 = vunpack.c.h.b16 %v1086
    %v1419 = vunpack.c.l.b16 %v1087
    %v1420 = vunpack.c.h.b16 %v1087
    %v1421 = vunpack.c.l.b16 %v1088
    %v1422 = vunpack.c.h.b16 %v1088
    %v1423 = vunpack.c.l.b16 %v1089
    %v1424 = vunpack.c.h.b16 %v1089
    %v1425 = vunpack.c.l.b16 %v1090
    %v1426 = vunpack.c.h.b16 %v1090
    %v1427 = vunpack.c.l.b16 %v1091
    %v1428 = vunpack.c.h.b16 %v1091
    %v1429 = vunpack.c.l.b16 %v1092
    %v1430 = vunpack.c.h.b16 %v1092
    %v1431 = vunpack.c.l.b16 %v1093
    %v1432 = vunpack.c.h.b16 %v1093
    %v1433 = vunpack.c.l.b16 %v1094
    %v1434 = vunpack.c.h.b16 %v1094
    %v1435 = vunpack.c.l.b16 %v1095
    %v1436 = vunpack.c.h.b16 %v1095
    %v1437 = vunpack.c.l.b16 %v1096
    %v1438 = vunpack.c.h.b16 %v1096
    %v1439 = vunpack.c.l.b16 %v1097
    %v1440 = vunpack.c.h.b16 %v1097
    %v1441 = vunpack.c.l.b16 %v1098
    %v1442 = vunpack.c.h.b16 %v1098
    %v1443 = vunpack.c.l.b16 %v1099
    %v1444 = vunpack.c.h.b16 %v1099
    %v1445 = vunpack.c.l.b16 %v1100
    %v1446 = vunpack.c.h.b16 %v1100
    %v1447 = vunpack.c.l.b16 %v1101
    %v1448 = vunpack.c.h.b16 %v1101
    %v1449 = vunpack.c.l.b16 %v1102
    %v1450 = vunpack.c.h.b16 %v1102
    %v1451 = vunpack.c.l.b16 %v1103
    %v1452 = vunpack.c.h.b16 %v1103
    %v1453 = vunpack.c.l.b16 %v1104
    %v1454 = vunpack.c.h.b16 %v1104
    %v1455 = vunpack.c.l.b16 %v1105
    %v1456 = vunpack.c.h.b16 %v1105
    %v1457 = vunpack.c.l.b16 %v1106
    %v1458 = vunpack.c.h.b16 %v1106
    %v1459 = vunpack.c.l.b16 %v1107
    %v1460 = vunpack.c.h.b16 %v1107
    %v1461 = vunpack.c.l.b16 %v1108
    %v1462 = vunpack.c.h.b16 %v1108
    %v1463 = vunpack.c.l.b16 %v1109
    %v1464 = vunpack.c.h.b16 %v1109
    %v1465 = vunpack.c.l.b16 %v1110
    %v1466 = vunpack.c.h.b16 %v1110
    %v1467 = vunpack.c.l.b16 %v1111
    %v1468 = vunpack.c.h.b16 %v1111
    %v1469 = vunpack.c.l.b16 %v1112
    %v1470 = vunpack.c.h.b16 %v1112
    %v1471 = vunpack.c.l.b16 %v1113
    %v1472 = vunpack.c.h.b16 %v1113
    %v1473 = vunpack.c.l.b16 %v1114
    %v1474 = vunpack.c.h.b16 %v1114
    %v1475 = vunpack.c.l.b16 %v1115
    %v1476 = vunpack.c.h.b16 %v1115
    %v1477 = vunpack.c.l.b16 %v1116
    %v1478 = vunpack.c.h.b16 %v1116
    %v1479 = vunpack.c.l.b16 %v1117
    %v1480 = vunpack.c.h.b16 %v1117
    %v1481 = vunpack.c.l.b16 %v1118
    %v1482 = vunpack.c.h.b16 %v1118
    %v1483 = vunpack.c.l.b16 %v1119
    %v1484 = vunpack.c.h.b16 %v1119
    %v1485 = vunpack.c.l.b16 %v1120
    %v1486 = vunpack.c.h.b16 %v1120
    %v1487 = vunpack.c.l.b16 %v1121
    %v1488 = vunpack.c.h.b16 %v1121
    %v1489 = vunpack.c.l.b16 %v1122
    %v1490 = vunpack.c.h.b16 %v1122
    %v1491 = vunpack.c.l.b16 %v1123
    %v1492 = vunpack.c.h.b16 %v1123
    %v1493 = vunpack.c.l.b16 %v1124
    %v1494 = vunpack.c.h.b16 %v1124
    %v1495 = vunpack.c.l.b16 %v1125
    %v1496 = vunpack.c.h.b16 %v1125
    %v1497 = vunpack.c.l.b16 %v1126
    %v1498 = vunpack.c.h.b16 %v1126
    %v1499 = vunpack.c.l.b16 %v1127
    %v1500 = vunpack.c.h.b16 %v1127
    %v1501 = vunpack.c.l.b16 %v1128
    %v1502 = vunpack.c.h.b16 %v1128
    %v1503 = vunpack.c.l.b16 %v1129
    %v1504 = vunpack.c.h.b16 %v1129
    %v1505 = vunpack.c.l.b16 %v1130
    %v1506 = vunpack.c.h.b16 %v1130
    %v1507 = vunpack.c.l.b16 %v1131
    %v1508 = vunpack.c.h.b16 %v1131
    %v1509 = vunpack.c.l.b16 %v1132
    %v1510 = vunpack.c.h.b16 %v1132
    %v1511 = vunpack.c.l.b16 %v1133
    %v1512 = vunpack.c.h.b16 %v1133
    %v1513 = vunpack.c.l.b16 %v1134
    %v1514 = vunpack.c.h.b16 %v1134
    %v1515 = vunpack.c.l.b16 %v1135
    %v1516 = vunpack.c.h.b16 %v1135
    %v1517 = vunpack.c.l.b16 %v1136
    %v1518 = vunpack.c.h.b16 %v1136
    %v1519 = vunpack.c.l.b16 %v1137
    %v1520 = vunpack.c.h.b16 %v1137
    %v1521 = vunpack.c.l.b16 %v1138
    %v1522 = vunpack.c.h.b16 %v1138
    %v1523 = vunpack.c.l.b16 %v1139
    %v1524 = vunpack.c.h.b16 %v1139
    %v1525 = vunpack.c.l.b16 %v1140
    %v1526 = vunpack.c.h.b16 %v1140
    %v1527 = vunpack.c.l.b16 %v1141
    %v1528 = vunpack.c.h.b16 %v1141
    %v1529 = vunpack.c.l.b16 %v1142
    %v1530 = vunpack.c.h.b16 %v1142
    %v1531 = vunpack.c.l.b16 %v1143
    %v1532 = vunpack.c.h.b16 %v1143
    %v1533 = vunpack.c.l.b16 %v1144
    %v1534 = vunpack.c.h.b16 %v1144
    %v1535 = vunpack.c.l.b16 %v1145
    %v1536 = vunpack.c.h.b16 %v1145
    %v1537 = vunpack.c.l.b16 %v1146
    %v1538 = vunpack.c.h.b16 %v1146
    %v1539 = vunpack.c.l.b16 %v1147
    %v1540 = vunpack.c.h.b16 %v1147
    %v1541 = vunpack.c.l.b16 %v1148
    %v1542 = vunpack.c.h.b16 %v1148
    %v1543 = vunpack.c.l.b16 %v1149
    %v1544 = vunpack.c.h.b16 %v1149
    %v1545 = vunpack.c.l.b16 %v1150
    %v1546 = vunpack.c.h.b16 %v1150
    %v1547 = vunpack.c.l.b16 %v1151
    %v1548 = vunpack.c.h.b16 %v1151
    %v1549 = vunpack.c.l.b16 %v1152
    %v1550 = vunpack.c.h.b16 %v1152
    %v1551 = vunpack.c.l.b16 %v1153
    %v1552 = vunpack.c.h.b16 %v1153
    %v1553 = vunpack.c.l.b16 %v1154
    %v1554 = vunpack.c.h.b16 %v1154
    %v1555 = vunpack.c.l.b16 %v1155
    %v1556 = vunpack.c.h.b16 %v1155
    %v1557 = vunpack.c.l.b16 %v1156
    %v1558 = vunpack.c.h.b16 %v1156
    %v1559 = vunpack.c.l.b16 %v1157
    %v1560 = vunpack.c.h.b16 %v1157
    %v1561 = vunpack.c.l.b16 %v1158
    %v1562 = vunpack.c.h.b16 %v1158
    %v1563 = vunpack.c.l.b16 %v1159
    %v1564 = vunpack.c.h.b16 %v1159
    %v1565 = vunpack.c.l.b16 %v1160
    %v1566 = vunpack.c.h.b16 %v1160
    %v1567 = vpack.c.b16 %v1315, %v1311
    %v1568 = vpack.c.b16 %v1316, %v1312
    %v1569 = vpack.c.b16 %v1317, %v1313
    %v1570 = vpack.c.b16 %v1318, %v1314
    %v1571 = vpack.c.b16 %v1323, %v1319
    %v1572 = vpack.c.b16 %v1324, %v1320
    %v1573 = vpack.c.b16 %v1325, %v1321
    %v1574 = vpack.c.b16 %v1326, %v1322
    %v1575 = vpack.c.b16 %v1331, %v1327
    %v1576 = vpack.c.b16 %v1332, %v1328
    %v1577 = vpack.c.b16 %v1333, %v1329
    %v1578 = vpack.c.b16 %v1334, %v1330
    %v1579 = vpack.c.b16 %v1339, %v1335
    %v1580 = vpack.c.b16 %v1340, %v1336
    %v1581 = vpack.c.b16 %v1341, %v1337
    %v1582 = vpack.c.b16 %v1342, %v1338
    %v1583 = vpack.c.b16 %v1347, %v1343
    %v1584 = vpack.c.b16 %v1348, %v1344
    %v1585 = vpack.c.b16 %v1349, %v1345
    %v1586 = vpack.c.b16 %v1350, %v1346
    %v1587 = vpack.c.b16 %v1355, %v1351
    %v1588 = vpack.c.b16 %v1356, %v1352
    %v1589 = vpack.c.b16 %v1357, %v1353
    %v1590 = vpack.c.b16 %v1358, %v1354
    %v1591 = vpack.c.b16 %v1363, %v1359
    %v1592 = vpack.c.b16 %v1364, %v1360
    %v1593 = vpack.c.b16 %v1365, %v1361
    %v1594 = vpack.c.b16 %v1366, %v1362
    %v1595 = vpack.c.b16 %v1371, %v1367
    %v1596 = vpack.c.b16 %v1372, %v1368
    %v1597 = vpack.c.b16 %v1373, %v1369
    %v1598 = vpack.c.b16 %v1374, %v1370
    %v1599 = vpack.c.b16 %v1379, %v1375
    %v1600 = vpack.c.b16 %v1380, %v1376
    %v1601 = vpack.c.b16 %v1381, %v1377
    %v1602 = vpack.c.b16 %v1382, %v1378
    %v1603 = vpack.c.b16 %v1387, %v1383
    %v1604 = vpack.c.b16 %v1388, %v1384
    %v1605 = vpack.c.b16 %v1389, %v1385
    %v1606 = vpack.c.b16 %v1390, %v1386
    %v1607 = vpack.c.b16 %v1395, %v1391
    %v1608 = vpack.c.b16 %v1396, %v1392
    %v1609 = vpack.c.b16 %v1397, %v1393
    %v1610 = vpack.c.b16 %v1398, %v1394
    %v1611 = vpack.c.b16 %v1403, %v1399
    %v1612 = vpack.c.b16 %v1404, %v1400
    %v1613 = vpack.c.b16 %v1405, %v1401
    %v1614 = vpack.c.b16 %v1406, %v1402
    %v1615 = vpack.c.b16 %v1411, %v1407
    %v1616 = vpack.c.b16 %v1412, %v1408
    %v1617 = vpack.c.b16 %v1413, %v1409
    %v1618 = vpack.c.b16 %v1414, %v1410
    %v1619 = vpack.c.b16 %v1419, %v1415
    %v1620 = vpack.c.b16 %v1420, %v1416
    %v1621 = vpack.c.b16 %v1421, %v1417
    %v1622 = vpack.c.b16 %v1422, %v1418
    %v1623 = vpack.c.b16 %v1427, %v1423
    %v1624 = vpack.c.b16 %v1428, %v1424
    %v1625 = vpack.c.b16 %v1429, %v1425
    %v1626 = vpack.c.b16 %v1430, %v1426
    %v1627 = vpack.c.b16 %v1435, %v1431
    %v1628 = vpack.c.b16 %v1436, %v1432
    %v1629 = vpack.c.b16 %v1437, %v1433
    %v1630 = vpack.c.b16 %v1438, %v1434
    %v1631 = vpack.c.b16 %v1443, %v1439
    %v1632 = vpack.c.b16 %v1444, %v1440
    %v1633 = vpack.c.b16 %v1445, %v1441
    %v1634 = vpack.c.b16 %v1446, %v1442
    %v1635 = vpack.c.b16 %v1451, %v1447
    %v1636 = vpack.c.b16 %v1452, %v1448
    %v1637 = vpack.c.b16 %v1453, %v1449
    %v1638 = vpack.c.b16 %v1454, %v1450
    %v1639 = vpack.c.b16 %v1459, %v1455
    %v1640 = vpack.c.b16 %v1460, %v1456
    %v1641 = vpack.c.b16 %v1461, %v1457
    %v1642 = vpack.c.b16 %v1462, %v1458
    %v1643 = vpack.c.b16 %v1467, %v1463
    %v1644 = vpack.c.b16 %v1468, %v1464
    %v1645 = vpack.c.b16 %v1469, %v1465
    %v1646 = vpack.c.b16 %v1470, %v1466
    %v1647 = vpack.c.b16 %v1475, %v1471
    %v1648 = vpack.c.b16 %v1476, %v1472
    %v1649 = vpack.c.b16 %v1477, %v1473
    %v1650 = vpack.c.b16 %v1478, %v1474
    %v1651 = vpack.c.b16 %v1483, %v1479
    %v1652 = vpack.c.b16 %v1484, %v1480
    %v1653 = vpack.c.b16 %v1485, %v1481
    %v1654 = vpack.c.b16 %v1486, %v1482
    %v1655 = vpack.c.b16 %v1491, %v1487
    %v1656 = vpack.c.b16 %v1492, %v1488
    %v1657 = vpack.c.b16 %v1493, %v1489
    %v1658 = vpack.c.b16 %v1494, %v1490
    %v1659 = vpack.c.b16 %v1499, %v1495
    %v1660 = vpack.c.b16 %v1500, %v1496
    %v1661 = vpack.c.b16 %v1501, %v1497
    %v1662 = vpack.c.b16 %v1502, %v1498
    %v1663 = vpack.c.b16 %v1507, %v1503
    %v1664 = vpack.c.b16 %v1508, %v1504
    %v1665 = vpack.c.b16 %v1509, %v1505
    %v1666 = vpack.c.b16 %v1510, %v1506
    %v1667 = vpack.c.b16 %v1515, %v1511
    %v1668 = vpack.c.b16 %v1516, %v1512
    %v1669 = vpack.c.b16 %v1517, %v1513
    %v1670 = vpack.c.b16 %v1518, %v1514
    %v1671 = vpack.c.b16 %v1523, %v1519
    %v1672 = vpack.c.b16 %v1524, %v1520
    %v1673 = vpack.c.b16 %v1525, %v1521
    %v1674 = vpack.c.b16 %v1526, %v1522
    %v1675 = vpack.c.b16 %v1531, %v1527
    %v1676 = vpack.c.b16 %v1532, %v1528
    %v1677 = vpack.c.b16 %v1533, %v1529
    %v1678 = vpack.c.b16 %v1534, %v1530
    %v1679 = vpack.c.b16 %v1539, %v1535
    %v1680 = vpack.c.b16 %v1540, %v1536
    %v1681 = vpack.c.b16 %v1541, %v1537
    %v1682 = vpack.c.b16 %v1542, %v1538
    %v1683 = vpack.c.b16 %v1547, %v1543
    %v1684 = vpack.c.b16 %v1548, %v1544
    %v1685 = vpack.c.b16 %v1549, %v1545
    %v1686 = vpack.c.b16 %v1550, %v1546
    %v1687 = vpack.c.b16 %v1555, %v1551
    %v1688 = vpack.c.b16 %v1556, %v1552
    %v1689 = vpack.c.b16 %v1557, %v1553
    %v1690 = vpack.c.b16 %v1558, %v1554
    %v1691 = vpack.c.b16 %v1563, %v1559
    %v1692 = vpack.c.b16 %v1564, %v1560
    %v1693 = vpack.c.b16 %v1565, %v1561
    %v1694 = vpack.c.b16 %v1566, %v1562
    %1823 = vmatprep.subr.bf16.mxu0 %v1596
    %1824 = vmatpush1.bf16.msra.mxu0 %v1595
    %1825 = vmatprep.subr.bf16.mxu0 %v1592
    %1826 = vmatpush1.bf16.msra.mxu0 %v1591
    %1827 = vmatprep.subr.bf16.mxu0 %v1588
    %1828 = vmatpush1.bf16.msra.mxu0 %v1587
    %1829 = vmatprep.subr.bf16.mxu0 %v1584
    %1830 = vmatpush1.bf16.msra.mxu0 %v1583
    %1831 = vmatprep.subr.bf16.mxu0 %v1580
    %1832 = vmatpush1.bf16.msra.mxu0 %v1579
    %1833 = vmatprep.subr.bf16.mxu0 %v1576
    %1834 = vmatpush1.bf16.msra.mxu0 %v1575
    %1835 = vmatprep.subr.bf16.mxu0 %v1572
    %1836 = vmatpush1.bf16.msra.mxu0 %v1571
    %1837 = vmatprep.subr.bf16.mxu0 %v1568
    %1838 = vmatpush1.bf16.msra.mxu0 %v1567
    %1839 = vmatprep.subr.bf16.mxu0 %v1628
    %1840 = vmatpush2.bf16.msra.mxu0 %v1627
    %1841 = vmatprep.subr.bf16.mxu0 %v1624
    %1842 = vmatpush2.bf16.msra.mxu0 %v1623
    %1843 = vmatprep.subr.bf16.mxu0 %v1620
    %1844 = vmatpush2.bf16.msra.mxu0 %v1619
    %1845 = vmatprep.subr.bf16.mxu0 %v1616
    %1846 = vmatpush2.bf16.msra.mxu0 %v1615
    %1847 = vmatprep.subr.bf16.mxu0 %v1612
    %1848 = vmatpush2.bf16.msra.mxu0 %v1611
    %1849 = vmatprep.subr.bf16.mxu0 %v1608
    %1850 = vmatpush2.bf16.msra.mxu0 %v1607
    %1851 = vmatprep.subr.bf16.mxu0 %v1604
    %1852 = vmatpush2.bf16.msra.mxu0 %v1603
    %1853 = vmatprep.subr.bf16.mxu0 %v1600
    %1854 = vmatpush2.bf16.msra.mxu0 %v1599
    %1855 = vmatprep.mubr.bf16.mxu0 %v1002
    %1856 = vmatmul.mubr.bf16.gmra.mxu0 %v1001
    %v1857 = vpop.f32.mrf.mxu0
    %v1858 = vadd.f32 %v1166, %v1857
    %v1859 = vpop.f32.mrf.mxu0
    %v1860 = vadd.f32 %v1170, %v1859
    %v1861 = vpop.f32.mrf.mxu0
    %v1862 = vadd.f32 %v1166, %v1861
    %v1863 = vpop.f32.mrf.mxu0
    %v1864 = vadd.f32 %v1170, %v1863
    %1865 = vmatprep.mubr.bf16.mxu0 %v1006
    %1866 = vmatmul.mubr.bf16.gmra.mxu0 %v1005
    %v1867 = vpop.f32.mrf.mxu0
    %v1868 = vadd.f32 %v1166, %v1867
    %v1869 = vpop.f32.mrf.mxu0
    %v1870 = vadd.f32 %v1170, %v1869
    %v1871 = vpop.f32.mrf.mxu0
    %v1872 = vadd.f32 %v1166, %v1871
    %v1873 = vpop.f32.mrf.mxu0
    %v1874 = vadd.f32 %v1170, %v1873
    %1875 = vmatprep.mubr.bf16.mxu0 %v1010
    %1876 = vmatmul.mubr.bf16.gmra.mxu0 %v1009
    %v1877 = vpop.f32.mrf.mxu0
    %v1878 = vadd.f32 %v1166, %v1877
    %v1879 = vpop.f32.mrf.mxu0
    %v1880 = vadd.f32 %v1170, %v1879
    %v1881 = vpop.f32.mrf.mxu0
    %v1882 = vadd.f32 %v1166, %v1881
    %v1883 = vpop.f32.mrf.mxu0
    %v1884 = vadd.f32 %v1170, %v1883
    %1885 = vmatprep.mubr.bf16.mxu0 %v1014
    %1886 = vmatmul.mubr.bf16.gmra.mxu0 %v1013
    %v1887 = vpop.f32.mrf.mxu0
    %v1888 = vadd.f32 %v1166, %v1887
    %v1889 = vpop.f32.mrf.mxu0
    %v1890 = vadd.f32 %v1170, %v1889
    %v1891 = vpop.f32.mrf.mxu0
    %v1892 = vadd.f32 %v1166, %v1891
    %v1893 = vpop.f32.mrf.mxu0
    %v1894 = vadd.f32 %v1170, %v1893
    %1895 = vmatprep.mubr.bf16.mxu0 %v1018
    %1896 = vmatmul.mubr.bf16.gmra.mxu0 %v1017
    %v1897 = vpop.f32.mrf.mxu0
    %v1898 = vadd.f32 %v1166, %v1897
    %v1899 = vpop.f32.mrf.mxu0
    %v1900 = vadd.f32 %v1170, %v1899
    %v1901 = vpop.f32.mrf.mxu0
    %v1902 = vadd.f32 %v1166, %v1901
    %v1903 = vpop.f32.mrf.mxu0
    %v1904 = vadd.f32 %v1170, %v1903
    %1905 = vmatprep.mubr.bf16.mxu0 %v1022
    %1906 = vmatmul.mubr.bf16.gmra.mxu0 %v1021
    %v1907 = vpop.f32.mrf.mxu0
    %v1908 = vadd.f32 %v1166, %v1907
    %v1909 = vpop.f32.mrf.mxu0
    %v1910 = vadd.f32 %v1170, %v1909
    %v1911 = vpop.f32.mrf.mxu0
    %v1912 = vadd.f32 %v1166, %v1911
    %v1913 = vpop.f32.mrf.mxu0
    %v1914 = vadd.f32 %v1170, %v1913
    %1915 = vmatprep.mubr.bf16.mxu0 %v1026
    %1916 = vmatmul.mubr.bf16.gmra.mxu0 %v1025
    %v1917 = vpop.f32.mrf.mxu0
    %v1918 = vadd.f32 %v1166, %v1917
    %v1919 = vpop.f32.mrf.mxu0
    %v1920 = vadd.f32 %v1170, %v1919
    %v1921 = vpop.f32.mrf.mxu0
    %v1922 = vadd.f32 %v1166, %v1921
    %v1923 = vpop.f32.mrf.mxu0
    %v1924 = vadd.f32 %v1170, %v1923
    %1925 = vmatprep.mubr.bf16.mxu0 %v1030
    %1926 = vmatmul.mubr.bf16.gmra.mxu0 %v1029
    %v1927 = vpop.f32.mrf.mxu0
    %v1928 = vadd.f32 %v1166, %v1927
    %v1929 = vpop.f32.mrf.mxu0
    %v1930 = vadd.f32 %v1170, %v1929
    %v1931 = vpop.f32.mrf.mxu0
    %v1932 = vadd.f32 %v1166, %v1931
    %v1933 = vpop.f32.mrf.mxu0
    %v1934 = vadd.f32 %v1170, %v1933
    %1935 = vdwg.mxu0
    %1936 = vmatprep.subr.bf16.mxu0 %v1660
    %1937 = vmatpush1.bf16.msra.mxu0 %v1659
    %1938 = vmatprep.subr.bf16.mxu0 %v1656
    %1939 = vmatpush1.bf16.msra.mxu0 %v1655
    %1940 = vmatprep.subr.bf16.mxu0 %v1652
    %1941 = vmatpush1.bf16.msra.mxu0 %v1651
    %1942 = vmatprep.subr.bf16.mxu0 %v1648
    %1943 = vmatpush1.bf16.msra.mxu0 %v1647
    %1944 = vmatprep.subr.bf16.mxu0 %v1644
    %1945 = vmatpush1.bf16.msra.mxu0 %v1643
    %1946 = vmatprep.subr.bf16.mxu0 %v1640
    %1947 = vmatpush1.bf16.msra.mxu0 %v1639
    %1948 = vmatprep.subr.bf16.mxu0 %v1636
    %1949 = vmatpush1.bf16.msra.mxu0 %v1635
    %1950 = vmatprep.subr.bf16.mxu0 %v1632
    %1951 = vmatpush1.bf16.msra.mxu0 %v1631
    %1952 = vmatprep.subr.bf16.mxu0 %v1692
    %1953 = vmatpush2.bf16.msra.mxu0 %v1691
    %1954 = vmatprep.subr.bf16.mxu0 %v1688
    %1955 = vmatpush2.bf16.msra.mxu0 %v1687
    %1956 = vmatprep.subr.bf16.mxu0 %v1684
    %1957 = vmatpush2.bf16.msra.mxu0 %v1683
    %1958 = vmatprep.subr.bf16.mxu0 %v1680
    %1959 = vmatpush2.bf16.msra.mxu0 %v1679
    %1960 = vmatprep.subr.bf16.mxu0 %v1676
    %1961 = vmatpush2.bf16.msra.mxu0 %v1675
    %1962 = vmatprep.subr.bf16.mxu0 %v1672
    %1963 = vmatpush2.bf16.msra.mxu0 %v1671
    %1964 = vmatprep.subr.bf16.mxu0 %v1668
    %1965 = vmatpush2.bf16.msra.mxu0 %v1667
    %1966 = vmatprep.subr.bf16.mxu0 %v1664
    %1967 = vmatpush2.bf16.msra.mxu0 %v1663
    %1968 = vmatprep.mubr.bf16.mxu0 %v1004
    %1969 = vmatmul.mubr.bf16.gmra.mxu0 %v1003
    %v1970 = vpop.f32.mrf.mxu0
    %v1971 = vadd.f32 %v1858, %v1970
    %v1972 = vpop.f32.mrf.mxu0
    %v1973 = vadd.f32 %v1860, %v1972
    %v1974 = vpop.f32.mrf.mxu0
    %v1975 = vadd.f32 %v1862, %v1974
    %v1976 = vpop.f32.mrf.mxu0
    %v1977 = vadd.f32 %v1864, %v1976
    %1978 = vmatprep.mubr.bf16.mxu0 %v1008
    %1979 = vmatmul.mubr.bf16.gmra.mxu0 %v1007
    %v1980 = vpop.f32.mrf.mxu0
    %v1981 = vadd.f32 %v1868, %v1980
    %v1982 = vpop.f32.mrf.mxu0
    %v1983 = vadd.f32 %v1870, %v1982
    %v1984 = vpop.f32.mrf.mxu0
    %v1985 = vadd.f32 %v1872, %v1984
    %v1986 = vpop.f32.mrf.mxu0
    %v1987 = vadd.f32 %v1874, %v1986
    %1988 = vmatprep.mubr.bf16.mxu0 %v1012
    %1989 = vmatmul.mubr.bf16.gmra.mxu0 %v1011
    %v1990 = vpop.f32.mrf.mxu0
    %v1991 = vadd.f32 %v1878, %v1990
    %v1992 = vpop.f32.mrf.mxu0
    %v1993 = vadd.f32 %v1880, %v1992
    %v1994 = vpop.f32.mrf.mxu0
    %v1995 = vadd.f32 %v1882, %v1994
    %v1996 = vpop.f32.mrf.mxu0
    %v1997 = vadd.f32 %v1884, %v1996
    %1998 = vmatprep.mubr.bf16.mxu0 %v1016
    %1999 = vmatmul.mubr.bf16.gmra.mxu0 %v1015
    %v2000 = vpop.f32.mrf.mxu0
    %v2001 = vadd.f32 %v1888, %v2000
    %v2002 = vpop.f32.mrf.mxu0
    %v2003 = vadd.f32 %v1890, %v2002
    %v2004 = vpop.f32.mrf.mxu0
    %v2005 = vadd.f32 %v1892, %v2004
    %v2006 = vpop.f32.mrf.mxu0
    %v2007 = vadd.f32 %v1894, %v2006
    %2008 = vmatprep.mubr.bf16.mxu0 %v1020
    %2009 = vmatmul.mubr.bf16.gmra.mxu0 %v1019
    %v2010 = vpop.f32.mrf.mxu0
    %v2011 = vadd.f32 %v1898, %v2010
    %v2012 = vpop.f32.mrf.mxu0
    %v2013 = vadd.f32 %v1900, %v2012
    %v2014 = vpop.f32.mrf.mxu0
    %v2015 = vadd.f32 %v1902, %v2014
    %v2016 = vpop.f32.mrf.mxu0
    %v2017 = vadd.f32 %v1904, %v2016
    %2018 = vmatprep.mubr.bf16.mxu0 %v1024
    %2019 = vmatmul.mubr.bf16.gmra.mxu0 %v1023
    %v2020 = vpop.f32.mrf.mxu0
    %v2021 = vadd.f32 %v1908, %v2020
    %v2022 = vpop.f32.mrf.mxu0
    %v2023 = vadd.f32 %v1910, %v2022
    %v2024 = vpop.f32.mrf.mxu0
    %v2025 = vadd.f32 %v1912, %v2024
    %v2026 = vpop.f32.mrf.mxu0
    %v2027 = vadd.f32 %v1914, %v2026
    %2028 = vmatprep.mubr.bf16.mxu0 %v1028
    %2029 = vmatmul.mubr.bf16.gmra.mxu0 %v1027
    %v2030 = vpop.f32.mrf.mxu0
    %v2031 = vadd.f32 %v1918, %v2030
    %v2032 = vpop.f32.mrf.mxu0
    %v2033 = vadd.f32 %v1920, %v2032
    %v2034 = vpop.f32.mrf.mxu0
    %v2035 = vadd.f32 %v1922, %v2034
    %v2036 = vpop.f32.mrf.mxu0
    %v2037 = vadd.f32 %v1924, %v2036
    %2038 = vmatprep.mubr.bf16.mxu0 %v1032
    %2039 = vmatmul.mubr.bf16.gmra.mxu0 %v1031
    %v2040 = vpop.f32.mrf.mxu0
    %v2041 = vadd.f32 %v1928, %v2040
    %v2042 = vpop.f32.mrf.mxu0
    %v2043 = vadd.f32 %v1930, %v2042
    %v2044 = vpop.f32.mrf.mxu0
    %v2045 = vadd.f32 %v1932, %v2044
    %v2046 = vpop.f32.mrf.mxu0
    %v2047 = vadd.f32 %v1934, %v2046
    %2048 = vdwg.mxu0
    %2049 = vmatprep.subr.bf16.mxu0 %v1598
    %2050 = vmatpush1.bf16.msra.mxu0 %v1597
    %2051 = vmatprep.subr.bf16.mxu0 %v1594
    %2052 = vmatpush1.bf16.msra.mxu0 %v1593
    %2053 = vmatprep.subr.bf16.mxu0 %v1590
    %2054 = vmatpush1.bf16.msra.mxu0 %v1589
    %2055 = vmatprep.subr.bf16.mxu0 %v1586
    %2056 = vmatpush1.bf16.msra.mxu0 %v1585
    %2057 = vmatprep.subr.bf16.mxu0 %v1582
    %2058 = vmatpush1.bf16.msra.mxu0 %v1581
    %2059 = vmatprep.subr.bf16.mxu0 %v1578
    %2060 = vmatpush1.bf16.msra.mxu0 %v1577
    %2061 = vmatprep.subr.bf16.mxu0 %v1574
    %2062 = vmatpush1.bf16.msra.mxu0 %v1573
    %2063 = vmatprep.subr.bf16.mxu0 %v1570
    %2064 = vmatpush1.bf16.msra.mxu0 %v1569
    %2065 = vmatprep.subr.bf16.mxu0 %v1630
    %2066 = vmatpush2.bf16.msra.mxu0 %v1629
    %2067 = vmatprep.subr.bf16.mxu0 %v1626
    %2068 = vmatpush2.bf16.msra.mxu0 %v1625
    %2069 = vmatprep.subr.bf16.mxu0 %v1622
    %2070 = vmatpush2.bf16.msra.mxu0 %v1621
    %2071 = vmatprep.subr.bf16.mxu0 %v1618
    %2072 = vmatpush2.bf16.msra.mxu0 %v1617
    %2073 = vmatprep.subr.bf16.mxu0 %v1614
    %2074 = vmatpush2.bf16.msra.mxu0 %v1613
    %2075 = vmatprep.subr.bf16.mxu0 %v1610
    %2076 = vmatpush2.bf16.msra.mxu0 %v1609
    %2077 = vmatprep.subr.bf16.mxu0 %v1606
    %2078 = vmatpush2.bf16.msra.mxu0 %v1605
    %2079 = vmatprep.subr.bf16.mxu0 %v1602
    %2080 = vmatpush2.bf16.msra.mxu0 %v1601
    %2081 = vmatprep.mubr.bf16.mxu0 %v1002
    %2082 = vmatmul.mubr.bf16.gmra.mxu0 %v1001
    %v2083 = vpop.f32.mrf.mxu0
    %v2084 = vadd.f32 %v1174, %v2083
    %v2085 = vpop.f32.mrf.mxu0
    %v2086 = vadd.f32 %v1178, %v2085
    %v2087 = vpop.f32.mrf.mxu0
    %v2088 = vadd.f32 %v1174, %v2087
    %v2089 = vpop.f32.mrf.mxu0
    %v2090 = vadd.f32 %v1178, %v2089
    %2091 = vmatprep.mubr.bf16.mxu0 %v1006
    %2092 = vmatmul.mubr.bf16.gmra.mxu0 %v1005
    %v2093 = vpop.f32.mrf.mxu0
    %v2094 = vadd.f32 %v1174, %v2093
    %v2095 = vpop.f32.mrf.mxu0
    %v2096 = vadd.f32 %v1178, %v2095
    %v2097 = vpop.f32.mrf.mxu0
    %v2098 = vadd.f32 %v1174, %v2097
    %v2099 = vpop.f32.mrf.mxu0
    %v2100 = vadd.f32 %v1178, %v2099
    %2101 = vmatprep.mubr.bf16.mxu0 %v1010
    %2102 = vmatmul.mubr.bf16.gmra.mxu0 %v1009
    %v2103 = vpop.f32.mrf.mxu0
    %v2104 = vadd.f32 %v1174, %v2103
    %v2105 = vpop.f32.mrf.mxu0
    %v2106 = vadd.f32 %v1178, %v2105
    %v2107 = vpop.f32.mrf.mxu0
    %v2108 = vadd.f32 %v1174, %v2107
    %v2109 = vpop.f32.mrf.mxu0
    %v2110 = vadd.f32 %v1178, %v2109
    %2111 = vmatprep.mubr.bf16.mxu0 %v1014
    %2112 = vmatmul.mubr.bf16.gmra.mxu0 %v1013
    %v2113 = vpop.f32.mrf.mxu0
    %v2114 = vadd.f32 %v1174, %v2113
    %v2115 = vpop.f32.mrf.mxu0
    %v2116 = vadd.f32 %v1178, %v2115
    %v2117 = vpop.f32.mrf.mxu0
    %v2118 = vadd.f32 %v1174, %v2117
    %v2119 = vpop.f32.mrf.mxu0
    %v2120 = vadd.f32 %v1178, %v2119
    %2121 = vmatprep.mubr.bf16.mxu0 %v1018
    %2122 = vmatmul.mubr.bf16.gmra.mxu0 %v1017
    %v2123 = vpop.f32.mrf.mxu0
    %v2124 = vadd.f32 %v1174, %v2123
    %v2125 = vpop.f32.mrf.mxu0
    %v2126 = vadd.f32 %v1178, %v2125
    %v2127 = vpop.f32.mrf.mxu0
    %v2128 = vadd.f32 %v1174, %v2127
    %v2129 = vpop.f32.mrf.mxu0
    %v2130 = vadd.f32 %v1178, %v2129
    %2131 = vmatprep.mubr.bf16.mxu0 %v1022
    %2132 = vmatmul.mubr.bf16.gmra.mxu0 %v1021
    %v2133 = vpop.f32.mrf.mxu0
    %v2134 = vadd.f32 %v1174, %v2133
    %v2135 = vpop.f32.mrf.mxu0
    %v2136 = vadd.f32 %v1178, %v2135
    %v2137 = vpop.f32.mrf.mxu0
    %v2138 = vadd.f32 %v1174, %v2137
    %v2139 = vpop.f32.mrf.mxu0
    %v2140 = vadd.f32 %v1178, %v2139
    %2141 = vmatprep.mubr.bf16.mxu0 %v1026
    %2142 = vmatmul.mubr.bf16.gmra.mxu0 %v1025
    %v2143 = vpop.f32.mrf.mxu0
    %v2144 = vadd.f32 %v1174, %v2143
    %v2145 = vpop.f32.mrf.mxu0
    %v2146 = vadd.f32 %v1178, %v2145
    %v2147 = vpop.f32.mrf.mxu0
    %v2148 = vadd.f32 %v1174, %v2147
    %v2149 = vpop.f32.mrf.mxu0
    %v2150 = vadd.f32 %v1178, %v2149
    %2151 = vmatprep.mubr.bf16.mxu0 %v1030
    %2152 = vmatmul.mubr.bf16.gmra.mxu0 %v1029
    %v2153 = vpop.f32.mrf.mxu0
    %v2154 = vadd.f32 %v1174, %v2153
    %v2155 = vpop.f32.mrf.mxu0
    %v2156 = vadd.f32 %v1178, %v2155
    %v2157 = vpop.f32.mrf.mxu0
    %v2158 = vadd.f32 %v1174, %v2157
    %v2159 = vpop.f32.mrf.mxu0
    %v2160 = vadd.f32 %v1178, %v2159
    %2161 = vdwg.mxu0
    %2162 = vmatprep.subr.bf16.mxu0 %v1662
    %2163 = vmatpush1.bf16.msra.mxu0 %v1661
    %2164 = vmatprep.subr.bf16.mxu0 %v1658
    %2165 = vmatpush1.bf16.msra.mxu0 %v1657
    %2166 = vmatprep.subr.bf16.mxu0 %v1654
    %2167 = vmatpush1.bf16.msra.mxu0 %v1653
    %2168 = vmatprep.subr.bf16.mxu0 %v1650
    %2169 = vmatpush1.bf16.msra.mxu0 %v1649
    %2170 = vmatprep.subr.bf16.mxu0 %v1646
    %2171 = vmatpush1.bf16.msra.mxu0 %v1645
    %2172 = vmatprep.subr.bf16.mxu0 %v1642
    %2173 = vmatpush1.bf16.msra.mxu0 %v1641
    %2174 = vmatprep.subr.bf16.mxu0 %v1638
    %2175 = vmatpush1.bf16.msra.mxu0 %v1637
    %2176 = vmatprep.subr.bf16.mxu0 %v1634
    %2177 = vmatpush1.bf16.msra.mxu0 %v1633
    %2178 = vmatprep.subr.bf16.mxu0 %v1694
    %2179 = vmatpush2.bf16.msra.mxu0 %v1693
    %2180 = vmatprep.subr.bf16.mxu0 %v1690
    %2181 = vmatpush2.bf16.msra.mxu0 %v1689
    %2182 = vmatprep.subr.bf16.mxu0 %v1686
    %2183 = vmatpush2.bf16.msra.mxu0 %v1685
    %2184 = vmatprep.subr.bf16.mxu0 %v1682
    %2185 = vmatpush2.bf16.msra.mxu0 %v1681
    %2186 = vmatprep.subr.bf16.mxu0 %v1678
    %2187 = vmatpush2.bf16.msra.mxu0 %v1677
    %2188 = vmatprep.subr.bf16.mxu0 %v1674
    %2189 = vmatpush2.bf16.msra.mxu0 %v1673
    %2190 = vmatprep.subr.bf16.mxu0 %v1670
    %2191 = vmatpush2.bf16.msra.mxu0 %v1669
    %2192 = vmatprep.subr.bf16.mxu0 %v1666
    %2193 = vmatpush2.bf16.msra.mxu0 %v1665
    %2194 = vmatprep.mubr.bf16.mxu0 %v1004
    %2195 = vmatmul.mubr.bf16.gmra.mxu0 %v1003
    %v2196 = vpop.f32.mrf.mxu0
    %v2197 = vadd.f32 %v2084, %v2196
    %v2198 = vpop.f32.mrf.mxu0
    %v2199 = vadd.f32 %v2086, %v2198
    %v2200 = vpop.f32.mrf.mxu0
    %v2201 = vadd.f32 %v2088, %v2200
    %v2202 = vpop.f32.mrf.mxu0
    %v2203 = vadd.f32 %v2090, %v2202
    %2204 = vmatprep.mubr.bf16.mxu0 %v1008
    %2205 = vmatmul.mubr.bf16.gmra.mxu0 %v1007
    %v2206 = vpop.f32.mrf.mxu0
    %v2207 = vadd.f32 %v2094, %v2206
    %v2208 = vpop.f32.mrf.mxu0
    %v2209 = vadd.f32 %v2096, %v2208
    %v2210 = vpop.f32.mrf.mxu0
    %v2211 = vadd.f32 %v2098, %v2210
    %v2212 = vpop.f32.mrf.mxu0
    %v2213 = vadd.f32 %v2100, %v2212
    %2214 = vmatprep.mubr.bf16.mxu0 %v1012
    %2215 = vmatmul.mubr.bf16.gmra.mxu0 %v1011
    %v2216 = vpop.f32.mrf.mxu0
    %v2217 = vadd.f32 %v2104, %v2216
    %v2218 = vpop.f32.mrf.mxu0
    %v2219 = vadd.f32 %v2106, %v2218
    %v2220 = vpop.f32.mrf.mxu0
    %v2221 = vadd.f32 %v2108, %v2220
    %v2222 = vpop.f32.mrf.mxu0
    %v2223 = vadd.f32 %v2110, %v2222
    %2224 = vmatprep.mubr.bf16.mxu0 %v1016
    %2225 = vmatmul.mubr.bf16.gmra.mxu0 %v1015
    %v2226 = vpop.f32.mrf.mxu0
    %v2227 = vadd.f32 %v2114, %v2226
    %v2228 = vpop.f32.mrf.mxu0
    %v2229 = vadd.f32 %v2116, %v2228
    %v2230 = vpop.f32.mrf.mxu0
    %v2231 = vadd.f32 %v2118, %v2230
    %v2232 = vpop.f32.mrf.mxu0
    %v2233 = vadd.f32 %v2120, %v2232
    %2234 = vmatprep.mubr.bf16.mxu0 %v1020
    %2235 = vmatmul.mubr.bf16.gmra.mxu0 %v1019
    %v2236 = vpop.f32.mrf.mxu0
    %v2237 = vadd.f32 %v2124, %v2236
    %v2238 = vpop.f32.mrf.mxu0
    %v2239 = vadd.f32 %v2126, %v2238
    %v2240 = vpop.f32.mrf.mxu0
    %v2241 = vadd.f32 %v2128, %v2240
    %v2242 = vpop.f32.mrf.mxu0
    %v2243 = vadd.f32 %v2130, %v2242
    %2244 = vmatprep.mubr.bf16.mxu0 %v1024
    %2245 = vmatmul.mubr.bf16.gmra.mxu0 %v1023
    %v2246 = vpop.f32.mrf.mxu0
    %v2247 = vadd.f32 %v2134, %v2246
    %v2248 = vpop.f32.mrf.mxu0
    %v2249 = vadd.f32 %v2136, %v2248
    %v2250 = vpop.f32.mrf.mxu0
    %v2251 = vadd.f32 %v2138, %v2250
    %v2252 = vpop.f32.mrf.mxu0
    %v2253 = vadd.f32 %v2140, %v2252
    %2254 = vmatprep.mubr.bf16.mxu0 %v1028
    %2255 = vmatmul.mubr.bf16.gmra.mxu0 %v1027
    %v2256 = vpop.f32.mrf.mxu0
    %v2257 = vadd.f32 %v2144, %v2256
    %v2258 = vpop.f32.mrf.mxu0
    %v2259 = vadd.f32 %v2146, %v2258
    %v2260 = vpop.f32.mrf.mxu0
    %v2261 = vadd.f32 %v2148, %v2260
    %v2262 = vpop.f32.mrf.mxu0
    %v2263 = vadd.f32 %v2150, %v2262
    %2264 = vmatprep.mubr.bf16.mxu0 %v1032
    %2265 = vmatmul.mubr.bf16.gmra.mxu0 %v1031
    %v2266 = vpop.f32.mrf.mxu0
    %v2267 = vadd.f32 %v2154, %v2266
    %v2268 = vpop.f32.mrf.mxu0
    %v2269 = vadd.f32 %v2156, %v2268
    %v2270 = vpop.f32.mrf.mxu0
    %v2271 = vadd.f32 %v2158, %v2270
    %v2272 = vpop.f32.mrf.mxu0
    %v2273 = vadd.f32 %v2160, %v2272
    %2274 = vdwg.mxu0
    %v2275 = vxor.u32 %v1971, 2147483648
    %v2276 = vxor.u32 %v1973, 2147483648
    %v2277 = vxor.u32 %v2197, 2147483648
    %v2278 = vxor.u32 %v2199, 2147483648
    %v2279 = vxor.u32 %v1975, 2147483648
    %v2280 = vxor.u32 %v1977, 2147483648
    %v2281 = vxor.u32 %v2201, 2147483648
    %v2282 = vxor.u32 %v2203, 2147483648
    %v2283 = vxor.u32 %v1981, 2147483648
    %v2284 = vxor.u32 %v1983, 2147483648
    %v2285 = vxor.u32 %v2207, 2147483648
    %v2286 = vxor.u32 %v2209, 2147483648
    %v2287 = vxor.u32 %v1985, 2147483648
    %v2288 = vxor.u32 %v1987, 2147483648
    %v2289 = vxor.u32 %v2211, 2147483648
    %v2290 = vxor.u32 %v2213, 2147483648
    %v2291 = vxor.u32 %v1991, 2147483648
    %v2292 = vxor.u32 %v1993, 2147483648
    %v2293 = vxor.u32 %v2217, 2147483648
    %v2294 = vxor.u32 %v2219, 2147483648
    %v2295 = vxor.u32 %v1995, 2147483648
    %v2296 = vxor.u32 %v1997, 2147483648
    %v2297 = vxor.u32 %v2221, 2147483648
    %v2298 = vxor.u32 %v2223, 2147483648
    %v2299 = vxor.u32 %v2001, 2147483648
    %v2300 = vxor.u32 %v2003, 2147483648
    %v2301 = vxor.u32 %v2227, 2147483648
    %v2302 = vxor.u32 %v2229, 2147483648
    %v2303 = vxor.u32 %v2005, 2147483648
    %v2304 = vxor.u32 %v2007, 2147483648
    %v2305 = vxor.u32 %v2231, 2147483648
    %v2306 = vxor.u32 %v2233, 2147483648
    %v2307 = vxor.u32 %v2011, 2147483648
    %v2308 = vxor.u32 %v2013, 2147483648
    %v2309 = vxor.u32 %v2237, 2147483648
    %v2310 = vxor.u32 %v2239, 2147483648
    %v2311 = vxor.u32 %v2015, 2147483648
    %v2312 = vxor.u32 %v2017, 2147483648
    %v2313 = vxor.u32 %v2241, 2147483648
    %v2314 = vxor.u32 %v2243, 2147483648
    %v2315 = vxor.u32 %v2021, 2147483648
    %v2316 = vxor.u32 %v2023, 2147483648
    %v2317 = vxor.u32 %v2247, 2147483648
    %v2318 = vxor.u32 %v2249, 2147483648
    %v2319 = vxor.u32 %v2025, 2147483648
    %v2320 = vxor.u32 %v2027, 2147483648
    %v2321 = vxor.u32 %v2251, 2147483648
    %v2322 = vxor.u32 %v2253, 2147483648
    %v2323 = vxor.u32 %v2031, 2147483648
    %v2324 = vxor.u32 %v2033, 2147483648
    %v2325 = vxor.u32 %v2257, 2147483648
    %v2326 = vxor.u32 %v2259, 2147483648
    %v2327 = vxor.u32 %v2035, 2147483648
    %v2328 = vxor.u32 %v2037, 2147483648
    %v2329 = vxor.u32 %v2261, 2147483648
    %v2330 = vxor.u32 %v2263, 2147483648
    %v2331 = vxor.u32 %v2041, 2147483648
    %v2332 = vxor.u32 %v2043, 2147483648
    %v2333 = vxor.u32 %v2267, 2147483648
    %v2334 = vxor.u32 %v2269, 2147483648
    %v2335 = vxor.u32 %v2045, 2147483648
    %v2336 = vxor.u32 %v2047, 2147483648
    %v2337 = vxor.u32 %v2271, 2147483648
    %v2338 = vxor.u32 %v2273, 2147483648
    %v2339 = vmul.f32 %v2275, 1.442695
    %v2340 = vpow.pop %v2339
    %v2341 = vmul.f32 %v2276, 1.442695
    %v2342 = vpow.pop %v2341
    %v2343 = vmul.f32 %v2277, 1.442695
    %v2344 = vpow.pop %v2343
    %v2345 = vmul.f32 %v2278, 1.442695
    %v2346 = vpow.pop %v2345
    %v2347 = vmul.f32 %v2279, 1.442695
    %v2348 = vpow.pop %v2347
    %v2349 = vmul.f32 %v2280, 1.442695
    %v2350 = vpow.pop %v2349
    %v2351 = vmul.f32 %v2281, 1.442695
    %v2352 = vpow.pop %v2351
    %v2353 = vmul.f32 %v2282, 1.442695
    %v2354 = vpow.pop %v2353
    %v2355 = vmul.f32 %v2283, 1.442695
    %v2356 = vpow.pop %v2355
    %v2357 = vmul.f32 %v2284, 1.442695
    %v2358 = vpow.pop %v2357
    %v2359 = vmul.f32 %v2285, 1.442695
    %v2360 = vpow.pop %v2359
    %v2361 = vmul.f32 %v2286, 1.442695
    %v2362 = vpow.pop %v2361
    %v2363 = vmul.f32 %v2287, 1.442695
    %v2364 = vpow.pop %v2363
    %v2365 = vmul.f32 %v2288, 1.442695
    %v2366 = vpow.pop %v2365
    %v2367 = vmul.f32 %v2289, 1.442695
    %v2368 = vpow.pop %v2367
    %v2369 = vmul.f32 %v2290, 1.442695
    %v2370 = vpow.pop %v2369
    %v2371 = vmul.f32 %v2291, 1.442695
    %v2372 = vpow.pop %v2371
    %v2373 = vmul.f32 %v2292, 1.442695
    %v2374 = vpow.pop %v2373
    %v2375 = vmul.f32 %v2293, 1.442695
    %v2376 = vpow.pop %v2375
    %v2377 = vmul.f32 %v2294, 1.442695
    %v2378 = vpow.pop %v2377
    %v2379 = vmul.f32 %v2295, 1.442695
    %v2380 = vpow.pop %v2379
    %v2381 = vmul.f32 %v2296, 1.442695
    %v2382 = vpow.pop %v2381
    %v2383 = vmul.f32 %v2297, 1.442695
    %v2384 = vpow.pop %v2383
    %v2385 = vmul.f32 %v2298, 1.442695
    %v2386 = vpow.pop %v2385
    %v2387 = vmul.f32 %v2299, 1.442695
    %v2388 = vpow.pop %v2387
    %v2389 = vmul.f32 %v2300, 1.442695
    %v2390 = vpow.pop %v2389
    %v2391 = vmul.f32 %v2301, 1.442695
    %v2392 = vpow.pop %v2391
    %v2393 = vmul.f32 %v2302, 1.442695
    %v2394 = vpow.pop %v2393
    %v2395 = vmul.f32 %v2303, 1.442695
    %v2396 = vpow.pop %v2395
    %v2397 = vmul.f32 %v2304, 1.442695
    %v2398 = vpow.pop %v2397
    %v2399 = vmul.f32 %v2305, 1.442695
    %v2400 = vpow.pop %v2399
    %v2401 = vmul.f32 %v2306, 1.442695
    %v2402 = vpow.pop %v2401
    %v2403 = vmul.f32 %v2307, 1.442695
    %v2404 = vpow.pop %v2403
    %v2405 = vmul.f32 %v2308, 1.442695
    %v2406 = vpow.pop %v2405
    %v2407 = vmul.f32 %v2309, 1.442695
    %v2408 = vpow.pop %v2407
    %v2409 = vmul.f32 %v2310, 1.442695
    %v2410 = vpow.pop %v2409
    %v2411 = vmul.f32 %v2311, 1.442695
    %v2412 = vpow.pop %v2411
    %v2413 = vmul.f32 %v2312, 1.442695
    %v2414 = vpow.pop %v2413
    %v2415 = vmul.f32 %v2313, 1.442695
    %v2416 = vpow.pop %v2415
    %v2417 = vmul.f32 %v2314, 1.442695
    %v2418 = vpow.pop %v2417
    %v2419 = vmul.f32 %v2315, 1.442695
    %v2420 = vpow.pop %v2419
    %v2421 = vmul.f32 %v2316, 1.442695
    %v2422 = vpow.pop %v2421
    %v2423 = vmul.f32 %v2317, 1.442695
    %v2424 = vpow.pop %v2423
    %v2425 = vmul.f32 %v2318, 1.442695
    %v2426 = vpow.pop %v2425
    %v2427 = vmul.f32 %v2319, 1.442695
    %v2428 = vpow.pop %v2427
    %v2429 = vmul.f32 %v2320, 1.442695
    %v2430 = vpow.pop %v2429
    %v2431 = vmul.f32 %v2321, 1.442695
    %v2432 = vpow.pop %v2431
    %v2433 = vmul.f32 %v2322, 1.442695
    %v2434 = vpow.pop %v2433
    %v2435 = vmul.f32 %v2323, 1.442695
    %v2436 = vpow.pop %v2435
    %v2437 = vmul.f32 %v2324, 1.442695
    %v2438 = vpow.pop %v2437
    %v2439 = vmul.f32 %v2325, 1.442695
    %v2440 = vpow.pop %v2439
    %v2441 = vmul.f32 %v2326, 1.442695
    %v2442 = vpow.pop %v2441
    %v2443 = vmul.f32 %v2327, 1.442695
    %v2444 = vpow.pop %v2443
    %v2445 = vmul.f32 %v2328, 1.442695
    %v2446 = vpow.pop %v2445
    %v2447 = vmul.f32 %v2329, 1.442695
    %v2448 = vpow.pop %v2447
    %v2449 = vmul.f32 %v2330, 1.442695
    %v2450 = vpow.pop %v2449
    %v2451 = vmul.f32 %v2331, 1.442695
    %v2452 = vpow.pop %v2451
    %v2453 = vmul.f32 %v2332, 1.442695
    %v2454 = vpow.pop %v2453
    %v2455 = vmul.f32 %v2333, 1.442695
    %v2456 = vpow.pop %v2455
    %v2457 = vmul.f32 %v2334, 1.442695
    %v2458 = vpow.pop %v2457
    %v2459 = vmul.f32 %v2335, 1.442695
    %v2460 = vpow.pop %v2459
    %v2461 = vmul.f32 %v2336, 1.442695
    %v2462 = vpow.pop %v2461
    %v2463 = vmul.f32 %v2337, 1.442695
    %v2464 = vpow.pop %v2463
    %v2465 = vmul.f32 %v2338, 1.442695
    %v2466 = vpow.pop %v2465
    %v2467 = vadd.f32 %v2340, 1.0
    %v2468 = vadd.f32 %v2342, 1.0
    %v2469 = vadd.f32 %v2344, 1.0
    %v2470 = vadd.f32 %v2346, 1.0
    %v2471 = vadd.f32 %v2348, 1.0
    %v2472 = vadd.f32 %v2350, 1.0
    %v2473 = vadd.f32 %v2352, 1.0
    %v2474 = vadd.f32 %v2354, 1.0
    %v2475 = vadd.f32 %v2356, 1.0
    %v2476 = vadd.f32 %v2358, 1.0
    %v2477 = vadd.f32 %v2360, 1.0
    %v2478 = vadd.f32 %v2362, 1.0
    %v2479 = vadd.f32 %v2364, 1.0
    %v2480 = vadd.f32 %v2366, 1.0
    %v2481 = vadd.f32 %v2368, 1.0
    %v2482 = vadd.f32 %v2370, 1.0
    %v2483 = vadd.f32 %v2372, 1.0
    %v2484 = vadd.f32 %v2374, 1.0
    %v2485 = vadd.f32 %v2376, 1.0
    %v2486 = vadd.f32 %v2378, 1.0
    %v2487 = vadd.f32 %v2380, 1.0
    %v2488 = vadd.f32 %v2382, 1.0
    %v2489 = vadd.f32 %v2384, 1.0
    %v2490 = vadd.f32 %v2386, 1.0
    %v2491 = vadd.f32 %v2388, 1.0
    %v2492 = vadd.f32 %v2390, 1.0
    %v2493 = vadd.f32 %v2392, 1.0
    %v2494 = vadd.f32 %v2394, 1.0
    %v2495 = vadd.f32 %v2396, 1.0
    %v2496 = vadd.f32 %v2398, 1.0
    %v2497 = vadd.f32 %v2400, 1.0
    %v2498 = vadd.f32 %v2402, 1.0
    %v2499 = vadd.f32 %v2404, 1.0
    %v2500 = vadd.f32 %v2406, 1.0
    %v2501 = vadd.f32 %v2408, 1.0
    %v2502 = vadd.f32 %v2410, 1.0
    %v2503 = vadd.f32 %v2412, 1.0
    %v2504 = vadd.f32 %v2414, 1.0
    %v2505 = vadd.f32 %v2416, 1.0
    %v2506 = vadd.f32 %v2418, 1.0
    %v2507 = vadd.f32 %v2420, 1.0
    %v2508 = vadd.f32 %v2422, 1.0
    %v2509 = vadd.f32 %v2424, 1.0
    %v2510 = vadd.f32 %v2426, 1.0
    %v2511 = vadd.f32 %v2428, 1.0
    %v2512 = vadd.f32 %v2430, 1.0
    %v2513 = vadd.f32 %v2432, 1.0
    %v2514 = vadd.f32 %v2434, 1.0
    %v2515 = vadd.f32 %v2436, 1.0
    %v2516 = vadd.f32 %v2438, 1.0
    %v2517 = vadd.f32 %v2440, 1.0
    %v2518 = vadd.f32 %v2442, 1.0
    %v2519 = vadd.f32 %v2444, 1.0
    %v2520 = vadd.f32 %v2446, 1.0
    %v2521 = vadd.f32 %v2448, 1.0
    %v2522 = vadd.f32 %v2450, 1.0
    %v2523 = vadd.f32 %v2452, 1.0
    %v2524 = vadd.f32 %v2454, 1.0
    %v2525 = vadd.f32 %v2456, 1.0
    %v2526 = vadd.f32 %v2458, 1.0
    %v2527 = vadd.f32 %v2460, 1.0
    %v2528 = vadd.f32 %v2462, 1.0
    %v2529 = vadd.f32 %v2464, 1.0
    %v2530 = vadd.f32 %v2466, 1.0
    %v2531 = vrcp.pop %v2467
    %v2532 = vmul.f32 1.0, %v2531
    %v2533 = vrcp.pop %v2468
    %v2534 = vmul.f32 1.0, %v2533
    %v2535 = vrcp.pop %v2469
    %v2536 = vmul.f32 1.0, %v2535
    %v2537 = vrcp.pop %v2470
    %v2538 = vmul.f32 1.0, %v2537
    %v2539 = vrcp.pop %v2471
    %v2540 = vmul.f32 1.0, %v2539
    %v2541 = vrcp.pop %v2472
    %v2542 = vmul.f32 1.0, %v2541
    %v2543 = vrcp.pop %v2473
    %v2544 = vmul.f32 1.0, %v2543
    %v2545 = vrcp.pop %v2474
    %v2546 = vmul.f32 1.0, %v2545
    %v2547 = vrcp.pop %v2475
    %v2548 = vmul.f32 1.0, %v2547
    %v2549 = vrcp.pop %v2476
    %v2550 = vmul.f32 1.0, %v2549
    %v2551 = vrcp.pop %v2477
    %v2552 = vmul.f32 1.0, %v2551
    %v2553 = vrcp.pop %v2478
    %v2554 = vmul.f32 1.0, %v2553
    %v2555 = vrcp.pop %v2479
    %v2556 = vmul.f32 1.0, %v2555
    %v2557 = vrcp.pop %v2480
    %v2558 = vmul.f32 1.0, %v2557
    %v2559 = vrcp.pop %v2481
    %v2560 = vmul.f32 1.0, %v2559
    %v2561 = vrcp.pop %v2482
    %v2562 = vmul.f32 1.0, %v2561
    %v2563 = vrcp.pop %v2483
    %v2564 = vmul.f32 1.0, %v2563
    %v2565 = vrcp.pop %v2484
    %v2566 = vmul.f32 1.0, %v2565
    %v2567 = vrcp.pop %v2485
    %v2568 = vmul.f32 1.0, %v2567
    %v2569 = vrcp.pop %v2486
    %v2570 = vmul.f32 1.0, %v2569
    %v2571 = vrcp.pop %v2487
    %v2572 = vmul.f32 1.0, %v2571
    %v2573 = vrcp.pop %v2488
    %v2574 = vmul.f32 1.0, %v2573
    %v2575 = vrcp.pop %v2489
    %v2576 = vmul.f32 1.0, %v2575
    %v2577 = vrcp.pop %v2490
    %v2578 = vmul.f32 1.0, %v2577
    %v2579 = vrcp.pop %v2491
    %v2580 = vmul.f32 1.0, %v2579
    %v2581 = vrcp.pop %v2492
    %v2582 = vmul.f32 1.0, %v2581
    %v2583 = vrcp.pop %v2493
    %v2584 = vmul.f32 1.0, %v2583
    %v2585 = vrcp.pop %v2494
    %v2586 = vmul.f32 1.0, %v2585
    %v2587 = vrcp.pop %v2495
    %v2588 = vmul.f32 1.0, %v2587
    %v2589 = vrcp.pop %v2496
    %v2590 = vmul.f32 1.0, %v2589
    %v2591 = vrcp.pop %v2497
    %v2592 = vmul.f32 1.0, %v2591
    %v2593 = vrcp.pop %v2498
    %v2594 = vmul.f32 1.0, %v2593
    %v2595 = vrcp.pop %v2499
    %v2596 = vmul.f32 1.0, %v2595
    %v2597 = vrcp.pop %v2500
    %v2598 = vmul.f32 1.0, %v2597
    %v2599 = vrcp.pop %v2501
    %v2600 = vmul.f32 1.0, %v2599
    %v2601 = vrcp.pop %v2502
    %v2602 = vmul.f32 1.0, %v2601
    %v2603 = vrcp.pop %v2503
    %v2604 = vmul.f32 1.0, %v2603
    %v2605 = vrcp.pop %v2504
    %v2606 = vmul.f32 1.0, %v2605
    %v2607 = vrcp.pop %v2505
    %v2608 = vmul.f32 1.0, %v2607
    %v2609 = vrcp.pop %v2506
    %v2610 = vmul.f32 1.0, %v2609
    %v2611 = vrcp.pop %v2507
    %v2612 = vmul.f32 1.0, %v2611
    %v2613 = vrcp.pop %v2508
    %v2614 = vmul.f32 1.0, %v2613
    %v2615 = vrcp.pop %v2509
    %v2616 = vmul.f32 1.0, %v2615
    %v2617 = vrcp.pop %v2510
    %v2618 = vmul.f32 1.0, %v2617
    %v2619 = vrcp.pop %v2511
    %v2620 = vmul.f32 1.0, %v2619
    %v2621 = vrcp.pop %v2512
    %v2622 = vmul.f32 1.0, %v2621
    %v2623 = vrcp.pop %v2513
    %v2624 = vmul.f32 1.0, %v2623
    %v2625 = vrcp.pop %v2514
    %v2626 = vmul.f32 1.0, %v2625
    %v2627 = vrcp.pop %v2515
    %v2628 = vmul.f32 1.0, %v2627
    %v2629 = vrcp.pop %v2516
    %v2630 = vmul.f32 1.0, %v2629
    %v2631 = vrcp.pop %v2517
    %v2632 = vmul.f32 1.0, %v2631
    %v2633 = vrcp.pop %v2518
    %v2634 = vmul.f32 1.0, %v2633
    %v2635 = vrcp.pop %v2519
    %v2636 = vmul.f32 1.0, %v2635
    %v2637 = vrcp.pop %v2520
    %v2638 = vmul.f32 1.0, %v2637
    %v2639 = vrcp.pop %v2521
    %v2640 = vmul.f32 1.0, %v2639
    %v2641 = vrcp.pop %v2522
    %v2642 = vmul.f32 1.0, %v2641
    %v2643 = vrcp.pop %v2523
    %v2644 = vmul.f32 1.0, %v2643
    %v2645 = vrcp.pop %v2524
    %v2646 = vmul.f32 1.0, %v2645
    %v2647 = vrcp.pop %v2525
    %v2648 = vmul.f32 1.0, %v2647
    %v2649 = vrcp.pop %v2526
    %v2650 = vmul.f32 1.0, %v2649
    %v2651 = vrcp.pop %v2527
    %v2652 = vmul.f32 1.0, %v2651
    %v2653 = vrcp.pop %v2528
    %v2654 = vmul.f32 1.0, %v2653
    %v2655 = vrcp.pop %v2529
    %v2656 = vmul.f32 1.0, %v2655
    %v2657 = vrcp.pop %v2530
    %v2658 = vmul.f32 1.0, %v2657
    %v2659 = vmul.f32 %v1971, %v2532
    %v2660 = vmul.f32 %v1973, %v2534
    %v2661 = vmul.f32 %v2197, %v2536
    %v2662 = vmul.f32 %v2199, %v2538
    %v2663 = vmul.f32 %v1975, %v2540
    %v2664 = vmul.f32 %v1977, %v2542
    %v2665 = vmul.f32 %v2201, %v2544
    %v2666 = vmul.f32 %v2203, %v2546
    %v2667 = vmul.f32 %v1981, %v2548
    %v2668 = vmul.f32 %v1983, %v2550
    %v2669 = vmul.f32 %v2207, %v2552
    %v2670 = vmul.f32 %v2209, %v2554
    %v2671 = vmul.f32 %v1985, %v2556
    %v2672 = vmul.f32 %v1987, %v2558
    %v2673 = vmul.f32 %v2211, %v2560
    %v2674 = vmul.f32 %v2213, %v2562
    %v2675 = vmul.f32 %v1991, %v2564
    %v2676 = vmul.f32 %v1993, %v2566
    %v2677 = vmul.f32 %v2217, %v2568
    %v2678 = vmul.f32 %v2219, %v2570
    %v2679 = vmul.f32 %v1995, %v2572
    %v2680 = vmul.f32 %v1997, %v2574
    %v2681 = vmul.f32 %v2221, %v2576
    %v2682 = vmul.f32 %v2223, %v2578
    %v2683 = vmul.f32 %v2001, %v2580
    %v2684 = vmul.f32 %v2003, %v2582
    %v2685 = vmul.f32 %v2227, %v2584
    %v2686 = vmul.f32 %v2229, %v2586
    %v2687 = vmul.f32 %v2005, %v2588
    %v2688 = vmul.f32 %v2007, %v2590
    %v2689 = vmul.f32 %v2231, %v2592
    %v2690 = vmul.f32 %v2233, %v2594
    %v2691 = vmul.f32 %v2011, %v2596
    %v2692 = vmul.f32 %v2013, %v2598
    %v2693 = vmul.f32 %v2237, %v2600
    %v2694 = vmul.f32 %v2239, %v2602
    %v2695 = vmul.f32 %v2015, %v2604
    %v2696 = vmul.f32 %v2017, %v2606
    %v2697 = vmul.f32 %v2241, %v2608
    %v2698 = vmul.f32 %v2243, %v2610
    %v2699 = vmul.f32 %v2021, %v2612
    %v2700 = vmul.f32 %v2023, %v2614
    %v2701 = vmul.f32 %v2247, %v2616
    %v2702 = vmul.f32 %v2249, %v2618
    %v2703 = vmul.f32 %v2025, %v2620
    %v2704 = vmul.f32 %v2027, %v2622
    %v2705 = vmul.f32 %v2251, %v2624
    %v2706 = vmul.f32 %v2253, %v2626
    %v2707 = vmul.f32 %v2031, %v2628
    %v2708 = vmul.f32 %v2033, %v2630
    %v2709 = vmul.f32 %v2257, %v2632
    %v2710 = vmul.f32 %v2259, %v2634
    %v2711 = vmul.f32 %v2035, %v2636
    %v2712 = vmul.f32 %v2037, %v2638
    %v2713 = vmul.f32 %v2261, %v2640
    %v2714 = vmul.f32 %v2263, %v2642
    %v2715 = vmul.f32 %v2041, %v2644
    %v2716 = vmul.f32 %v2043, %v2646
    %v2717 = vmul.f32 %v2267, %v2648
    %v2718 = vmul.f32 %v2269, %v2650
    %v2719 = vmul.f32 %v2045, %v2652
    %v2720 = vmul.f32 %v2047, %v2654
    %v2721 = vmul.f32 %v2271, %v2656
    %v2722 = vmul.f32 %v2273, %v2658
    %v2723 = vpack.c.bf16 %v2663, %v2659
    %v2724 = vpack.c.bf16 %v2664, %v2660
    %v2725 = vpack.c.bf16 %v2665, %v2661
    %v2726 = vpack.c.bf16 %v2666, %v2662
    %v2727 = vpack.c.bf16 %v2671, %v2667
    %v2728 = vpack.c.bf16 %v2672, %v2668
    %v2729 = vpack.c.bf16 %v2673, %v2669
    %v2730 = vpack.c.bf16 %v2674, %v2670
    %v2731 = vpack.c.bf16 %v2679, %v2675
    %v2732 = vpack.c.bf16 %v2680, %v2676
    %v2733 = vpack.c.bf16 %v2681, %v2677
    %v2734 = vpack.c.bf16 %v2682, %v2678
    %v2735 = vpack.c.bf16 %v2687, %v2683
    %v2736 = vpack.c.bf16 %v2688, %v2684
    %v2737 = vpack.c.bf16 %v2689, %v2685
    %v2738 = vpack.c.bf16 %v2690, %v2686
    %v2739 = vpack.c.bf16 %v2695, %v2691
    %v2740 = vpack.c.bf16 %v2696, %v2692
    %v2741 = vpack.c.bf16 %v2697, %v2693
    %v2742 = vpack.c.bf16 %v2698, %v2694
    %v2743 = vpack.c.bf16 %v2703, %v2699
    %v2744 = vpack.c.bf16 %v2704, %v2700
    %v2745 = vpack.c.bf16 %v2705, %v2701
    %v2746 = vpack.c.bf16 %v2706, %v2702
    %v2747 = vpack.c.bf16 %v2711, %v2707
    %v2748 = vpack.c.bf16 %v2712, %v2708
    %v2749 = vpack.c.bf16 %v2713, %v2709
    %v2750 = vpack.c.bf16 %v2714, %v2710
    %v2751 = vpack.c.bf16 %v2719, %v2715
    %v2752 = vpack.c.bf16 %v2720, %v2716
    %v2753 = vpack.c.bf16 %v2721, %v2717
    %v2754 = vpack.c.bf16 %v2722, %v2718
    %v2755 = vld [vmem:[%s5] sm:$0xff]
    %v2756 = vld [vmem:[%s5 + $0x8] sm:$0xff]
    %v2757 = vld [vmem:[%s5 + $0x10] sm:$0xff]
    %v2758 = vld [vmem:[%s5 + $0x18] sm:$0xff]
    %v2759 = vld [vmem:[%s5 + $0x20] sm:$0xff]
    %v2760 = vld [vmem:[%s5 + $0x28] sm:$0xff]
    %v2761 = vld [vmem:[%s5 + $0x30] sm:$0xff]
    %v2762 = vld [vmem:[%s5 + $0x38] sm:$0xff]
    %v2763 = vld [vmem:[%s5 + $0x40] sm:$0xff]
    %v2764 = vld [vmem:[%s5 + $0x48] sm:$0xff]
    %v2765 = vld [vmem:[%s5 + $0x50] sm:$0xff]
    %v2766 = vld [vmem:[%s5 + $0x58] sm:$0xff]
    %v2767 = vld [vmem:[%s5 + $0x60] sm:$0xff]
    %v2768 = vld [vmem:[%s5 + $0x68] sm:$0xff]
    %v2769 = vld [vmem:[%s5 + $0x70] sm:$0xff]
    %v2770 = vld [vmem:[%s5 + $0x78] sm:$0xff]
    %v2771 = vld [vmem:[%s5 + $0x80] sm:$0xff]
    %v2772 = vld [vmem:[%s5 + $0x88] sm:$0xff]
    %v2773 = vld [vmem:[%s5 + $0x90] sm:$0xff]
    %v2774 = vld [vmem:[%s5 + $0x98] sm:$0xff]
    %v2775 = vld [vmem:[%s5 + $0xa0] sm:$0xff]
    %v2776 = vld [vmem:[%s5 + $0xa8] sm:$0xff]
    %v2777 = vld [vmem:[%s5 + $0xb0] sm:$0xff]
    %v2778 = vld [vmem:[%s5 + $0xb8] sm:$0xff]
    %v2779 = vld [vmem:[%s5 + $0xc0] sm:$0xff]
    %v2780 = vld [vmem:[%s5 + $0xc8] sm:$0xff]
    %v2781 = vld [vmem:[%s5 + $0xd0] sm:$0xff]
    %v2782 = vld [vmem:[%s5 + $0xd8] sm:$0xff]
    %v2783 = vld [vmem:[%s5 + $0xe0] sm:$0xff]
    %v2784 = vld [vmem:[%s5 + $0xe8] sm:$0xff]
    %v2785 = vld [vmem:[%s5 + $0xf0] sm:$0xff]
    %v2786 = vld [vmem:[%s5 + $0xf8] sm:$0xff]
    %v2787 = vld [vmem:[%s5 + $0x100] sm:$0xff]
    %v2788 = vld [vmem:[%s5 + $0x108] sm:$0xff]
    %v2789 = vld [vmem:[%s5 + $0x110] sm:$0xff]
    %v2790 = vld [vmem:[%s5 + $0x118] sm:$0xff]
    %v2791 = vld [vmem:[%s5 + $0x120] sm:$0xff]
    %v2792 = vld [vmem:[%s5 + $0x128] sm:$0xff]
    %v2793 = vld [vmem:[%s5 + $0x130] sm:$0xff]
    %v2794 = vld [vmem:[%s5 + $0x138] sm:$0xff]
    %v2795 = vld [vmem:[%s5 + $0x140] sm:$0xff]
    %v2796 = vld [vmem:[%s5 + $0x148] sm:$0xff]
    %v2797 = vld [vmem:[%s5 + $0x150] sm:$0xff]
    %v2798 = vld [vmem:[%s5 + $0x158] sm:$0xff]
    %v2799 = vld [vmem:[%s5 + $0x160] sm:$0xff]
    %v2800 = vld [vmem:[%s5 + $0x168] sm:$0xff]
    %v2801 = vld [vmem:[%s5 + $0x170] sm:$0xff]
    %v2802 = vld [vmem:[%s5 + $0x178] sm:$0xff]
    %v2803 = vld [vmem:[%s5 + $0x180] sm:$0xff]
    %v2804 = vld [vmem:[%s5 + $0x188] sm:$0xff]
    %v2805 = vld [vmem:[%s5 + $0x190] sm:$0xff]
    %v2806 = vld [vmem:[%s5 + $0x198] sm:$0xff]
    %v2807 = vld [vmem:[%s5 + $0x1a0] sm:$0xff]
    %v2808 = vld [vmem:[%s5 + $0x1a8] sm:$0xff]
    %v2809 = vld [vmem:[%s5 + $0x1b0] sm:$0xff]
    %v2810 = vld [vmem:[%s5 + $0x1b8] sm:$0xff]
    %v2811 = vld [vmem:[%s5 + $0x1c0] sm:$0xff]
    %v2812 = vld [vmem:[%s5 + $0x1c8] sm:$0xff]
    %v2813 = vld [vmem:[%s5 + $0x1d0] sm:$0xff]
    %v2814 = vld [vmem:[%s5 + $0x1d8] sm:$0xff]
    %v2815 = vld [vmem:[%s5 + $0x1e0] sm:$0xff]
    %v2816 = vld [vmem:[%s5 + $0x1e8] sm:$0xff]
    %v2817 = vld [vmem:[%s5 + $0x1f0] sm:$0xff]
    %v2818 = vld [vmem:[%s5 + $0x1f8] sm:$0xff]
    %v2819 = vld [vmem:[%s5 + $0x200] sm:$0xff]
    %v2820 = vld [vmem:[%s5 + $0x208] sm:$0xff]
    %v2821 = vld [vmem:[%s5 + $0x210] sm:$0xff]
    %v2822 = vld [vmem:[%s5 + $0x218] sm:$0xff]
    %v2823 = vld [vmem:[%s5 + $0x220] sm:$0xff]
    %v2824 = vld [vmem:[%s5 + $0x228] sm:$0xff]
    %v2825 = vld [vmem:[%s5 + $0x230] sm:$0xff]
    %v2826 = vld [vmem:[%s5 + $0x238] sm:$0xff]
    %v2827 = vld [vmem:[%s5 + $0x240] sm:$0xff]
    %v2828 = vld [vmem:[%s5 + $0x248] sm:$0xff]
    %v2829 = vld [vmem:[%s5 + $0x250] sm:$0xff]
    %v2830 = vld [vmem:[%s5 + $0x258] sm:$0xff]
    %v2831 = vld [vmem:[%s5 + $0x260] sm:$0xff]
    %v2832 = vld [vmem:[%s5 + $0x268] sm:$0xff]
    %v2833 = vld [vmem:[%s5 + $0x270] sm:$0xff]
    %v2834 = vld [vmem:[%s5 + $0x278] sm:$0xff]
    %v2835 = vld [vmem:[%s5 + $0x280] sm:$0xff]
    %v2836 = vld [vmem:[%s5 + $0x288] sm:$0xff]
    %v2837 = vld [vmem:[%s5 + $0x290] sm:$0xff]
    %v2838 = vld [vmem:[%s5 + $0x298] sm:$0xff]
    %v2839 = vld [vmem:[%s5 + $0x2a0] sm:$0xff]
    %v2840 = vld [vmem:[%s5 + $0x2a8] sm:$0xff]
    %v2841 = vld [vmem:[%s5 + $0x2b0] sm:$0xff]
    %v2842 = vld [vmem:[%s5 + $0x2b8] sm:$0xff]
    %v2843 = vld [vmem:[%s5 + $0x2c0] sm:$0xff]
    %v2844 = vld [vmem:[%s5 + $0x2c8] sm:$0xff]
    %v2845 = vld [vmem:[%s5 + $0x2d0] sm:$0xff]
    %v2846 = vld [vmem:[%s5 + $0x2d8] sm:$0xff]
    %v2847 = vld [vmem:[%s5 + $0x2e0] sm:$0xff]
    %v2848 = vld [vmem:[%s5 + $0x2e8] sm:$0xff]
    %v2849 = vld [vmem:[%s5 + $0x2f0] sm:$0xff]
    %v2850 = vld [vmem:[%s5 + $0x2f8] sm:$0xff]
    %v2851 = vld [vmem:[%s5 + $0x300] sm:$0xff]
    %v2852 = vld [vmem:[%s5 + $0x308] sm:$0xff]
    %v2853 = vld [vmem:[%s5 + $0x310] sm:$0xff]
    %v2854 = vld [vmem:[%s5 + $0x318] sm:$0xff]
    %v2855 = vld [vmem:[%s5 + $0x320] sm:$0xff]
    %v2856 = vld [vmem:[%s5 + $0x328] sm:$0xff]
    %v2857 = vld [vmem:[%s5 + $0x330] sm:$0xff]
    %v2858 = vld [vmem:[%s5 + $0x338] sm:$0xff]
    %v2859 = vld [vmem:[%s5 + $0x340] sm:$0xff]
    %v2860 = vld [vmem:[%s5 + $0x348] sm:$0xff]
    %v2861 = vld [vmem:[%s5 + $0x350] sm:$0xff]
    %v2862 = vld [vmem:[%s5 + $0x358] sm:$0xff]
    %v2863 = vld [vmem:[%s5 + $0x360] sm:$0xff]
    %v2864 = vld [vmem:[%s5 + $0x368] sm:$0xff]
    %v2865 = vld [vmem:[%s5 + $0x370] sm:$0xff]
    %v2866 = vld [vmem:[%s5 + $0x378] sm:$0xff]
    %v2867 = vld [vmem:[%s5 + $0x380] sm:$0xff]
    %v2868 = vld [vmem:[%s5 + $0x388] sm:$0xff]
    %v2869 = vld [vmem:[%s5 + $0x390] sm:$0xff]
    %v2870 = vld [vmem:[%s5 + $0x398] sm:$0xff]
    %v2871 = vld [vmem:[%s5 + $0x3a0] sm:$0xff]
    %v2872 = vld [vmem:[%s5 + $0x3a8] sm:$0xff]
    %v2873 = vld [vmem:[%s5 + $0x3b0] sm:$0xff]
    %v2874 = vld [vmem:[%s5 + $0x3b8] sm:$0xff]
    %v2875 = vld [vmem:[%s5 + $0x3c0] sm:$0xff]
    %v2876 = vld [vmem:[%s5 + $0x3c8] sm:$0xff]
    %v2877 = vld [vmem:[%s5 + $0x3d0] sm:$0xff]
    %v2878 = vld [vmem:[%s5 + $0x3d8] sm:$0xff]
    %v2879 = vld [vmem:[%s5 + $0x3e0] sm:$0xff]
    %v2880 = vld [vmem:[%s5 + $0x3e8] sm:$0xff]
    %v2881 = vld [vmem:[%s5 + $0x3f0] sm:$0xff]
    %v2882 = vld [vmem:[%s5 + $0x3f8] sm:$0xff]
    %v2883 = vld [vmem:[%s6] sm:$0xf]
    %v2885 = vlaneseq
    %v2886 = vshrl.u32 %v2885, 7
    %v2887 = vsub.s32 0, %v2886
    %v2888 = vrot.slane %v2883, %v2887
    %v2889 = vlaneseq
    %v2890 = vshrl.u32 %v2889, 7
    %v2891 = vsub.s32 1, %v2890
    %v2892 = vrot.slane %v2883, %v2891
    %v2893 = vlaneseq
    %v2894 = vshrl.u32 %v2893, 7
    %v2895 = vsub.s32 2, %v2894
    %v2896 = vrot.slane %v2883, %v2895
    %v2897 = vlaneseq
    %v2898 = vshrl.u32 %v2897, 7
    %v2899 = vsub.s32 3, %v2898
    %v2900 = vrot.slane %v2883, %v2899
    %v3033 = vunpack.c.l.b16 %v2755
    %v3034 = vunpack.c.h.b16 %v2755
    %v3035 = vunpack.c.l.b16 %v2756
    %v3036 = vunpack.c.h.b16 %v2756
    %v3037 = vunpack.c.l.b16 %v2757
    %v3038 = vunpack.c.h.b16 %v2757
    %v3039 = vunpack.c.l.b16 %v2758
    %v3040 = vunpack.c.h.b16 %v2758
    %v3041 = vunpack.c.l.b16 %v2759
    %v3042 = vunpack.c.h.b16 %v2759
    %v3043 = vunpack.c.l.b16 %v2760
    %v3044 = vunpack.c.h.b16 %v2760
    %v3045 = vunpack.c.l.b16 %v2761
    %v3046 = vunpack.c.h.b16 %v2761
    %v3047 = vunpack.c.l.b16 %v2762
    %v3048 = vunpack.c.h.b16 %v2762
    %v3049 = vunpack.c.l.b16 %v2763
    %v3050 = vunpack.c.h.b16 %v2763
    %v3051 = vunpack.c.l.b16 %v2764
    %v3052 = vunpack.c.h.b16 %v2764
    %v3053 = vunpack.c.l.b16 %v2765
    %v3054 = vunpack.c.h.b16 %v2765
    %v3055 = vunpack.c.l.b16 %v2766
    %v3056 = vunpack.c.h.b16 %v2766
    %v3057 = vunpack.c.l.b16 %v2767
    %v3058 = vunpack.c.h.b16 %v2767
    %v3059 = vunpack.c.l.b16 %v2768
    %v3060 = vunpack.c.h.b16 %v2768
    %v3061 = vunpack.c.l.b16 %v2769
    %v3062 = vunpack.c.h.b16 %v2769
    %v3063 = vunpack.c.l.b16 %v2770
    %v3064 = vunpack.c.h.b16 %v2770
    %v3065 = vunpack.c.l.b16 %v2771
    %v3066 = vunpack.c.h.b16 %v2771
    %v3067 = vunpack.c.l.b16 %v2772
    %v3068 = vunpack.c.h.b16 %v2772
    %v3069 = vunpack.c.l.b16 %v2773
    %v3070 = vunpack.c.h.b16 %v2773
    %v3071 = vunpack.c.l.b16 %v2774
    %v3072 = vunpack.c.h.b16 %v2774
    %v3073 = vunpack.c.l.b16 %v2775
    %v3074 = vunpack.c.h.b16 %v2775
    %v3075 = vunpack.c.l.b16 %v2776
    %v3076 = vunpack.c.h.b16 %v2776
    %v3077 = vunpack.c.l.b16 %v2777
    %v3078 = vunpack.c.h.b16 %v2777
    %v3079 = vunpack.c.l.b16 %v2778
    %v3080 = vunpack.c.h.b16 %v2778
    %v3081 = vunpack.c.l.b16 %v2779
    %v3082 = vunpack.c.h.b16 %v2779
    %v3083 = vunpack.c.l.b16 %v2780
    %v3084 = vunpack.c.h.b16 %v2780
    %v3085 = vunpack.c.l.b16 %v2781
    %v3086 = vunpack.c.h.b16 %v2781
    %v3087 = vunpack.c.l.b16 %v2782
    %v3088 = vunpack.c.h.b16 %v2782
    %v3089 = vunpack.c.l.b16 %v2783
    %v3090 = vunpack.c.h.b16 %v2783
    %v3091 = vunpack.c.l.b16 %v2784
    %v3092 = vunpack.c.h.b16 %v2784
    %v3093 = vunpack.c.l.b16 %v2785
    %v3094 = vunpack.c.h.b16 %v2785
    %v3095 = vunpack.c.l.b16 %v2786
    %v3096 = vunpack.c.h.b16 %v2786
    %v3097 = vunpack.c.l.b16 %v2787
    %v3098 = vunpack.c.h.b16 %v2787
    %v3099 = vunpack.c.l.b16 %v2788
    %v3100 = vunpack.c.h.b16 %v2788
    %v3101 = vunpack.c.l.b16 %v2789
    %v3102 = vunpack.c.h.b16 %v2789
    %v3103 = vunpack.c.l.b16 %v2790
    %v3104 = vunpack.c.h.b16 %v2790
    %v3105 = vunpack.c.l.b16 %v2791
    %v3106 = vunpack.c.h.b16 %v2791
    %v3107 = vunpack.c.l.b16 %v2792
    %v3108 = vunpack.c.h.b16 %v2792
    %v3109 = vunpack.c.l.b16 %v2793
    %v3110 = vunpack.c.h.b16 %v2793
    %v3111 = vunpack.c.l.b16 %v2794
    %v3112 = vunpack.c.h.b16 %v2794
    %v3113 = vunpack.c.l.b16 %v2795
    %v3114 = vunpack.c.h.b16 %v2795
    %v3115 = vunpack.c.l.b16 %v2796
    %v3116 = vunpack.c.h.b16 %v2796
    %v3117 = vunpack.c.l.b16 %v2797
    %v3118 = vunpack.c.h.b16 %v2797
    %v3119 = vunpack.c.l.b16 %v2798
    %v3120 = vunpack.c.h.b16 %v2798
    %v3121 = vunpack.c.l.b16 %v2799
    %v3122 = vunpack.c.h.b16 %v2799
    %v3123 = vunpack.c.l.b16 %v2800
    %v3124 = vunpack.c.h.b16 %v2800
    %v3125 = vunpack.c.l.b16 %v2801
    %v3126 = vunpack.c.h.b16 %v2801
    %v3127 = vunpack.c.l.b16 %v2802
    %v3128 = vunpack.c.h.b16 %v2802
    %v3129 = vunpack.c.l.b16 %v2803
    %v3130 = vunpack.c.h.b16 %v2803
    %v3131 = vunpack.c.l.b16 %v2804
    %v3132 = vunpack.c.h.b16 %v2804
    %v3133 = vunpack.c.l.b16 %v2805
    %v3134 = vunpack.c.h.b16 %v2805
    %v3135 = vunpack.c.l.b16 %v2806
    %v3136 = vunpack.c.h.b16 %v2806
    %v3137 = vunpack.c.l.b16 %v2807
    %v3138 = vunpack.c.h.b16 %v2807
    %v3139 = vunpack.c.l.b16 %v2808
    %v3140 = vunpack.c.h.b16 %v2808
    %v3141 = vunpack.c.l.b16 %v2809
    %v3142 = vunpack.c.h.b16 %v2809
    %v3143 = vunpack.c.l.b16 %v2810
    %v3144 = vunpack.c.h.b16 %v2810
    %v3145 = vunpack.c.l.b16 %v2811
    %v3146 = vunpack.c.h.b16 %v2811
    %v3147 = vunpack.c.l.b16 %v2812
    %v3148 = vunpack.c.h.b16 %v2812
    %v3149 = vunpack.c.l.b16 %v2813
    %v3150 = vunpack.c.h.b16 %v2813
    %v3151 = vunpack.c.l.b16 %v2814
    %v3152 = vunpack.c.h.b16 %v2814
    %v3153 = vunpack.c.l.b16 %v2815
    %v3154 = vunpack.c.h.b16 %v2815
    %v3155 = vunpack.c.l.b16 %v2816
    %v3156 = vunpack.c.h.b16 %v2816
    %v3157 = vunpack.c.l.b16 %v2817
    %v3158 = vunpack.c.h.b16 %v2817
    %v3159 = vunpack.c.l.b16 %v2818
    %v3160 = vunpack.c.h.b16 %v2818
    %v3161 = vunpack.c.l.b16 %v2819
    %v3162 = vunpack.c.h.b16 %v2819
    %v3163 = vunpack.c.l.b16 %v2820
    %v3164 = vunpack.c.h.b16 %v2820
    %v3165 = vunpack.c.l.b16 %v2821
    %v3166 = vunpack.c.h.b16 %v2821
    %v3167 = vunpack.c.l.b16 %v2822
    %v3168 = vunpack.c.h.b16 %v2822
    %v3169 = vunpack.c.l.b16 %v2823
    %v3170 = vunpack.c.h.b16 %v2823
    %v3171 = vunpack.c.l.b16 %v2824
    %v3172 = vunpack.c.h.b16 %v2824
    %v3173 = vunpack.c.l.b16 %v2825
    %v3174 = vunpack.c.h.b16 %v2825
    %v3175 = vunpack.c.l.b16 %v2826
    %v3176 = vunpack.c.h.b16 %v2826
    %v3177 = vunpack.c.l.b16 %v2827
    %v3178 = vunpack.c.h.b16 %v2827
    %v3179 = vunpack.c.l.b16 %v2828
    %v3180 = vunpack.c.h.b16 %v2828
    %v3181 = vunpack.c.l.b16 %v2829
    %v3182 = vunpack.c.h.b16 %v2829
    %v3183 = vunpack.c.l.b16 %v2830
    %v3184 = vunpack.c.h.b16 %v2830
    %v3185 = vunpack.c.l.b16 %v2831
    %v3186 = vunpack.c.h.b16 %v2831
    %v3187 = vunpack.c.l.b16 %v2832
    %v3188 = vunpack.c.h.b16 %v2832
    %v3189 = vunpack.c.l.b16 %v2833
    %v3190 = vunpack.c.h.b16 %v2833
    %v3191 = vunpack.c.l.b16 %v2834
    %v3192 = vunpack.c.h.b16 %v2834
    %v3193 = vunpack.c.l.b16 %v2835
    %v3194 = vunpack.c.h.b16 %v2835
    %v3195 = vunpack.c.l.b16 %v2836
    %v3196 = vunpack.c.h.b16 %v2836
    %v3197 = vunpack.c.l.b16 %v2837
    %v3198 = vunpack.c.h.b16 %v2837
    %v3199 = vunpack.c.l.b16 %v2838
    %v3200 = vunpack.c.h.b16 %v2838
    %v3201 = vunpack.c.l.b16 %v2839
    %v3202 = vunpack.c.h.b16 %v2839
    %v3203 = vunpack.c.l.b16 %v2840
    %v3204 = vunpack.c.h.b16 %v2840
    %v3205 = vunpack.c.l.b16 %v2841
    %v3206 = vunpack.c.h.b16 %v2841
    %v3207 = vunpack.c.l.b16 %v2842
    %v3208 = vunpack.c.h.b16 %v2842
    %v3209 = vunpack.c.l.b16 %v2843
    %v3210 = vunpack.c.h.b16 %v2843
    %v3211 = vunpack.c.l.b16 %v2844
    %v3212 = vunpack.c.h.b16 %v2844
    %v3213 = vunpack.c.l.b16 %v2845
    %v3214 = vunpack.c.h.b16 %v2845
    %v3215 = vunpack.c.l.b16 %v2846
    %v3216 = vunpack.c.h.b16 %v2846
    %v3217 = vunpack.c.l.b16 %v2847
    %v3218 = vunpack.c.h.b16 %v2847
    %v3219 = vunpack.c.l.b16 %v2848
    %v3220 = vunpack.c.h.b16 %v2848
    %v3221 = vunpack.c.l.b16 %v2849
    %v3222 = vunpack.c.h.b16 %v2849
    %v3223 = vunpack.c.l.b16 %v2850
    %v3224 = vunpack.c.h.b16 %v2850
    %v3225 = vunpack.c.l.b16 %v2851
    %v3226 = vunpack.c.h.b16 %v2851
    %v3227 = vunpack.c.l.b16 %v2852
    %v3228 = vunpack.c.h.b16 %v2852
    %v3229 = vunpack.c.l.b16 %v2853
    %v3230 = vunpack.c.h.b16 %v2853
    %v3231 = vunpack.c.l.b16 %v2854
    %v3232 = vunpack.c.h.b16 %v2854
    %v3233 = vunpack.c.l.b16 %v2855
    %v3234 = vunpack.c.h.b16 %v2855
    %v3235 = vunpack.c.l.b16 %v2856
    %v3236 = vunpack.c.h.b16 %v2856
    %v3237 = vunpack.c.l.b16 %v2857
    %v3238 = vunpack.c.h.b16 %v2857
    %v3239 = vunpack.c.l.b16 %v2858
    %v3240 = vunpack.c.h.b16 %v2858
    %v3241 = vunpack.c.l.b16 %v2859
    %v3242 = vunpack.c.h.b16 %v2859
    %v3243 = vunpack.c.l.b16 %v2860
    %v3244 = vunpack.c.h.b16 %v2860
    %v3245 = vunpack.c.l.b16 %v2861
    %v3246 = vunpack.c.h.b16 %v2861
    %v3247 = vunpack.c.l.b16 %v2862
    %v3248 = vunpack.c.h.b16 %v2862
    %v3249 = vunpack.c.l.b16 %v2863
    %v3250 = vunpack.c.h.b16 %v2863
    %v3251 = vunpack.c.l.b16 %v2864
    %v3252 = vunpack.c.h.b16 %v2864
    %v3253 = vunpack.c.l.b16 %v2865
    %v3254 = vunpack.c.h.b16 %v2865
    %v3255 = vunpack.c.l.b16 %v2866
    %v3256 = vunpack.c.h.b16 %v2866
    %v3257 = vunpack.c.l.b16 %v2867
    %v3258 = vunpack.c.h.b16 %v2867
    %v3259 = vunpack.c.l.b16 %v2868
    %v3260 = vunpack.c.h.b16 %v2868
    %v3261 = vunpack.c.l.b16 %v2869
    %v3262 = vunpack.c.h.b16 %v2869
    %v3263 = vunpack.c.l.b16 %v2870
    %v3264 = vunpack.c.h.b16 %v2870
    %v3265 = vunpack.c.l.b16 %v2871
    %v3266 = vunpack.c.h.b16 %v2871
    %v3267 = vunpack.c.l.b16 %v2872
    %v3268 = vunpack.c.h.b16 %v2872
    %v3269 = vunpack.c.l.b16 %v2873
    %v3270 = vunpack.c.h.b16 %v2873
    %v3271 = vunpack.c.l.b16 %v2874
    %v3272 = vunpack.c.h.b16 %v2874
    %v3273 = vunpack.c.l.b16 %v2875
    %v3274 = vunpack.c.h.b16 %v2875
    %v3275 = vunpack.c.l.b16 %v2876
    %v3276 = vunpack.c.h.b16 %v2876
    %v3277 = vunpack.c.l.b16 %v2877
    %v3278 = vunpack.c.h.b16 %v2877
    %v3279 = vunpack.c.l.b16 %v2878
    %v3280 = vunpack.c.h.b16 %v2878
    %v3281 = vunpack.c.l.b16 %v2879
    %v3282 = vunpack.c.h.b16 %v2879
    %v3283 = vunpack.c.l.b16 %v2880
    %v3284 = vunpack.c.h.b16 %v2880
    %v3285 = vunpack.c.l.b16 %v2881
    %v3286 = vunpack.c.h.b16 %v2881
    %v3287 = vunpack.c.l.b16 %v2882
    %v3288 = vunpack.c.h.b16 %v2882
    %v3289 = vpack.c.b16 %v3037, %v3033
    %v3290 = vpack.c.b16 %v3038, %v3034
    %v3291 = vpack.c.b16 %v3039, %v3035
    %v3292 = vpack.c.b16 %v3040, %v3036
    %v3293 = vpack.c.b16 %v3045, %v3041
    %v3294 = vpack.c.b16 %v3046, %v3042
    %v3295 = vpack.c.b16 %v3047, %v3043
    %v3296 = vpack.c.b16 %v3048, %v3044
    %v3297 = vpack.c.b16 %v3053, %v3049
    %v3298 = vpack.c.b16 %v3054, %v3050
    %v3299 = vpack.c.b16 %v3055, %v3051
    %v3300 = vpack.c.b16 %v3056, %v3052
    %v3301 = vpack.c.b16 %v3061, %v3057
    %v3302 = vpack.c.b16 %v3062, %v3058
    %v3303 = vpack.c.b16 %v3063, %v3059
    %v3304 = vpack.c.b16 %v3064, %v3060
    %v3305 = vpack.c.b16 %v3069, %v3065
    %v3306 = vpack.c.b16 %v3070, %v3066
    %v3307 = vpack.c.b16 %v3071, %v3067
    %v3308 = vpack.c.b16 %v3072, %v3068
    %v3309 = vpack.c.b16 %v3077, %v3073
    %v3310 = vpack.c.b16 %v3078, %v3074
    %v3311 = vpack.c.b16 %v3079, %v3075
    %v3312 = vpack.c.b16 %v3080, %v3076
    %v3313 = vpack.c.b16 %v3085, %v3081
    %v3314 = vpack.c.b16 %v3086, %v3082
    %v3315 = vpack.c.b16 %v3087, %v3083
    %v3316 = vpack.c.b16 %v3088, %v3084
    %v3317 = vpack.c.b16 %v3093, %v3089
    %v3318 = vpack.c.b16 %v3094, %v3090
    %v3319 = vpack.c.b16 %v3095, %v3091
    %v3320 = vpack.c.b16 %v3096, %v3092
    %v3321 = vpack.c.b16 %v3101, %v3097
    %v3322 = vpack.c.b16 %v3102, %v3098
    %v3323 = vpack.c.b16 %v3103, %v3099
    %v3324 = vpack.c.b16 %v3104, %v3100
    %v3325 = vpack.c.b16 %v3109, %v3105
    %v3326 = vpack.c.b16 %v3110, %v3106
    %v3327 = vpack.c.b16 %v3111, %v3107
    %v3328 = vpack.c.b16 %v3112, %v3108
    %v3329 = vpack.c.b16 %v3117, %v3113
    %v3330 = vpack.c.b16 %v3118, %v3114
    %v3331 = vpack.c.b16 %v3119, %v3115
    %v3332 = vpack.c.b16 %v3120, %v3116
    %v3333 = vpack.c.b16 %v3125, %v3121
    %v3334 = vpack.c.b16 %v3126, %v3122
    %v3335 = vpack.c.b16 %v3127, %v3123
    %v3336 = vpack.c.b16 %v3128, %v3124
    %v3337 = vpack.c.b16 %v3133, %v3129
    %v3338 = vpack.c.b16 %v3134, %v3130
    %v3339 = vpack.c.b16 %v3135, %v3131
    %v3340 = vpack.c.b16 %v3136, %v3132
    %v3341 = vpack.c.b16 %v3141, %v3137
    %v3342 = vpack.c.b16 %v3142, %v3138
    %v3343 = vpack.c.b16 %v3143, %v3139
    %v3344 = vpack.c.b16 %v3144, %v3140
    %v3345 = vpack.c.b16 %v3149, %v3145
    %v3346 = vpack.c.b16 %v3150, %v3146
    %v3347 = vpack.c.b16 %v3151, %v3147
    %v3348 = vpack.c.b16 %v3152, %v3148
    %v3349 = vpack.c.b16 %v3157, %v3153
    %v3350 = vpack.c.b16 %v3158, %v3154
    %v3351 = vpack.c.b16 %v3159, %v3155
    %v3352 = vpack.c.b16 %v3160, %v3156
    %v3353 = vpack.c.b16 %v3165, %v3161
    %v3354 = vpack.c.b16 %v3166, %v3162
    %v3355 = vpack.c.b16 %v3167, %v3163
    %v3356 = vpack.c.b16 %v3168, %v3164
    %v3357 = vpack.c.b16 %v3173, %v3169
    %v3358 = vpack.c.b16 %v3174, %v3170
    %v3359 = vpack.c.b16 %v3175, %v3171
    %v3360 = vpack.c.b16 %v3176, %v3172
    %v3361 = vpack.c.b16 %v3181, %v3177
    %v3362 = vpack.c.b16 %v3182, %v3178
    %v3363 = vpack.c.b16 %v3183, %v3179
    %v3364 = vpack.c.b16 %v3184, %v3180
    %v3365 = vpack.c.b16 %v3189, %v3185
    %v3366 = vpack.c.b16 %v3190, %v3186
    %v3367 = vpack.c.b16 %v3191, %v3187
    %v3368 = vpack.c.b16 %v3192, %v3188
    %v3369 = vpack.c.b16 %v3197, %v3193
    %v3370 = vpack.c.b16 %v3198, %v3194
    %v3371 = vpack.c.b16 %v3199, %v3195
    %v3372 = vpack.c.b16 %v3200, %v3196
    %v3373 = vpack.c.b16 %v3205, %v3201
    %v3374 = vpack.c.b16 %v3206, %v3202
    %v3375 = vpack.c.b16 %v3207, %v3203
    %v3376 = vpack.c.b16 %v3208, %v3204
    %v3377 = vpack.c.b16 %v3213, %v3209
    %v3378 = vpack.c.b16 %v3214, %v3210
    %v3379 = vpack.c.b16 %v3215, %v3211
    %v3380 = vpack.c.b16 %v3216, %v3212
    %v3381 = vpack.c.b16 %v3221, %v3217
    %v3382 = vpack.c.b16 %v3222, %v3218
    %v3383 = vpack.c.b16 %v3223, %v3219
    %v3384 = vpack.c.b16 %v3224, %v3220
    %v3385 = vpack.c.b16 %v3229, %v3225
    %v3386 = vpack.c.b16 %v3230, %v3226
    %v3387 = vpack.c.b16 %v3231, %v3227
    %v3388 = vpack.c.b16 %v3232, %v3228
    %v3389 = vpack.c.b16 %v3237, %v3233
    %v3390 = vpack.c.b16 %v3238, %v3234
    %v3391 = vpack.c.b16 %v3239, %v3235
    %v3392 = vpack.c.b16 %v3240, %v3236
    %v3393 = vpack.c.b16 %v3245, %v3241
    %v3394 = vpack.c.b16 %v3246, %v3242
    %v3395 = vpack.c.b16 %v3247, %v3243
    %v3396 = vpack.c.b16 %v3248, %v3244
    %v3397 = vpack.c.b16 %v3253, %v3249
    %v3398 = vpack.c.b16 %v3254, %v3250
    %v3399 = vpack.c.b16 %v3255, %v3251
    %v3400 = vpack.c.b16 %v3256, %v3252
    %v3401 = vpack.c.b16 %v3261, %v3257
    %v3402 = vpack.c.b16 %v3262, %v3258
    %v3403 = vpack.c.b16 %v3263, %v3259
    %v3404 = vpack.c.b16 %v3264, %v3260
    %v3405 = vpack.c.b16 %v3269, %v3265
    %v3406 = vpack.c.b16 %v3270, %v3266
    %v3407 = vpack.c.b16 %v3271, %v3267
    %v3408 = vpack.c.b16 %v3272, %v3268
    %v3409 = vpack.c.b16 %v3277, %v3273
    %v3410 = vpack.c.b16 %v3278, %v3274
    %v3411 = vpack.c.b16 %v3279, %v3275
    %v3412 = vpack.c.b16 %v3280, %v3276
    %v3413 = vpack.c.b16 %v3285, %v3281
    %v3414 = vpack.c.b16 %v3286, %v3282
    %v3415 = vpack.c.b16 %v3287, %v3283
    %v3416 = vpack.c.b16 %v3288, %v3284
    %3545 = vmatprep.subr.bf16.mxu0 %v3318
    %3546 = vmatpush1.bf16.msra.mxu0 %v3317
    %3547 = vmatprep.subr.bf16.mxu0 %v3314
    %3548 = vmatpush1.bf16.msra.mxu0 %v3313
    %3549 = vmatprep.subr.bf16.mxu0 %v3310
    %3550 = vmatpush1.bf16.msra.mxu0 %v3309
    %3551 = vmatprep.subr.bf16.mxu0 %v3306
    %3552 = vmatpush1.bf16.msra.mxu0 %v3305
    %3553 = vmatprep.subr.bf16.mxu0 %v3302
    %3554 = vmatpush1.bf16.msra.mxu0 %v3301
    %3555 = vmatprep.subr.bf16.mxu0 %v3298
    %3556 = vmatpush1.bf16.msra.mxu0 %v3297
    %3557 = vmatprep.subr.bf16.mxu0 %v3294
    %3558 = vmatpush1.bf16.msra.mxu0 %v3293
    %3559 = vmatprep.subr.bf16.mxu0 %v3290
    %3560 = vmatpush1.bf16.msra.mxu0 %v3289
    %3561 = vmatprep.subr.bf16.mxu0 %v3350
    %3562 = vmatpush2.bf16.msra.mxu0 %v3349
    %3563 = vmatprep.subr.bf16.mxu0 %v3346
    %3564 = vmatpush2.bf16.msra.mxu0 %v3345
    %3565 = vmatprep.subr.bf16.mxu0 %v3342
    %3566 = vmatpush2.bf16.msra.mxu0 %v3341
    %3567 = vmatprep.subr.bf16.mxu0 %v3338
    %3568 = vmatpush2.bf16.msra.mxu0 %v3337
    %3569 = vmatprep.subr.bf16.mxu0 %v3334
    %3570 = vmatpush2.bf16.msra.mxu0 %v3333
    %3571 = vmatprep.subr.bf16.mxu0 %v3330
    %3572 = vmatpush2.bf16.msra.mxu0 %v3329
    %3573 = vmatprep.subr.bf16.mxu0 %v3326
    %3574 = vmatpush2.bf16.msra.mxu0 %v3325
    %3575 = vmatprep.subr.bf16.mxu0 %v3322
    %3576 = vmatpush2.bf16.msra.mxu0 %v3321
    %3577 = vmatprep.mubr.bf16.mxu0 %v2724
    %3578 = vmatmul.mubr.bf16.gmra.mxu0 %v2723
    %v3579 = vpop.f32.mrf.mxu0
    %v3580 = vadd.f32 %v2888, %v3579
    %v3581 = vpop.f32.mrf.mxu0
    %v3582 = vadd.f32 %v2892, %v3581
    %v3583 = vpop.f32.mrf.mxu0
    %v3584 = vadd.f32 %v2888, %v3583
    %v3585 = vpop.f32.mrf.mxu0
    %v3586 = vadd.f32 %v2892, %v3585
    %3587 = vmatprep.mubr.bf16.mxu0 %v2728
    %3588 = vmatmul.mubr.bf16.gmra.mxu0 %v2727
    %v3589 = vpop.f32.mrf.mxu0
    %v3590 = vadd.f32 %v2888, %v3589
    %v3591 = vpop.f32.mrf.mxu0
    %v3592 = vadd.f32 %v2892, %v3591
    %v3593 = vpop.f32.mrf.mxu0
    %v3594 = vadd.f32 %v2888, %v3593
    %v3595 = vpop.f32.mrf.mxu0
    %v3596 = vadd.f32 %v2892, %v3595
    %3597 = vmatprep.mubr.bf16.mxu0 %v2732
    %3598 = vmatmul.mubr.bf16.gmra.mxu0 %v2731
    %v3599 = vpop.f32.mrf.mxu0
    %v3600 = vadd.f32 %v2888, %v3599
    %v3601 = vpop.f32.mrf.mxu0
    %v3602 = vadd.f32 %v2892, %v3601
    %v3603 = vpop.f32.mrf.mxu0
    %v3604 = vadd.f32 %v2888, %v3603
    %v3605 = vpop.f32.mrf.mxu0
    %v3606 = vadd.f32 %v2892, %v3605
    %3607 = vmatprep.mubr.bf16.mxu0 %v2736
    %3608 = vmatmul.mubr.bf16.gmra.mxu0 %v2735
    %v3609 = vpop.f32.mrf.mxu0
    %v3610 = vadd.f32 %v2888, %v3609
    %v3611 = vpop.f32.mrf.mxu0
    %v3612 = vadd.f32 %v2892, %v3611
    %v3613 = vpop.f32.mrf.mxu0
    %v3614 = vadd.f32 %v2888, %v3613
    %v3615 = vpop.f32.mrf.mxu0
    %v3616 = vadd.f32 %v2892, %v3615
    %3617 = vmatprep.mubr.bf16.mxu0 %v2740
    %3618 = vmatmul.mubr.bf16.gmra.mxu0 %v2739
    %v3619 = vpop.f32.mrf.mxu0
    %v3620 = vadd.f32 %v2888, %v3619
    %v3621 = vpop.f32.mrf.mxu0
    %v3622 = vadd.f32 %v2892, %v3621
    %v3623 = vpop.f32.mrf.mxu0
    %v3624 = vadd.f32 %v2888, %v3623
    %v3625 = vpop.f32.mrf.mxu0
    %v3626 = vadd.f32 %v2892, %v3625
    %3627 = vmatprep.mubr.bf16.mxu0 %v2744
    %3628 = vmatmul.mubr.bf16.gmra.mxu0 %v2743
    %v3629 = vpop.f32.mrf.mxu0
    %v3630 = vadd.f32 %v2888, %v3629
    %v3631 = vpop.f32.mrf.mxu0
    %v3632 = vadd.f32 %v2892, %v3631
    %v3633 = vpop.f32.mrf.mxu0
    %v3634 = vadd.f32 %v2888, %v3633
    %v3635 = vpop.f32.mrf.mxu0
    %v3636 = vadd.f32 %v2892, %v3635
    %3637 = vmatprep.mubr.bf16.mxu0 %v2748
    %3638 = vmatmul.mubr.bf16.gmra.mxu0 %v2747
    %v3639 = vpop.f32.mrf.mxu0
    %v3640 = vadd.f32 %v2888, %v3639
    %v3641 = vpop.f32.mrf.mxu0
    %v3642 = vadd.f32 %v2892, %v3641
    %v3643 = vpop.f32.mrf.mxu0
    %v3644 = vadd.f32 %v2888, %v3643
    %v3645 = vpop.f32.mrf.mxu0
    %v3646 = vadd.f32 %v2892, %v3645
    %3647 = vmatprep.mubr.bf16.mxu0 %v2752
    %3648 = vmatmul.mubr.bf16.gmra.mxu0 %v2751
    %v3649 = vpop.f32.mrf.mxu0
    %v3650 = vadd.f32 %v2888, %v3649
    %v3651 = vpop.f32.mrf.mxu0
    %v3652 = vadd.f32 %v2892, %v3651
    %v3653 = vpop.f32.mrf.mxu0
    %v3654 = vadd.f32 %v2888, %v3653
    %v3655 = vpop.f32.mrf.mxu0
    %v3656 = vadd.f32 %v2892, %v3655
    %3657 = vdwg.mxu0
    %3658 = vmatprep.subr.bf16.mxu0 %v3382
    %3659 = vmatpush1.bf16.msra.mxu0 %v3381
    %3660 = vmatprep.subr.bf16.mxu0 %v3378
    %3661 = vmatpush1.bf16.msra.mxu0 %v3377
    %3662 = vmatprep.subr.bf16.mxu0 %v3374
    %3663 = vmatpush1.bf16.msra.mxu0 %v3373
    %3664 = vmatprep.subr.bf16.mxu0 %v3370
    %3665 = vmatpush1.bf16.msra.mxu0 %v3369
    %3666 = vmatprep.subr.bf16.mxu0 %v3366
    %3667 = vmatpush1.bf16.msra.mxu0 %v3365
    %3668 = vmatprep.subr.bf16.mxu0 %v3362
    %3669 = vmatpush1.bf16.msra.mxu0 %v3361
    %3670 = vmatprep.subr.bf16.mxu0 %v3358
    %3671 = vmatpush1.bf16.msra.mxu0 %v3357
    %3672 = vmatprep.subr.bf16.mxu0 %v3354
    %3673 = vmatpush1.bf16.msra.mxu0 %v3353
    %3674 = vmatprep.subr.bf16.mxu0 %v3414
    %3675 = vmatpush2.bf16.msra.mxu0 %v3413
    %3676 = vmatprep.subr.bf16.mxu0 %v3410
    %3677 = vmatpush2.bf16.msra.mxu0 %v3409
    %3678 = vmatprep.subr.bf16.mxu0 %v3406
    %3679 = vmatpush2.bf16.msra.mxu0 %v3405
    %3680 = vmatprep.subr.bf16.mxu0 %v3402
    %3681 = vmatpush2.bf16.msra.mxu0 %v3401
    %3682 = vmatprep.subr.bf16.mxu0 %v3398
    %3683 = vmatpush2.bf16.msra.mxu0 %v3397
    %3684 = vmatprep.subr.bf16.mxu0 %v3394
    %3685 = vmatpush2.bf16.msra.mxu0 %v3393
    %3686 = vmatprep.subr.bf16.mxu0 %v3390
    %3687 = vmatpush2.bf16.msra.mxu0 %v3389
    %3688 = vmatprep.subr.bf16.mxu0 %v3386
    %3689 = vmatpush2.bf16.msra.mxu0 %v3385
    %3690 = vmatprep.mubr.bf16.mxu0 %v2726
    %3691 = vmatmul.mubr.bf16.gmra.mxu0 %v2725
    %v3692 = vpop.f32.mrf.mxu0
    %v3693 = vadd.f32 %v3580, %v3692
    %v3694 = vpop.f32.mrf.mxu0
    %v3695 = vadd.f32 %v3582, %v3694
    %v3696 = vpop.f32.mrf.mxu0
    %v3697 = vadd.f32 %v3584, %v3696
    %v3698 = vpop.f32.mrf.mxu0
    %v3699 = vadd.f32 %v3586, %v3698
    %3700 = vmatprep.mubr.bf16.mxu0 %v2730
    %3701 = vmatmul.mubr.bf16.gmra.mxu0 %v2729
    %v3702 = vpop.f32.mrf.mxu0
    %v3703 = vadd.f32 %v3590, %v3702
    %v3704 = vpop.f32.mrf.mxu0
    %v3705 = vadd.f32 %v3592, %v3704
    %v3706 = vpop.f32.mrf.mxu0
    %v3707 = vadd.f32 %v3594, %v3706
    %v3708 = vpop.f32.mrf.mxu0
    %v3709 = vadd.f32 %v3596, %v3708
    %3710 = vmatprep.mubr.bf16.mxu0 %v2734
    %3711 = vmatmul.mubr.bf16.gmra.mxu0 %v2733
    %v3712 = vpop.f32.mrf.mxu0
    %v3713 = vadd.f32 %v3600, %v3712
    %v3714 = vpop.f32.mrf.mxu0
    %v3715 = vadd.f32 %v3602, %v3714
    %v3716 = vpop.f32.mrf.mxu0
    %v3717 = vadd.f32 %v3604, %v3716
    %v3718 = vpop.f32.mrf.mxu0
    %v3719 = vadd.f32 %v3606, %v3718
    %3720 = vmatprep.mubr.bf16.mxu0 %v2738
    %3721 = vmatmul.mubr.bf16.gmra.mxu0 %v2737
    %v3722 = vpop.f32.mrf.mxu0
    %v3723 = vadd.f32 %v3610, %v3722
    %v3724 = vpop.f32.mrf.mxu0
    %v3725 = vadd.f32 %v3612, %v3724
    %v3726 = vpop.f32.mrf.mxu0
    %v3727 = vadd.f32 %v3614, %v3726
    %v3728 = vpop.f32.mrf.mxu0
    %v3729 = vadd.f32 %v3616, %v3728
    %3730 = vmatprep.mubr.bf16.mxu0 %v2742
    %3731 = vmatmul.mubr.bf16.gmra.mxu0 %v2741
    %v3732 = vpop.f32.mrf.mxu0
    %v3733 = vadd.f32 %v3620, %v3732
    %v3734 = vpop.f32.mrf.mxu0
    %v3735 = vadd.f32 %v3622, %v3734
    %v3736 = vpop.f32.mrf.mxu0
    %v3737 = vadd.f32 %v3624, %v3736
    %v3738 = vpop.f32.mrf.mxu0
    %v3739 = vadd.f32 %v3626, %v3738
    %3740 = vmatprep.mubr.bf16.mxu0 %v2746
    %3741 = vmatmul.mubr.bf16.gmra.mxu0 %v2745
    %v3742 = vpop.f32.mrf.mxu0
    %v3743 = vadd.f32 %v3630, %v3742
    %v3744 = vpop.f32.mrf.mxu0
    %v3745 = vadd.f32 %v3632, %v3744
    %v3746 = vpop.f32.mrf.mxu0
    %v3747 = vadd.f32 %v3634, %v3746
    %v3748 = vpop.f32.mrf.mxu0
    %v3749 = vadd.f32 %v3636, %v3748
    %3750 = vmatprep.mubr.bf16.mxu0 %v2750
    %3751 = vmatmul.mubr.bf16.gmra.mxu0 %v2749
    %v3752 = vpop.f32.mrf.mxu0
    %v3753 = vadd.f32 %v3640, %v3752
    %v3754 = vpop.f32.mrf.mxu0
    %v3755 = vadd.f32 %v3642, %v3754
    %v3756 = vpop.f32.mrf.mxu0
    %v3757 = vadd.f32 %v3644, %v3756
    %v3758 = vpop.f32.mrf.mxu0
    %v3759 = vadd.f32 %v3646, %v3758
    %3760 = vmatprep.mubr.bf16.mxu0 %v2754
    %3761 = vmatmul.mubr.bf16.gmra.mxu0 %v2753
    %v3762 = vpop.f32.mrf.mxu0
    %v3763 = vadd.f32 %v3650, %v3762
    %v3764 = vpop.f32.mrf.mxu0
    %v3765 = vadd.f32 %v3652, %v3764
    %v3766 = vpop.f32.mrf.mxu0
    %v3767 = vadd.f32 %v3654, %v3766
    %v3768 = vpop.f32.mrf.mxu0
    %v3769 = vadd.f32 %v3656, %v3768
    %3770 = vdwg.mxu0
    %3771 = vmatprep.subr.bf16.mxu0 %v3320
    %3772 = vmatpush1.bf16.msra.mxu0 %v3319
    %3773 = vmatprep.subr.bf16.mxu0 %v3316
    %3774 = vmatpush1.bf16.msra.mxu0 %v3315
    %3775 = vmatprep.subr.bf16.mxu0 %v3312
    %3776 = vmatpush1.bf16.msra.mxu0 %v3311
    %3777 = vmatprep.subr.bf16.mxu0 %v3308
    %3778 = vmatpush1.bf16.msra.mxu0 %v3307
    %3779 = vmatprep.subr.bf16.mxu0 %v3304
    %3780 = vmatpush1.bf16.msra.mxu0 %v3303
    %3781 = vmatprep.subr.bf16.mxu0 %v3300
    %3782 = vmatpush1.bf16.msra.mxu0 %v3299
    %3783 = vmatprep.subr.bf16.mxu0 %v3296
    %3784 = vmatpush1.bf16.msra.mxu0 %v3295
    %3785 = vmatprep.subr.bf16.mxu0 %v3292
    %3786 = vmatpush1.bf16.msra.mxu0 %v3291
    %3787 = vmatprep.subr.bf16.mxu0 %v3352
    %3788 = vmatpush2.bf16.msra.mxu0 %v3351
    %3789 = vmatprep.subr.bf16.mxu0 %v3348
    %3790 = vmatpush2.bf16.msra.mxu0 %v3347
    %3791 = vmatprep.subr.bf16.mxu0 %v3344
    %3792 = vmatpush2.bf16.msra.mxu0 %v3343
    %3793 = vmatprep.subr.bf16.mxu0 %v3340
    %3794 = vmatpush2.bf16.msra.mxu0 %v3339
    %3795 = vmatprep.subr.bf16.mxu0 %v3336
    %3796 = vmatpush2.bf16.msra.mxu0 %v3335
    %3797 = vmatprep.subr.bf16.mxu0 %v3332
    %3798 = vmatpush2.bf16.msra.mxu0 %v3331
    %3799 = vmatprep.subr.bf16.mxu0 %v3328
    %3800 = vmatpush2.bf16.msra.mxu0 %v3327
    %3801 = vmatprep.subr.bf16.mxu0 %v3324
    %3802 = vmatpush2.bf16.msra.mxu0 %v3323
    %3803 = vmatprep.mubr.bf16.mxu0 %v2724
    %3804 = vmatmul.mubr.bf16.gmra.mxu0 %v2723
    %v3805 = vpop.f32.mrf.mxu0
    %v3806 = vadd.f32 %v2896, %v3805
    %v3807 = vpop.f32.mrf.mxu0
    %v3808 = vadd.f32 %v2900, %v3807
    %v3809 = vpop.f32.mrf.mxu0
    %v3810 = vadd.f32 %v2896, %v3809
    %v3811 = vpop.f32.mrf.mxu0
    %v3812 = vadd.f32 %v2900, %v3811
    %3813 = vmatprep.mubr.bf16.mxu0 %v2728
    %3814 = vmatmul.mubr.bf16.gmra.mxu0 %v2727
    %v3815 = vpop.f32.mrf.mxu0
    %v3816 = vadd.f32 %v2896, %v3815
    %v3817 = vpop.f32.mrf.mxu0
    %v3818 = vadd.f32 %v2900, %v3817
    %v3819 = vpop.f32.mrf.mxu0
    %v3820 = vadd.f32 %v2896, %v3819
    %v3821 = vpop.f32.mrf.mxu0
    %v3822 = vadd.f32 %v2900, %v3821
    %3823 = vmatprep.mubr.bf16.mxu0 %v2732
    %3824 = vmatmul.mubr.bf16.gmra.mxu0 %v2731
    %v3825 = vpop.f32.mrf.mxu0
    %v3826 = vadd.f32 %v2896, %v3825
    %v3827 = vpop.f32.mrf.mxu0
    %v3828 = vadd.f32 %v2900, %v3827
    %v3829 = vpop.f32.mrf.mxu0
    %v3830 = vadd.f32 %v2896, %v3829
    %v3831 = vpop.f32.mrf.mxu0
    %v3832 = vadd.f32 %v2900, %v3831
    %3833 = vmatprep.mubr.bf16.mxu0 %v2736
    %3834 = vmatmul.mubr.bf16.gmra.mxu0 %v2735
    %v3835 = vpop.f32.mrf.mxu0
    %v3836 = vadd.f32 %v2896, %v3835
    %v3837 = vpop.f32.mrf.mxu0
    %v3838 = vadd.f32 %v2900, %v3837
    %v3839 = vpop.f32.mrf.mxu0
    %v3840 = vadd.f32 %v2896, %v3839
    %v3841 = vpop.f32.mrf.mxu0
    %v3842 = vadd.f32 %v2900, %v3841
    %3843 = vmatprep.mubr.bf16.mxu0 %v2740
    %3844 = vmatmul.mubr.bf16.gmra.mxu0 %v2739
    %v3845 = vpop.f32.mrf.mxu0
    %v3846 = vadd.f32 %v2896, %v3845
    %v3847 = vpop.f32.mrf.mxu0
    %v3848 = vadd.f32 %v2900, %v3847
    %v3849 = vpop.f32.mrf.mxu0
    %v3850 = vadd.f32 %v2896, %v3849
    %v3851 = vpop.f32.mrf.mxu0
    %v3852 = vadd.f32 %v2900, %v3851
    %3853 = vmatprep.mubr.bf16.mxu0 %v2744
    %3854 = vmatmul.mubr.bf16.gmra.mxu0 %v2743
    %v3855 = vpop.f32.mrf.mxu0
    %v3856 = vadd.f32 %v2896, %v3855
    %v3857 = vpop.f32.mrf.mxu0
    %v3858 = vadd.f32 %v2900, %v3857
    %v3859 = vpop.f32.mrf.mxu0
    %v3860 = vadd.f32 %v2896, %v3859
    %v3861 = vpop.f32.mrf.mxu0
    %v3862 = vadd.f32 %v2900, %v3861
    %3863 = vmatprep.mubr.bf16.mxu0 %v2748
    %3864 = vmatmul.mubr.bf16.gmra.mxu0 %v2747
    %v3865 = vpop.f32.mrf.mxu0
    %v3866 = vadd.f32 %v2896, %v3865
    %v3867 = vpop.f32.mrf.mxu0
    %v3868 = vadd.f32 %v2900, %v3867
    %v3869 = vpop.f32.mrf.mxu0
    %v3870 = vadd.f32 %v2896, %v3869
    %v3871 = vpop.f32.mrf.mxu0
    %v3872 = vadd.f32 %v2900, %v3871
    %3873 = vmatprep.mubr.bf16.mxu0 %v2752
    %3874 = vmatmul.mubr.bf16.gmra.mxu0 %v2751
    %v3875 = vpop.f32.mrf.mxu0
    %v3876 = vadd.f32 %v2896, %v3875
    %v3877 = vpop.f32.mrf.mxu0
    %v3878 = vadd.f32 %v2900, %v3877
    %v3879 = vpop.f32.mrf.mxu0
    %v3880 = vadd.f32 %v2896, %v3879
    %v3881 = vpop.f32.mrf.mxu0
    %v3882 = vadd.f32 %v2900, %v3881
    %3883 = vdwg.mxu0
    %3884 = vmatprep.subr.bf16.mxu0 %v3384
    %3885 = vmatpush1.bf16.msra.mxu0 %v3383
    %3886 = vmatprep.subr.bf16.mxu0 %v3380
    %3887 = vmatpush1.bf16.msra.mxu0 %v3379
    %3888 = vmatprep.subr.bf16.mxu0 %v3376
    %3889 = vmatpush1.bf16.msra.mxu0 %v3375
    %3890 = vmatprep.subr.bf16.mxu0 %v3372
    %3891 = vmatpush1.bf16.msra.mxu0 %v3371
    %3892 = vmatprep.subr.bf16.mxu0 %v3368
    %3893 = vmatpush1.bf16.msra.mxu0 %v3367
    %3894 = vmatprep.subr.bf16.mxu0 %v3364
    %3895 = vmatpush1.bf16.msra.mxu0 %v3363
    %3896 = vmatprep.subr.bf16.mxu0 %v3360
    %3897 = vmatpush1.bf16.msra.mxu0 %v3359
    %3898 = vmatprep.subr.bf16.mxu0 %v3356
    %3899 = vmatpush1.bf16.msra.mxu0 %v3355
    %3900 = vmatprep.subr.bf16.mxu0 %v3416
    %3901 = vmatpush2.bf16.msra.mxu0 %v3415
    %3902 = vmatprep.subr.bf16.mxu0 %v3412
    %3903 = vmatpush2.bf16.msra.mxu0 %v3411
    %3904 = vmatprep.subr.bf16.mxu0 %v3408
    %3905 = vmatpush2.bf16.msra.mxu0 %v3407
    %3906 = vmatprep.subr.bf16.mxu0 %v3404
    %3907 = vmatpush2.bf16.msra.mxu0 %v3403
    %3908 = vmatprep.subr.bf16.mxu0 %v3400
    %3909 = vmatpush2.bf16.msra.mxu0 %v3399
    %3910 = vmatprep.subr.bf16.mxu0 %v3396
    %3911 = vmatpush2.bf16.msra.mxu0 %v3395
    %3912 = vmatprep.subr.bf16.mxu0 %v3392
    %3913 = vmatpush2.bf16.msra.mxu0 %v3391
    %3914 = vmatprep.subr.bf16.mxu0 %v3388
    %3915 = vmatpush2.bf16.msra.mxu0 %v3387
    %3916 = vmatprep.mubr.bf16.mxu0 %v2726
    %3917 = vmatmul.mubr.bf16.gmra.mxu0 %v2725
    %v3918 = vpop.f32.mrf.mxu0
    %v3919 = vadd.f32 %v3806, %v3918
    %v3920 = vpop.f32.mrf.mxu0
    %v3921 = vadd.f32 %v3808, %v3920
    %v3922 = vpop.f32.mrf.mxu0
    %v3923 = vadd.f32 %v3810, %v3922
    %v3924 = vpop.f32.mrf.mxu0
    %v3925 = vadd.f32 %v3812, %v3924
    %3926 = vmatprep.mubr.bf16.mxu0 %v2730
    %3927 = vmatmul.mubr.bf16.gmra.mxu0 %v2729
    %v3928 = vpop.f32.mrf.mxu0
    %v3929 = vadd.f32 %v3816, %v3928
    %v3930 = vpop.f32.mrf.mxu0
    %v3931 = vadd.f32 %v3818, %v3930
    %v3932 = vpop.f32.mrf.mxu0
    %v3933 = vadd.f32 %v3820, %v3932
    %v3934 = vpop.f32.mrf.mxu0
    %v3935 = vadd.f32 %v3822, %v3934
    %3936 = vmatprep.mubr.bf16.mxu0 %v2734
    %3937 = vmatmul.mubr.bf16.gmra.mxu0 %v2733
    %v3938 = vpop.f32.mrf.mxu0
    %v3939 = vadd.f32 %v3826, %v3938
    %v3940 = vpop.f32.mrf.mxu0
    %v3941 = vadd.f32 %v3828, %v3940
    %v3942 = vpop.f32.mrf.mxu0
    %v3943 = vadd.f32 %v3830, %v3942
    %v3944 = vpop.f32.mrf.mxu0
    %v3945 = vadd.f32 %v3832, %v3944
    %3946 = vmatprep.mubr.bf16.mxu0 %v2738
    %3947 = vmatmul.mubr.bf16.gmra.mxu0 %v2737
    %v3948 = vpop.f32.mrf.mxu0
    %v3949 = vadd.f32 %v3836, %v3948
    %v3950 = vpop.f32.mrf.mxu0
    %v3951 = vadd.f32 %v3838, %v3950
    %v3952 = vpop.f32.mrf.mxu0
    %v3953 = vadd.f32 %v3840, %v3952
    %v3954 = vpop.f32.mrf.mxu0
    %v3955 = vadd.f32 %v3842, %v3954
    %3956 = vmatprep.mubr.bf16.mxu0 %v2742
    %3957 = vmatmul.mubr.bf16.gmra.mxu0 %v2741
    %v3958 = vpop.f32.mrf.mxu0
    %v3959 = vadd.f32 %v3846, %v3958
    %v3960 = vpop.f32.mrf.mxu0
    %v3961 = vadd.f32 %v3848, %v3960
    %v3962 = vpop.f32.mrf.mxu0
    %v3963 = vadd.f32 %v3850, %v3962
    %v3964 = vpop.f32.mrf.mxu0
    %v3965 = vadd.f32 %v3852, %v3964
    %3966 = vmatprep.mubr.bf16.mxu0 %v2746
    %3967 = vmatmul.mubr.bf16.gmra.mxu0 %v2745
    %v3968 = vpop.f32.mrf.mxu0
    %v3969 = vadd.f32 %v3856, %v3968
    %v3970 = vpop.f32.mrf.mxu0
    %v3971 = vadd.f32 %v3858, %v3970
    %v3972 = vpop.f32.mrf.mxu0
    %v3973 = vadd.f32 %v3860, %v3972
    %v3974 = vpop.f32.mrf.mxu0
    %v3975 = vadd.f32 %v3862, %v3974
    %3976 = vmatprep.mubr.bf16.mxu0 %v2750
    %3977 = vmatmul.mubr.bf16.gmra.mxu0 %v2749
    %v3978 = vpop.f32.mrf.mxu0
    %v3979 = vadd.f32 %v3866, %v3978
    %v3980 = vpop.f32.mrf.mxu0
    %v3981 = vadd.f32 %v3868, %v3980
    %v3982 = vpop.f32.mrf.mxu0
    %v3983 = vadd.f32 %v3870, %v3982
    %v3984 = vpop.f32.mrf.mxu0
    %v3985 = vadd.f32 %v3872, %v3984
    %3986 = vmatprep.mubr.bf16.mxu0 %v2754
    %3987 = vmatmul.mubr.bf16.gmra.mxu0 %v2753
    %v3988 = vpop.f32.mrf.mxu0
    %v3989 = vadd.f32 %v3876, %v3988
    %v3990 = vpop.f32.mrf.mxu0
    %v3991 = vadd.f32 %v3878, %v3990
    %v3992 = vpop.f32.mrf.mxu0
    %v3993 = vadd.f32 %v3880, %v3992
    %v3994 = vpop.f32.mrf.mxu0
    %v3995 = vadd.f32 %v3882, %v3994
    %3996 = vdwg.mxu0
    %v3997 = vxor.u32 %v3693, 2147483648
    %v3998 = vxor.u32 %v3695, 2147483648
    %v3999 = vxor.u32 %v3919, 2147483648
    %v4000 = vxor.u32 %v3921, 2147483648
    %v4001 = vxor.u32 %v3697, 2147483648
    %v4002 = vxor.u32 %v3699, 2147483648
    %v4003 = vxor.u32 %v3923, 2147483648
    %v4004 = vxor.u32 %v3925, 2147483648
    %v4005 = vxor.u32 %v3703, 2147483648
    %v4006 = vxor.u32 %v3705, 2147483648
    %v4007 = vxor.u32 %v3929, 2147483648
    %v4008 = vxor.u32 %v3931, 2147483648
    %v4009 = vxor.u32 %v3707, 2147483648
    %v4010 = vxor.u32 %v3709, 2147483648
    %v4011 = vxor.u32 %v3933, 2147483648
    %v4012 = vxor.u32 %v3935, 2147483648
    %v4013 = vxor.u32 %v3713, 2147483648
    %v4014 = vxor.u32 %v3715, 2147483648
    %v4015 = vxor.u32 %v3939, 2147483648
    %v4016 = vxor.u32 %v3941, 2147483648
    %v4017 = vxor.u32 %v3717, 2147483648
    %v4018 = vxor.u32 %v3719, 2147483648
    %v4019 = vxor.u32 %v3943, 2147483648
    %v4020 = vxor.u32 %v3945, 2147483648
    %v4021 = vxor.u32 %v3723, 2147483648
    %v4022 = vxor.u32 %v3725, 2147483648
    %v4023 = vxor.u32 %v3949, 2147483648
    %v4024 = vxor.u32 %v3951, 2147483648
    %v4025 = vxor.u32 %v3727, 2147483648
    %v4026 = vxor.u32 %v3729, 2147483648
    %v4027 = vxor.u32 %v3953, 2147483648
    %v4028 = vxor.u32 %v3955, 2147483648
    %v4029 = vxor.u32 %v3733, 2147483648
    %v4030 = vxor.u32 %v3735, 2147483648
    %v4031 = vxor.u32 %v3959, 2147483648
    %v4032 = vxor.u32 %v3961, 2147483648
    %v4033 = vxor.u32 %v3737, 2147483648
    %v4034 = vxor.u32 %v3739, 2147483648
    %v4035 = vxor.u32 %v3963, 2147483648
    %v4036 = vxor.u32 %v3965, 2147483648
    %v4037 = vxor.u32 %v3743, 2147483648
    %v4038 = vxor.u32 %v3745, 2147483648
    %v4039 = vxor.u32 %v3969, 2147483648
    %v4040 = vxor.u32 %v3971, 2147483648
    %v4041 = vxor.u32 %v3747, 2147483648
    %v4042 = vxor.u32 %v3749, 2147483648
    %v4043 = vxor.u32 %v3973, 2147483648
    %v4044 = vxor.u32 %v3975, 2147483648
    %v4045 = vxor.u32 %v3753, 2147483648
    %v4046 = vxor.u32 %v3755, 2147483648
    %v4047 = vxor.u32 %v3979, 2147483648
    %v4048 = vxor.u32 %v3981, 2147483648
    %v4049 = vxor.u32 %v3757, 2147483648
    %v4050 = vxor.u32 %v3759, 2147483648
    %v4051 = vxor.u32 %v3983, 2147483648
    %v4052 = vxor.u32 %v3985, 2147483648
    %v4053 = vxor.u32 %v3763, 2147483648
    %v4054 = vxor.u32 %v3765, 2147483648
    %v4055 = vxor.u32 %v3989, 2147483648
    %v4056 = vxor.u32 %v3991, 2147483648
    %v4057 = vxor.u32 %v3767, 2147483648
    %v4058 = vxor.u32 %v3769, 2147483648
    %v4059 = vxor.u32 %v3993, 2147483648
    %v4060 = vxor.u32 %v3995, 2147483648
    %v4061 = vmul.f32 %v3997, 1.442695
    %v4062 = vpow.pop %v4061
    %v4063 = vmul.f32 %v3998, 1.442695
    %v4064 = vpow.pop %v4063
    %v4065 = vmul.f32 %v3999, 1.442695
    %v4066 = vpow.pop %v4065
    %v4067 = vmul.f32 %v4000, 1.442695
    %v4068 = vpow.pop %v4067
    %v4069 = vmul.f32 %v4001, 1.442695
    %v4070 = vpow.pop %v4069
    %v4071 = vmul.f32 %v4002, 1.442695
    %v4072 = vpow.pop %v4071
    %v4073 = vmul.f32 %v4003, 1.442695
    %v4074 = vpow.pop %v4073
    %v4075 = vmul.f32 %v4004, 1.442695
    %v4076 = vpow.pop %v4075
    %v4077 = vmul.f32 %v4005, 1.442695
    %v4078 = vpow.pop %v4077
    %v4079 = vmul.f32 %v4006, 1.442695
    %v4080 = vpow.pop %v4079
    %v4081 = vmul.f32 %v4007, 1.442695
    %v4082 = vpow.pop %v4081
    %v4083 = vmul.f32 %v4008, 1.442695
    %v4084 = vpow.pop %v4083
    %v4085 = vmul.f32 %v4009, 1.442695
    %v4086 = vpow.pop %v4085
    %v4087 = vmul.f32 %v4010, 1.442695
    %v4088 = vpow.pop %v4087
    %v4089 = vmul.f32 %v4011, 1.442695
    %v4090 = vpow.pop %v4089
    %v4091 = vmul.f32 %v4012, 1.442695
    %v4092 = vpow.pop %v4091
    %v4093 = vmul.f32 %v4013, 1.442695
    %v4094 = vpow.pop %v4093
    %v4095 = vmul.f32 %v4014, 1.442695
    %v4096 = vpow.pop %v4095
    %v4097 = vmul.f32 %v4015, 1.442695
    %v4098 = vpow.pop %v4097
    %v4099 = vmul.f32 %v4016, 1.442695
    %v4100 = vpow.pop %v4099
    %v4101 = vmul.f32 %v4017, 1.442695
    %v4102 = vpow.pop %v4101
    %v4103 = vmul.f32 %v4018, 1.442695
    %v4104 = vpow.pop %v4103
    %v4105 = vmul.f32 %v4019, 1.442695
    %v4106 = vpow.pop %v4105
    %v4107 = vmul.f32 %v4020, 1.442695
    %v4108 = vpow.pop %v4107
    %v4109 = vmul.f32 %v4021, 1.442695
    %v4110 = vpow.pop %v4109
    %v4111 = vmul.f32 %v4022, 1.442695
    %v4112 = vpow.pop %v4111
    %v4113 = vmul.f32 %v4023, 1.442695
    %v4114 = vpow.pop %v4113
    %v4115 = vmul.f32 %v4024, 1.442695
    %v4116 = vpow.pop %v4115
    %v4117 = vmul.f32 %v4025, 1.442695
    %v4118 = vpow.pop %v4117
    %v4119 = vmul.f32 %v4026, 1.442695
    %v4120 = vpow.pop %v4119
    %v4121 = vmul.f32 %v4027, 1.442695
    %v4122 = vpow.pop %v4121
    %v4123 = vmul.f32 %v4028, 1.442695
    %v4124 = vpow.pop %v4123
    %v4125 = vmul.f32 %v4029, 1.442695
    %v4126 = vpow.pop %v4125
    %v4127 = vmul.f32 %v4030, 1.442695
    %v4128 = vpow.pop %v4127
    %v4129 = vmul.f32 %v4031, 1.442695
    %v4130 = vpow.pop %v4129
    %v4131 = vmul.f32 %v4032, 1.442695
    %v4132 = vpow.pop %v4131
    %v4133 = vmul.f32 %v4033, 1.442695
    %v4134 = vpow.pop %v4133
    %v4135 = vmul.f32 %v4034, 1.442695
    %v4136 = vpow.pop %v4135
    %v4137 = vmul.f32 %v4035, 1.442695
    %v4138 = vpow.pop %v4137
    %v4139 = vmul.f32 %v4036, 1.442695
    %v4140 = vpow.pop %v4139
    %v4141 = vmul.f32 %v4037, 1.442695
    %v4142 = vpow.pop %v4141
    %v4143 = vmul.f32 %v4038, 1.442695
    %v4144 = vpow.pop %v4143
    %v4145 = vmul.f32 %v4039, 1.442695
    %v4146 = vpow.pop %v4145
    %v4147 = vmul.f32 %v4040, 1.442695
    %v4148 = vpow.pop %v4147
    %v4149 = vmul.f32 %v4041, 1.442695
    %v4150 = vpow.pop %v4149
    %v4151 = vmul.f32 %v4042, 1.442695
    %v4152 = vpow.pop %v4151
    %v4153 = vmul.f32 %v4043, 1.442695
    %v4154 = vpow.pop %v4153
    %v4155 = vmul.f32 %v4044, 1.442695
    %v4156 = vpow.pop %v4155
    %v4157 = vmul.f32 %v4045, 1.442695
    %v4158 = vpow.pop %v4157
    %v4159 = vmul.f32 %v4046, 1.442695
    %v4160 = vpow.pop %v4159
    %v4161 = vmul.f32 %v4047, 1.442695
    %v4162 = vpow.pop %v4161
    %v4163 = vmul.f32 %v4048, 1.442695
    %v4164 = vpow.pop %v4163
    %v4165 = vmul.f32 %v4049, 1.442695
    %v4166 = vpow.pop %v4165
    %v4167 = vmul.f32 %v4050, 1.442695
    %v4168 = vpow.pop %v4167
    %v4169 = vmul.f32 %v4051, 1.442695
    %v4170 = vpow.pop %v4169
    %v4171 = vmul.f32 %v4052, 1.442695
    %v4172 = vpow.pop %v4171
    %v4173 = vmul.f32 %v4053, 1.442695
    %v4174 = vpow.pop %v4173
    %v4175 = vmul.f32 %v4054, 1.442695
    %v4176 = vpow.pop %v4175
    %v4177 = vmul.f32 %v4055, 1.442695
    %v4178 = vpow.pop %v4177
    %v4179 = vmul.f32 %v4056, 1.442695
    %v4180 = vpow.pop %v4179
    %v4181 = vmul.f32 %v4057, 1.442695
    %v4182 = vpow.pop %v4181
    %v4183 = vmul.f32 %v4058, 1.442695
    %v4184 = vpow.pop %v4183
    %v4185 = vmul.f32 %v4059, 1.442695
    %v4186 = vpow.pop %v4185
    %v4187 = vmul.f32 %v4060, 1.442695
    %v4188 = vpow.pop %v4187
    %v4189 = vadd.f32 %v4062, 1.0
    %v4190 = vadd.f32 %v4064, 1.0
    %v4191 = vadd.f32 %v4066, 1.0
    %v4192 = vadd.f32 %v4068, 1.0
    %v4193 = vadd.f32 %v4070, 1.0
    %v4194 = vadd.f32 %v4072, 1.0
    %v4195 = vadd.f32 %v4074, 1.0
    %v4196 = vadd.f32 %v4076, 1.0
    %v4197 = vadd.f32 %v4078, 1.0
    %v4198 = vadd.f32 %v4080, 1.0
    %v4199 = vadd.f32 %v4082, 1.0
    %v4200 = vadd.f32 %v4084, 1.0
    %v4201 = vadd.f32 %v4086, 1.0
    %v4202 = vadd.f32 %v4088, 1.0
    %v4203 = vadd.f32 %v4090, 1.0
    %v4204 = vadd.f32 %v4092, 1.0
    %v4205 = vadd.f32 %v4094, 1.0
    %v4206 = vadd.f32 %v4096, 1.0
    %v4207 = vadd.f32 %v4098, 1.0
    %v4208 = vadd.f32 %v4100, 1.0
    %v4209 = vadd.f32 %v4102, 1.0
    %v4210 = vadd.f32 %v4104, 1.0
    %v4211 = vadd.f32 %v4106, 1.0
    %v4212 = vadd.f32 %v4108, 1.0
    %v4213 = vadd.f32 %v4110, 1.0
    %v4214 = vadd.f32 %v4112, 1.0
    %v4215 = vadd.f32 %v4114, 1.0
    %v4216 = vadd.f32 %v4116, 1.0
    %v4217 = vadd.f32 %v4118, 1.0
    %v4218 = vadd.f32 %v4120, 1.0
    %v4219 = vadd.f32 %v4122, 1.0
    %v4220 = vadd.f32 %v4124, 1.0
    %v4221 = vadd.f32 %v4126, 1.0
    %v4222 = vadd.f32 %v4128, 1.0
    %v4223 = vadd.f32 %v4130, 1.0
    %v4224 = vadd.f32 %v4132, 1.0
    %v4225 = vadd.f32 %v4134, 1.0
    %v4226 = vadd.f32 %v4136, 1.0
    %v4227 = vadd.f32 %v4138, 1.0
    %v4228 = vadd.f32 %v4140, 1.0
    %v4229 = vadd.f32 %v4142, 1.0
    %v4230 = vadd.f32 %v4144, 1.0
    %v4231 = vadd.f32 %v4146, 1.0
    %v4232 = vadd.f32 %v4148, 1.0
    %v4233 = vadd.f32 %v4150, 1.0
    %v4234 = vadd.f32 %v4152, 1.0
    %v4235 = vadd.f32 %v4154, 1.0
    %v4236 = vadd.f32 %v4156, 1.0
    %v4237 = vadd.f32 %v4158, 1.0
    %v4238 = vadd.f32 %v4160, 1.0
    %v4239 = vadd.f32 %v4162, 1.0
    %v4240 = vadd.f32 %v4164, 1.0
    %v4241 = vadd.f32 %v4166, 1.0
    %v4242 = vadd.f32 %v4168, 1.0
    %v4243 = vadd.f32 %v4170, 1.0
    %v4244 = vadd.f32 %v4172, 1.0
    %v4245 = vadd.f32 %v4174, 1.0
    %v4246 = vadd.f32 %v4176, 1.0
    %v4247 = vadd.f32 %v4178, 1.0
    %v4248 = vadd.f32 %v4180, 1.0
    %v4249 = vadd.f32 %v4182, 1.0
    %v4250 = vadd.f32 %v4184, 1.0
    %v4251 = vadd.f32 %v4186, 1.0
    %v4252 = vadd.f32 %v4188, 1.0
    %v4253 = vrcp.pop %v4189
    %v4254 = vmul.f32 1.0, %v4253
    %v4255 = vrcp.pop %v4190
    %v4256 = vmul.f32 1.0, %v4255
    %v4257 = vrcp.pop %v4191
    %v4258 = vmul.f32 1.0, %v4257
    %v4259 = vrcp.pop %v4192
    %v4260 = vmul.f32 1.0, %v4259
    %v4261 = vrcp.pop %v4193
    %v4262 = vmul.f32 1.0, %v4261
    %v4263 = vrcp.pop %v4194
    %v4264 = vmul.f32 1.0, %v4263
    %v4265 = vrcp.pop %v4195
    %v4266 = vmul.f32 1.0, %v4265
    %v4267 = vrcp.pop %v4196
    %v4268 = vmul.f32 1.0, %v4267
    %v4269 = vrcp.pop %v4197
    %v4270 = vmul.f32 1.0, %v4269
    %v4271 = vrcp.pop %v4198
    %v4272 = vmul.f32 1.0, %v4271
    %v4273 = vrcp.pop %v4199
    %v4274 = vmul.f32 1.0, %v4273
    %v4275 = vrcp.pop %v4200
    %v4276 = vmul.f32 1.0, %v4275
    %v4277 = vrcp.pop %v4201
    %v4278 = vmul.f32 1.0, %v4277
    %v4279 = vrcp.pop %v4202
    %v4280 = vmul.f32 1.0, %v4279
    %v4281 = vrcp.pop %v4203
    %v4282 = vmul.f32 1.0, %v4281
    %v4283 = vrcp.pop %v4204
    %v4284 = vmul.f32 1.0, %v4283
    %v4285 = vrcp.pop %v4205
    %v4286 = vmul.f32 1.0, %v4285
    %v4287 = vrcp.pop %v4206
    %v4288 = vmul.f32 1.0, %v4287
    %v4289 = vrcp.pop %v4207
    %v4290 = vmul.f32 1.0, %v4289
    %v4291 = vrcp.pop %v4208
    %v4292 = vmul.f32 1.0, %v4291
    %v4293 = vrcp.pop %v4209
    %v4294 = vmul.f32 1.0, %v4293
    %v4295 = vrcp.pop %v4210
    %v4296 = vmul.f32 1.0, %v4295
    %v4297 = vrcp.pop %v4211
    %v4298 = vmul.f32 1.0, %v4297
    %v4299 = vrcp.pop %v4212
    %v4300 = vmul.f32 1.0, %v4299
    %v4301 = vrcp.pop %v4213
    %v4302 = vmul.f32 1.0, %v4301
    %v4303 = vrcp.pop %v4214
    %v4304 = vmul.f32 1.0, %v4303
    %v4305 = vrcp.pop %v4215
    %v4306 = vmul.f32 1.0, %v4305
    %v4307 = vrcp.pop %v4216
    %v4308 = vmul.f32 1.0, %v4307
    %v4309 = vrcp.pop %v4217
    %v4310 = vmul.f32 1.0, %v4309
    %v4311 = vrcp.pop %v4218
    %v4312 = vmul.f32 1.0, %v4311
    %v4313 = vrcp.pop %v4219
    %v4314 = vmul.f32 1.0, %v4313
    %v4315 = vrcp.pop %v4220
    %v4316 = vmul.f32 1.0, %v4315
    %v4317 = vrcp.pop %v4221
    %v4318 = vmul.f32 1.0, %v4317
    %v4319 = vrcp.pop %v4222
    %v4320 = vmul.f32 1.0, %v4319
    %v4321 = vrcp.pop %v4223
    %v4322 = vmul.f32 1.0, %v4321
    %v4323 = vrcp.pop %v4224
    %v4324 = vmul.f32 1.0, %v4323
    %v4325 = vrcp.pop %v4225
    %v4326 = vmul.f32 1.0, %v4325
    %v4327 = vrcp.pop %v4226
    %v4328 = vmul.f32 1.0, %v4327
    %v4329 = vrcp.pop %v4227
    %v4330 = vmul.f32 1.0, %v4329
    %v4331 = vrcp.pop %v4228
    %v4332 = vmul.f32 1.0, %v4331
    %v4333 = vrcp.pop %v4229
    %v4334 = vmul.f32 1.0, %v4333
    %v4335 = vrcp.pop %v4230
    %v4336 = vmul.f32 1.0, %v4335
    %v4337 = vrcp.pop %v4231
    %v4338 = vmul.f32 1.0, %v4337
    %v4339 = vrcp.pop %v4232
    %v4340 = vmul.f32 1.0, %v4339
    %v4341 = vrcp.pop %v4233
    %v4342 = vmul.f32 1.0, %v4341
    %v4343 = vrcp.pop %v4234
    %v4344 = vmul.f32 1.0, %v4343
    %v4345 = vrcp.pop %v4235
    %v4346 = vmul.f32 1.0, %v4345
    %v4347 = vrcp.pop %v4236
    %v4348 = vmul.f32 1.0, %v4347
    %v4349 = vrcp.pop %v4237
    %v4350 = vmul.f32 1.0, %v4349
    %v4351 = vrcp.pop %v4238
    %v4352 = vmul.f32 1.0, %v4351
    %v4353 = vrcp.pop %v4239
    %v4354 = vmul.f32 1.0, %v4353
    %v4355 = vrcp.pop %v4240
    %v4356 = vmul.f32 1.0, %v4355
    %v4357 = vrcp.pop %v4241
    %v4358 = vmul.f32 1.0, %v4357
    %v4359 = vrcp.pop %v4242
    %v4360 = vmul.f32 1.0, %v4359
    %v4361 = vrcp.pop %v4243
    %v4362 = vmul.f32 1.0, %v4361
    %v4363 = vrcp.pop %v4244
    %v4364 = vmul.f32 1.0, %v4363
    %v4365 = vrcp.pop %v4245
    %v4366 = vmul.f32 1.0, %v4365
    %v4367 = vrcp.pop %v4246
    %v4368 = vmul.f32 1.0, %v4367
    %v4369 = vrcp.pop %v4247
    %v4370 = vmul.f32 1.0, %v4369
    %v4371 = vrcp.pop %v4248
    %v4372 = vmul.f32 1.0, %v4371
    %v4373 = vrcp.pop %v4249
    %v4374 = vmul.f32 1.0, %v4373
    %v4375 = vrcp.pop %v4250
    %v4376 = vmul.f32 1.0, %v4375
    %v4377 = vrcp.pop %v4251
    %v4378 = vmul.f32 1.0, %v4377
    %v4379 = vrcp.pop %v4252
    %v4380 = vmul.f32 1.0, %v4379
    %v4381 = vmul.f32 %v3693, %v4254
    %v4382 = vmul.f32 %v3695, %v4256
    %v4383 = vmul.f32 %v3919, %v4258
    %v4384 = vmul.f32 %v3921, %v4260
    %v4385 = vmul.f32 %v3697, %v4262
    %v4386 = vmul.f32 %v3699, %v4264
    %v4387 = vmul.f32 %v3923, %v4266
    %v4388 = vmul.f32 %v3925, %v4268
    %v4389 = vmul.f32 %v3703, %v4270
    %v4390 = vmul.f32 %v3705, %v4272
    %v4391 = vmul.f32 %v3929, %v4274
    %v4392 = vmul.f32 %v3931, %v4276
    %v4393 = vmul.f32 %v3707, %v4278
    %v4394 = vmul.f32 %v3709, %v4280
    %v4395 = vmul.f32 %v3933, %v4282
    %v4396 = vmul.f32 %v3935, %v4284
    %v4397 = vmul.f32 %v3713, %v4286
    %v4398 = vmul.f32 %v3715, %v4288
    %v4399 = vmul.f32 %v3939, %v4290
    %v4400 = vmul.f32 %v3941, %v4292
    %v4401 = vmul.f32 %v3717, %v4294
    %v4402 = vmul.f32 %v3719, %v4296
    %v4403 = vmul.f32 %v3943, %v4298
    %v4404 = vmul.f32 %v3945, %v4300
    %v4405 = vmul.f32 %v3723, %v4302
    %v4406 = vmul.f32 %v3725, %v4304
    %v4407 = vmul.f32 %v3949, %v4306
    %v4408 = vmul.f32 %v3951, %v4308
    %v4409 = vmul.f32 %v3727, %v4310
    %v4410 = vmul.f32 %v3729, %v4312
    %v4411 = vmul.f32 %v3953, %v4314
    %v4412 = vmul.f32 %v3955, %v4316
    %v4413 = vmul.f32 %v3733, %v4318
    %v4414 = vmul.f32 %v3735, %v4320
    %v4415 = vmul.f32 %v3959, %v4322
    %v4416 = vmul.f32 %v3961, %v4324
    %v4417 = vmul.f32 %v3737, %v4326
    %v4418 = vmul.f32 %v3739, %v4328
    %v4419 = vmul.f32 %v3963, %v4330
    %v4420 = vmul.f32 %v3965, %v4332
    %v4421 = vmul.f32 %v3743, %v4334
    %v4422 = vmul.f32 %v3745, %v4336
    %v4423 = vmul.f32 %v3969, %v4338
    %v4424 = vmul.f32 %v3971, %v4340
    %v4425 = vmul.f32 %v3747, %v4342
    %v4426 = vmul.f32 %v3749, %v4344
    %v4427 = vmul.f32 %v3973, %v4346
    %v4428 = vmul.f32 %v3975, %v4348
    %v4429 = vmul.f32 %v3753, %v4350
    %v4430 = vmul.f32 %v3755, %v4352
    %v4431 = vmul.f32 %v3979, %v4354
    %v4432 = vmul.f32 %v3981, %v4356
    %v4433 = vmul.f32 %v3757, %v4358
    %v4434 = vmul.f32 %v3759, %v4360
    %v4435 = vmul.f32 %v3983, %v4362
    %v4436 = vmul.f32 %v3985, %v4364
    %v4437 = vmul.f32 %v3763, %v4366
    %v4438 = vmul.f32 %v3765, %v4368
    %v4439 = vmul.f32 %v3989, %v4370
    %v4440 = vmul.f32 %v3991, %v4372
    %v4441 = vmul.f32 %v3767, %v4374
    %v4442 = vmul.f32 %v3769, %v4376
    %v4443 = vmul.f32 %v3993, %v4378
    %v4444 = vmul.f32 %v3995, %v4380
    %v4445 = vpack.c.bf16 %v4385, %v4381
    %v4446 = vpack.c.bf16 %v4386, %v4382
    %v4447 = vpack.c.bf16 %v4387, %v4383
    %v4448 = vpack.c.bf16 %v4388, %v4384
    %v4449 = vpack.c.bf16 %v4393, %v4389
    %v4450 = vpack.c.bf16 %v4394, %v4390
    %v4451 = vpack.c.bf16 %v4395, %v4391
    %v4452 = vpack.c.bf16 %v4396, %v4392
    %v4453 = vpack.c.bf16 %v4401, %v4397
    %v4454 = vpack.c.bf16 %v4402, %v4398
    %v4455 = vpack.c.bf16 %v4403, %v4399
    %v4456 = vpack.c.bf16 %v4404, %v4400
    %v4457 = vpack.c.bf16 %v4409, %v4405
    %v4458 = vpack.c.bf16 %v4410, %v4406
    %v4459 = vpack.c.bf16 %v4411, %v4407
    %v4460 = vpack.c.bf16 %v4412, %v4408
    %v4461 = vpack.c.bf16 %v4417, %v4413
    %v4462 = vpack.c.bf16 %v4418, %v4414
    %v4463 = vpack.c.bf16 %v4419, %v4415
    %v4464 = vpack.c.bf16 %v4420, %v4416
    %v4465 = vpack.c.bf16 %v4425, %v4421
    %v4466 = vpack.c.bf16 %v4426, %v4422
    %v4467 = vpack.c.bf16 %v4427, %v4423
    %v4468 = vpack.c.bf16 %v4428, %v4424
    %v4469 = vpack.c.bf16 %v4433, %v4429
    %v4470 = vpack.c.bf16 %v4434, %v4430
    %v4471 = vpack.c.bf16 %v4435, %v4431
    %v4472 = vpack.c.bf16 %v4436, %v4432
    %v4473 = vpack.c.bf16 %v4441, %v4437
    %v4474 = vpack.c.bf16 %v4442, %v4438
    %v4475 = vpack.c.bf16 %v4443, %v4439
    %v4476 = vpack.c.bf16 %v4444, %v4440
    %v4477 = vld [vmem:[%s7] sm:$0xff]
    %v4478 = vld [vmem:[%s7 + $0x8] sm:$0xff]
    %v4479 = vld [vmem:[%s7 + $0x10] sm:$0xff]
    %v4480 = vld [vmem:[%s7 + $0x18] sm:$0xff]
    %v4481 = vld [vmem:[%s7 + $0x20] sm:$0xff]
    %v4482 = vld [vmem:[%s7 + $0x28] sm:$0xff]
    %v4483 = vld [vmem:[%s7 + $0x30] sm:$0xff]
    %v4484 = vld [vmem:[%s7 + $0x38] sm:$0xff]
    %v4485 = vld [vmem:[%s7 + $0x40] sm:$0xff]
    %v4486 = vld [vmem:[%s7 + $0x48] sm:$0xff]
    %v4487 = vld [vmem:[%s7 + $0x50] sm:$0xff]
    %v4488 = vld [vmem:[%s7 + $0x58] sm:$0xff]
    %v4489 = vld [vmem:[%s7 + $0x60] sm:$0xff]
    %v4490 = vld [vmem:[%s7 + $0x68] sm:$0xff]
    %v4491 = vld [vmem:[%s7 + $0x70] sm:$0xff]
    %v4492 = vld [vmem:[%s7 + $0x78] sm:$0xff]
    %v4493 = vld [vmem:[%s7 + $0x80] sm:$0xff]
    %v4494 = vld [vmem:[%s7 + $0x88] sm:$0xff]
    %v4495 = vld [vmem:[%s7 + $0x90] sm:$0xff]
    %v4496 = vld [vmem:[%s7 + $0x98] sm:$0xff]
    %v4497 = vld [vmem:[%s7 + $0xa0] sm:$0xff]
    %v4498 = vld [vmem:[%s7 + $0xa8] sm:$0xff]
    %v4499 = vld [vmem:[%s7 + $0xb0] sm:$0xff]
    %v4500 = vld [vmem:[%s7 + $0xb8] sm:$0xff]
    %v4501 = vld [vmem:[%s7 + $0xc0] sm:$0xff]
    %v4502 = vld [vmem:[%s7 + $0xc8] sm:$0xff]
    %v4503 = vld [vmem:[%s7 + $0xd0] sm:$0xff]
    %v4504 = vld [vmem:[%s7 + $0xd8] sm:$0xff]
    %v4505 = vld [vmem:[%s7 + $0xe0] sm:$0xff]
    %v4506 = vld [vmem:[%s7 + $0xe8] sm:$0xff]
    %v4507 = vld [vmem:[%s7 + $0xf0] sm:$0xff]
    %v4508 = vld [vmem:[%s7 + $0xf8] sm:$0xff]
    %v4509 = vld [vmem:[%s7 + $0x100] sm:$0xff]
    %v4510 = vld [vmem:[%s7 + $0x108] sm:$0xff]
    %v4511 = vld [vmem:[%s7 + $0x110] sm:$0xff]
    %v4512 = vld [vmem:[%s7 + $0x118] sm:$0xff]
    %v4513 = vld [vmem:[%s7 + $0x120] sm:$0xff]
    %v4514 = vld [vmem:[%s7 + $0x128] sm:$0xff]
    %v4515 = vld [vmem:[%s7 + $0x130] sm:$0xff]
    %v4516 = vld [vmem:[%s7 + $0x138] sm:$0xff]
    %v4517 = vld [vmem:[%s7 + $0x140] sm:$0xff]
    %v4518 = vld [vmem:[%s7 + $0x148] sm:$0xff]
    %v4519 = vld [vmem:[%s7 + $0x150] sm:$0xff]
    %v4520 = vld [vmem:[%s7 + $0x158] sm:$0xff]
    %v4521 = vld [vmem:[%s7 + $0x160] sm:$0xff]
    %v4522 = vld [vmem:[%s7 + $0x168] sm:$0xff]
    %v4523 = vld [vmem:[%s7 + $0x170] sm:$0xff]
    %v4524 = vld [vmem:[%s7 + $0x178] sm:$0xff]
    %v4525 = vld [vmem:[%s7 + $0x180] sm:$0xff]
    %v4526 = vld [vmem:[%s7 + $0x188] sm:$0xff]
    %v4527 = vld [vmem:[%s7 + $0x190] sm:$0xff]
    %v4528 = vld [vmem:[%s7 + $0x198] sm:$0xff]
    %v4529 = vld [vmem:[%s7 + $0x1a0] sm:$0xff]
    %v4530 = vld [vmem:[%s7 + $0x1a8] sm:$0xff]
    %v4531 = vld [vmem:[%s7 + $0x1b0] sm:$0xff]
    %v4532 = vld [vmem:[%s7 + $0x1b8] sm:$0xff]
    %v4533 = vld [vmem:[%s7 + $0x1c0] sm:$0xff]
    %v4534 = vld [vmem:[%s7 + $0x1c8] sm:$0xff]
    %v4535 = vld [vmem:[%s7 + $0x1d0] sm:$0xff]
    %v4536 = vld [vmem:[%s7 + $0x1d8] sm:$0xff]
    %v4537 = vld [vmem:[%s7 + $0x1e0] sm:$0xff]
    %v4538 = vld [vmem:[%s7 + $0x1e8] sm:$0xff]
    %v4539 = vld [vmem:[%s7 + $0x1f0] sm:$0xff]
    %v4540 = vld [vmem:[%s7 + $0x1f8] sm:$0xff]
    %v4541 = vld [vmem:[%s7 + $0x200] sm:$0xff]
    %v4542 = vld [vmem:[%s7 + $0x208] sm:$0xff]
    %v4543 = vld [vmem:[%s7 + $0x210] sm:$0xff]
    %v4544 = vld [vmem:[%s7 + $0x218] sm:$0xff]
    %v4545 = vld [vmem:[%s7 + $0x220] sm:$0xff]
    %v4546 = vld [vmem:[%s7 + $0x228] sm:$0xff]
    %v4547 = vld [vmem:[%s7 + $0x230] sm:$0xff]
    %v4548 = vld [vmem:[%s7 + $0x238] sm:$0xff]
    %v4549 = vld [vmem:[%s7 + $0x240] sm:$0xff]
    %v4550 = vld [vmem:[%s7 + $0x248] sm:$0xff]
    %v4551 = vld [vmem:[%s7 + $0x250] sm:$0xff]
    %v4552 = vld [vmem:[%s7 + $0x258] sm:$0xff]
    %v4553 = vld [vmem:[%s7 + $0x260] sm:$0xff]
    %v4554 = vld [vmem:[%s7 + $0x268] sm:$0xff]
    %v4555 = vld [vmem:[%s7 + $0x270] sm:$0xff]
    %v4556 = vld [vmem:[%s7 + $0x278] sm:$0xff]
    %v4557 = vld [vmem:[%s7 + $0x280] sm:$0xff]
    %v4558 = vld [vmem:[%s7 + $0x288] sm:$0xff]
    %v4559 = vld [vmem:[%s7 + $0x290] sm:$0xff]
    %v4560 = vld [vmem:[%s7 + $0x298] sm:$0xff]
    %v4561 = vld [vmem:[%s7 + $0x2a0] sm:$0xff]
    %v4562 = vld [vmem:[%s7 + $0x2a8] sm:$0xff]
    %v4563 = vld [vmem:[%s7 + $0x2b0] sm:$0xff]
    %v4564 = vld [vmem:[%s7 + $0x2b8] sm:$0xff]
    %v4565 = vld [vmem:[%s7 + $0x2c0] sm:$0xff]
    %v4566 = vld [vmem:[%s7 + $0x2c8] sm:$0xff]
    %v4567 = vld [vmem:[%s7 + $0x2d0] sm:$0xff]
    %v4568 = vld [vmem:[%s7 + $0x2d8] sm:$0xff]
    %v4569 = vld [vmem:[%s7 + $0x2e0] sm:$0xff]
    %v4570 = vld [vmem:[%s7 + $0x2e8] sm:$0xff]
    %v4571 = vld [vmem:[%s7 + $0x2f0] sm:$0xff]
    %v4572 = vld [vmem:[%s7 + $0x2f8] sm:$0xff]
    %v4573 = vld [vmem:[%s7 + $0x300] sm:$0xff]
    %v4574 = vld [vmem:[%s7 + $0x308] sm:$0xff]
    %v4575 = vld [vmem:[%s7 + $0x310] sm:$0xff]
    %v4576 = vld [vmem:[%s7 + $0x318] sm:$0xff]
    %v4577 = vld [vmem:[%s7 + $0x320] sm:$0xff]
    %v4578 = vld [vmem:[%s7 + $0x328] sm:$0xff]
    %v4579 = vld [vmem:[%s7 + $0x330] sm:$0xff]
    %v4580 = vld [vmem:[%s7 + $0x338] sm:$0xff]
    %v4581 = vld [vmem:[%s7 + $0x340] sm:$0xff]
    %v4582 = vld [vmem:[%s7 + $0x348] sm:$0xff]
    %v4583 = vld [vmem:[%s7 + $0x350] sm:$0xff]
    %v4584 = vld [vmem:[%s7 + $0x358] sm:$0xff]
    %v4585 = vld [vmem:[%s7 + $0x360] sm:$0xff]
    %v4586 = vld [vmem:[%s7 + $0x368] sm:$0xff]
    %v4587 = vld [vmem:[%s7 + $0x370] sm:$0xff]
    %v4588 = vld [vmem:[%s7 + $0x378] sm:$0xff]
    %v4589 = vld [vmem:[%s7 + $0x380] sm:$0xff]
    %v4590 = vld [vmem:[%s7 + $0x388] sm:$0xff]
    %v4591 = vld [vmem:[%s7 + $0x390] sm:$0xff]
    %v4592 = vld [vmem:[%s7 + $0x398] sm:$0xff]
    %v4593 = vld [vmem:[%s7 + $0x3a0] sm:$0xff]
    %v4594 = vld [vmem:[%s7 + $0x3a8] sm:$0xff]
    %v4595 = vld [vmem:[%s7 + $0x3b0] sm:$0xff]
    %v4596 = vld [vmem:[%s7 + $0x3b8] sm:$0xff]
    %v4597 = vld [vmem:[%s7 + $0x3c0] sm:$0xff]
    %v4598 = vld [vmem:[%s7 + $0x3c8] sm:$0xff]
    %v4599 = vld [vmem:[%s7 + $0x3d0] sm:$0xff]
    %v4600 = vld [vmem:[%s7 + $0x3d8] sm:$0xff]
    %v4601 = vld [vmem:[%s7 + $0x3e0] sm:$0xff]
    %v4602 = vld [vmem:[%s7 + $0x3e8] sm:$0xff]
    %v4603 = vld [vmem:[%s7 + $0x3f0] sm:$0xff]
    %v4604 = vld [vmem:[%s7 + $0x3f8] sm:$0xff]
    %v4605 = vld [vmem:[%s8] sm:$0xf]
    %v4607 = vlaneseq
    %v4608 = vshrl.u32 %v4607, 7
    %v4609 = vsub.s32 0, %v4608
    %v4610 = vrot.slane %v4605, %v4609
    %v4611 = vlaneseq
    %v4612 = vshrl.u32 %v4611, 7
    %v4613 = vsub.s32 1, %v4612
    %v4614 = vrot.slane %v4605, %v4613
    %v4615 = vlaneseq
    %v4616 = vshrl.u32 %v4615, 7
    %v4617 = vsub.s32 2, %v4616
    %v4618 = vrot.slane %v4605, %v4617
    %v4619 = vlaneseq
    %v4620 = vshrl.u32 %v4619, 7
    %v4621 = vsub.s32 3, %v4620
    %v4622 = vrot.slane %v4605, %v4621
    %v4755 = vunpack.c.l.b16 %v4477
    %v4756 = vunpack.c.h.b16 %v4477
    %v4757 = vunpack.c.l.b16 %v4478
    %v4758 = vunpack.c.h.b16 %v4478
    %v4759 = vunpack.c.l.b16 %v4479
    %v4760 = vunpack.c.h.b16 %v4479
    %v4761 = vunpack.c.l.b16 %v4480
    %v4762 = vunpack.c.h.b16 %v4480
    %v4763 = vunpack.c.l.b16 %v4481
    %v4764 = vunpack.c.h.b16 %v4481
    %v4765 = vunpack.c.l.b16 %v4482
    %v4766 = vunpack.c.h.b16 %v4482
    %v4767 = vunpack.c.l.b16 %v4483
    %v4768 = vunpack.c.h.b16 %v4483
    %v4769 = vunpack.c.l.b16 %v4484
    %v4770 = vunpack.c.h.b16 %v4484
    %v4771 = vunpack.c.l.b16 %v4485
    %v4772 = vunpack.c.h.b16 %v4485
    %v4773 = vunpack.c.l.b16 %v4486
    %v4774 = vunpack.c.h.b16 %v4486
    %v4775 = vunpack.c.l.b16 %v4487
    %v4776 = vunpack.c.h.b16 %v4487
    %v4777 = vunpack.c.l.b16 %v4488
    %v4778 = vunpack.c.h.b16 %v4488
    %v4779 = vunpack.c.l.b16 %v4489
    %v4780 = vunpack.c.h.b16 %v4489
    %v4781 = vunpack.c.l.b16 %v4490
    %v4782 = vunpack.c.h.b16 %v4490
    %v4783 = vunpack.c.l.b16 %v4491
    %v4784 = vunpack.c.h.b16 %v4491
    %v4785 = vunpack.c.l.b16 %v4492
    %v4786 = vunpack.c.h.b16 %v4492
    %v4787 = vunpack.c.l.b16 %v4493
    %v4788 = vunpack.c.h.b16 %v4493
    %v4789 = vunpack.c.l.b16 %v4494
    %v4790 = vunpack.c.h.b16 %v4494
    %v4791 = vunpack.c.l.b16 %v4495
    %v4792 = vunpack.c.h.b16 %v4495
    %v4793 = vunpack.c.l.b16 %v4496
    %v4794 = vunpack.c.h.b16 %v4496
    %v4795 = vunpack.c.l.b16 %v4497
    %v4796 = vunpack.c.h.b16 %v4497
    %v4797 = vunpack.c.l.b16 %v4498
    %v4798 = vunpack.c.h.b16 %v4498
    %v4799 = vunpack.c.l.b16 %v4499
    %v4800 = vunpack.c.h.b16 %v4499
    %v4801 = vunpack.c.l.b16 %v4500
    %v4802 = vunpack.c.h.b16 %v4500
    %v4803 = vunpack.c.l.b16 %v4501
    %v4804 = vunpack.c.h.b16 %v4501
    %v4805 = vunpack.c.l.b16 %v4502
    %v4806 = vunpack.c.h.b16 %v4502
    %v4807 = vunpack.c.l.b16 %v4503
    %v4808 = vunpack.c.h.b16 %v4503
    %v4809 = vunpack.c.l.b16 %v4504
    %v4810 = vunpack.c.h.b16 %v4504
    %v4811 = vunpack.c.l.b16 %v4505
    %v4812 = vunpack.c.h.b16 %v4505
    %v4813 = vunpack.c.l.b16 %v4506
    %v4814 = vunpack.c.h.b16 %v4506
    %v4815 = vunpack.c.l.b16 %v4507
    %v4816 = vunpack.c.h.b16 %v4507
    %v4817 = vunpack.c.l.b16 %v4508
    %v4818 = vunpack.c.h.b16 %v4508
    %v4819 = vunpack.c.l.b16 %v4509
    %v4820 = vunpack.c.h.b16 %v4509
    %v4821 = vunpack.c.l.b16 %v4510
    %v4822 = vunpack.c.h.b16 %v4510
    %v4823 = vunpack.c.l.b16 %v4511
    %v4824 = vunpack.c.h.b16 %v4511
    %v4825 = vunpack.c.l.b16 %v4512
    %v4826 = vunpack.c.h.b16 %v4512
    %v4827 = vunpack.c.l.b16 %v4513
    %v4828 = vunpack.c.h.b16 %v4513
    %v4829 = vunpack.c.l.b16 %v4514
    %v4830 = vunpack.c.h.b16 %v4514
    %v4831 = vunpack.c.l.b16 %v4515
    %v4832 = vunpack.c.h.b16 %v4515
    %v4833 = vunpack.c.l.b16 %v4516
    %v4834 = vunpack.c.h.b16 %v4516
    %v4835 = vunpack.c.l.b16 %v4517
    %v4836 = vunpack.c.h.b16 %v4517
    %v4837 = vunpack.c.l.b16 %v4518
    %v4838 = vunpack.c.h.b16 %v4518
    %v4839 = vunpack.c.l.b16 %v4519
    %v4840 = vunpack.c.h.b16 %v4519
    %v4841 = vunpack.c.l.b16 %v4520
    %v4842 = vunpack.c.h.b16 %v4520
    %v4843 = vunpack.c.l.b16 %v4521
    %v4844 = vunpack.c.h.b16 %v4521
    %v4845 = vunpack.c.l.b16 %v4522
    %v4846 = vunpack.c.h.b16 %v4522
    %v4847 = vunpack.c.l.b16 %v4523
    %v4848 = vunpack.c.h.b16 %v4523
    %v4849 = vunpack.c.l.b16 %v4524
    %v4850 = vunpack.c.h.b16 %v4524
    %v4851 = vunpack.c.l.b16 %v4525
    %v4852 = vunpack.c.h.b16 %v4525
    %v4853 = vunpack.c.l.b16 %v4526
    %v4854 = vunpack.c.h.b16 %v4526
    %v4855 = vunpack.c.l.b16 %v4527
    %v4856 = vunpack.c.h.b16 %v4527
    %v4857 = vunpack.c.l.b16 %v4528
    %v4858 = vunpack.c.h.b16 %v4528
    %v4859 = vunpack.c.l.b16 %v4529
    %v4860 = vunpack.c.h.b16 %v4529
    %v4861 = vunpack.c.l.b16 %v4530
    %v4862 = vunpack.c.h.b16 %v4530
    %v4863 = vunpack.c.l.b16 %v4531
    %v4864 = vunpack.c.h.b16 %v4531
    %v4865 = vunpack.c.l.b16 %v4532
    %v4866 = vunpack.c.h.b16 %v4532
    %v4867 = vunpack.c.l.b16 %v4533
    %v4868 = vunpack.c.h.b16 %v4533
    %v4869 = vunpack.c.l.b16 %v4534
    %v4870 = vunpack.c.h.b16 %v4534
    %v4871 = vunpack.c.l.b16 %v4535
    %v4872 = vunpack.c.h.b16 %v4535
    %v4873 = vunpack.c.l.b16 %v4536
    %v4874 = vunpack.c.h.b16 %v4536
    %v4875 = vunpack.c.l.b16 %v4537
    %v4876 = vunpack.c.h.b16 %v4537
    %v4877 = vunpack.c.l.b16 %v4538
    %v4878 = vunpack.c.h.b16 %v4538
    %v4879 = vunpack.c.l.b16 %v4539
    %v4880 = vunpack.c.h.b16 %v4539
    %v4881 = vunpack.c.l.b16 %v4540
    %v4882 = vunpack.c.h.b16 %v4540
    %v4883 = vunpack.c.l.b16 %v4541
    %v4884 = vunpack.c.h.b16 %v4541
    %v4885 = vunpack.c.l.b16 %v4542
    %v4886 = vunpack.c.h.b16 %v4542
    %v4887 = vunpack.c.l.b16 %v4543
    %v4888 = vunpack.c.h.b16 %v4543
    %v4889 = vunpack.c.l.b16 %v4544
    %v4890 = vunpack.c.h.b16 %v4544
    %v4891 = vunpack.c.l.b16 %v4545
    %v4892 = vunpack.c.h.b16 %v4545
    %v4893 = vunpack.c.l.b16 %v4546
    %v4894 = vunpack.c.h.b16 %v4546
    %v4895 = vunpack.c.l.b16 %v4547
    %v4896 = vunpack.c.h.b16 %v4547
    %v4897 = vunpack.c.l.b16 %v4548
    %v4898 = vunpack.c.h.b16 %v4548
    %v4899 = vunpack.c.l.b16 %v4549
    %v4900 = vunpack.c.h.b16 %v4549
    %v4901 = vunpack.c.l.b16 %v4550
    %v4902 = vunpack.c.h.b16 %v4550
    %v4903 = vunpack.c.l.b16 %v4551
    %v4904 = vunpack.c.h.b16 %v4551
    %v4905 = vunpack.c.l.b16 %v4552
    %v4906 = vunpack.c.h.b16 %v4552
    %v4907 = vunpack.c.l.b16 %v4553
    %v4908 = vunpack.c.h.b16 %v4553
    %v4909 = vunpack.c.l.b16 %v4554
    %v4910 = vunpack.c.h.b16 %v4554
    %v4911 = vunpack.c.l.b16 %v4555
    %v4912 = vunpack.c.h.b16 %v4555
    %v4913 = vunpack.c.l.b16 %v4556
    %v4914 = vunpack.c.h.b16 %v4556
    %v4915 = vunpack.c.l.b16 %v4557
    %v4916 = vunpack.c.h.b16 %v4557
    %v4917 = vunpack.c.l.b16 %v4558
    %v4918 = vunpack.c.h.b16 %v4558
    %v4919 = vunpack.c.l.b16 %v4559
    %v4920 = vunpack.c.h.b16 %v4559
    %v4921 = vunpack.c.l.b16 %v4560
    %v4922 = vunpack.c.h.b16 %v4560
    %v4923 = vunpack.c.l.b16 %v4561
    %v4924 = vunpack.c.h.b16 %v4561
    %v4925 = vunpack.c.l.b16 %v4562
    %v4926 = vunpack.c.h.b16 %v4562
    %v4927 = vunpack.c.l.b16 %v4563
    %v4928 = vunpack.c.h.b16 %v4563
    %v4929 = vunpack.c.l.b16 %v4564
    %v4930 = vunpack.c.h.b16 %v4564
    %v4931 = vunpack.c.l.b16 %v4565
    %v4932 = vunpack.c.h.b16 %v4565
    %v4933 = vunpack.c.l.b16 %v4566
    %v4934 = vunpack.c.h.b16 %v4566
    %v4935 = vunpack.c.l.b16 %v4567
    %v4936 = vunpack.c.h.b16 %v4567
    %v4937 = vunpack.c.l.b16 %v4568
    %v4938 = vunpack.c.h.b16 %v4568
    %v4939 = vunpack.c.l.b16 %v4569
    %v4940 = vunpack.c.h.b16 %v4569
    %v4941 = vunpack.c.l.b16 %v4570
    %v4942 = vunpack.c.h.b16 %v4570
    %v4943 = vunpack.c.l.b16 %v4571
    %v4944 = vunpack.c.h.b16 %v4571
    %v4945 = vunpack.c.l.b16 %v4572
    %v4946 = vunpack.c.h.b16 %v4572
    %v4947 = vunpack.c.l.b16 %v4573
    %v4948 = vunpack.c.h.b16 %v4573
    %v4949 = vunpack.c.l.b16 %v4574
    %v4950 = vunpack.c.h.b16 %v4574
    %v4951 = vunpack.c.l.b16 %v4575
    %v4952 = vunpack.c.h.b16 %v4575
    %v4953 = vunpack.c.l.b16 %v4576
    %v4954 = vunpack.c.h.b16 %v4576
    %v4955 = vunpack.c.l.b16 %v4577
    %v4956 = vunpack.c.h.b16 %v4577
    %v4957 = vunpack.c.l.b16 %v4578
    %v4958 = vunpack.c.h.b16 %v4578
    %v4959 = vunpack.c.l.b16 %v4579
    %v4960 = vunpack.c.h.b16 %v4579
    %v4961 = vunpack.c.l.b16 %v4580
    %v4962 = vunpack.c.h.b16 %v4580
    %v4963 = vunpack.c.l.b16 %v4581
    %v4964 = vunpack.c.h.b16 %v4581
    %v4965 = vunpack.c.l.b16 %v4582
    %v4966 = vunpack.c.h.b16 %v4582
    %v4967 = vunpack.c.l.b16 %v4583
    %v4968 = vunpack.c.h.b16 %v4583
    %v4969 = vunpack.c.l.b16 %v4584
    %v4970 = vunpack.c.h.b16 %v4584
    %v4971 = vunpack.c.l.b16 %v4585
    %v4972 = vunpack.c.h.b16 %v4585
    %v4973 = vunpack.c.l.b16 %v4586
    %v4974 = vunpack.c.h.b16 %v4586
    %v4975 = vunpack.c.l.b16 %v4587
    %v4976 = vunpack.c.h.b16 %v4587
    %v4977 = vunpack.c.l.b16 %v4588
    %v4978 = vunpack.c.h.b16 %v4588
    %v4979 = vunpack.c.l.b16 %v4589
    %v4980 = vunpack.c.h.b16 %v4589
    %v4981 = vunpack.c.l.b16 %v4590
    %v4982 = vunpack.c.h.b16 %v4590
    %v4983 = vunpack.c.l.b16 %v4591
    %v4984 = vunpack.c.h.b16 %v4591
    %v4985 = vunpack.c.l.b16 %v4592
    %v4986 = vunpack.c.h.b16 %v4592
    %v4987 = vunpack.c.l.b16 %v4593
    %v4988 = vunpack.c.h.b16 %v4593
    %v4989 = vunpack.c.l.b16 %v4594
    %v4990 = vunpack.c.h.b16 %v4594
    %v4991 = vunpack.c.l.b16 %v4595
    %v4992 = vunpack.c.h.b16 %v4595
    %v4993 = vunpack.c.l.b16 %v4596
    %v4994 = vunpack.c.h.b16 %v4596
    %v4995 = vunpack.c.l.b16 %v4597
    %v4996 = vunpack.c.h.b16 %v4597
    %v4997 = vunpack.c.l.b16 %v4598
    %v4998 = vunpack.c.h.b16 %v4598
    %v4999 = vunpack.c.l.b16 %v4599
    %v5000 = vunpack.c.h.b16 %v4599
    %v5001 = vunpack.c.l.b16 %v4600
    %v5002 = vunpack.c.h.b16 %v4600
    %v5003 = vunpack.c.l.b16 %v4601
    %v5004 = vunpack.c.h.b16 %v4601
    %v5005 = vunpack.c.l.b16 %v4602
    %v5006 = vunpack.c.h.b16 %v4602
    %v5007 = vunpack.c.l.b16 %v4603
    %v5008 = vunpack.c.h.b16 %v4603
    %v5009 = vunpack.c.l.b16 %v4604
    %v5010 = vunpack.c.h.b16 %v4604
    %v5011 = vpack.c.b16 %v4759, %v4755
    %v5012 = vpack.c.b16 %v4760, %v4756
    %v5013 = vpack.c.b16 %v4761, %v4757
    %v5014 = vpack.c.b16 %v4762, %v4758
    %v5015 = vpack.c.b16 %v4767, %v4763
    %v5016 = vpack.c.b16 %v4768, %v4764
    %v5017 = vpack.c.b16 %v4769, %v4765
    %v5018 = vpack.c.b16 %v4770, %v4766
    %v5019 = vpack.c.b16 %v4775, %v4771
    %v5020 = vpack.c.b16 %v4776, %v4772
    %v5021 = vpack.c.b16 %v4777, %v4773
    %v5022 = vpack.c.b16 %v4778, %v4774
    %v5023 = vpack.c.b16 %v4783, %v4779
    %v5024 = vpack.c.b16 %v4784, %v4780
    %v5025 = vpack.c.b16 %v4785, %v4781
    %v5026 = vpack.c.b16 %v4786, %v4782
    %v5027 = vpack.c.b16 %v4791, %v4787
    %v5028 = vpack.c.b16 %v4792, %v4788
    %v5029 = vpack.c.b16 %v4793, %v4789
    %v5030 = vpack.c.b16 %v4794, %v4790
    %v5031 = vpack.c.b16 %v4799, %v4795
    %v5032 = vpack.c.b16 %v4800, %v4796
    %v5033 = vpack.c.b16 %v4801, %v4797
    %v5034 = vpack.c.b16 %v4802, %v4798
    %v5035 = vpack.c.b16 %v4807, %v4803
    %v5036 = vpack.c.b16 %v4808, %v4804
    %v5037 = vpack.c.b16 %v4809, %v4805
    %v5038 = vpack.c.b16 %v4810, %v4806
    %v5039 = vpack.c.b16 %v4815, %v4811
    %v5040 = vpack.c.b16 %v4816, %v4812
    %v5041 = vpack.c.b16 %v4817, %v4813
    %v5042 = vpack.c.b16 %v4818, %v4814
    %v5043 = vpack.c.b16 %v4823, %v4819
    %v5044 = vpack.c.b16 %v4824, %v4820
    %v5045 = vpack.c.b16 %v4825, %v4821
    %v5046 = vpack.c.b16 %v4826, %v4822
    %v5047 = vpack.c.b16 %v4831, %v4827
    %v5048 = vpack.c.b16 %v4832, %v4828
    %v5049 = vpack.c.b16 %v4833, %v4829
    %v5050 = vpack.c.b16 %v4834, %v4830
    %v5051 = vpack.c.b16 %v4839, %v4835
    %v5052 = vpack.c.b16 %v4840, %v4836
    %v5053 = vpack.c.b16 %v4841, %v4837
    %v5054 = vpack.c.b16 %v4842, %v4838
    %v5055 = vpack.c.b16 %v4847, %v4843
    %v5056 = vpack.c.b16 %v4848, %v4844
    %v5057 = vpack.c.b16 %v4849, %v4845
    %v5058 = vpack.c.b16 %v4850, %v4846
    %v5059 = vpack.c.b16 %v4855, %v4851
    %v5060 = vpack.c.b16 %v4856, %v4852
    %v5061 = vpack.c.b16 %v4857, %v4853
    %v5062 = vpack.c.b16 %v4858, %v4854
    %v5063 = vpack.c.b16 %v4863, %v4859
    %v5064 = vpack.c.b16 %v4864, %v4860
    %v5065 = vpack.c.b16 %v4865, %v4861
    %v5066 = vpack.c.b16 %v4866, %v4862
    %v5067 = vpack.c.b16 %v4871, %v4867
    %v5068 = vpack.c.b16 %v4872, %v4868
    %v5069 = vpack.c.b16 %v4873, %v4869
    %v5070 = vpack.c.b16 %v4874, %v4870
    %v5071 = vpack.c.b16 %v4879, %v4875
    %v5072 = vpack.c.b16 %v4880, %v4876
    %v5073 = vpack.c.b16 %v4881, %v4877
    %v5074 = vpack.c.b16 %v4882, %v4878
    %v5075 = vpack.c.b16 %v4887, %v4883
    %v5076 = vpack.c.b16 %v4888, %v4884
    %v5077 = vpack.c.b16 %v4889, %v4885
    %v5078 = vpack.c.b16 %v4890, %v4886
    %v5079 = vpack.c.b16 %v4895, %v4891
    %v5080 = vpack.c.b16 %v4896, %v4892
    %v5081 = vpack.c.b16 %v4897, %v4893
    %v5082 = vpack.c.b16 %v4898, %v4894
    %v5083 = vpack.c.b16 %v4903, %v4899
    %v5084 = vpack.c.b16 %v4904, %v4900
    %v5085 = vpack.c.b16 %v4905, %v4901
    %v5086 = vpack.c.b16 %v4906, %v4902
    %v5087 = vpack.c.b16 %v4911, %v4907
    %v5088 = vpack.c.b16 %v4912, %v4908
    %v5089 = vpack.c.b16 %v4913, %v4909
    %v5090 = vpack.c.b16 %v4914, %v4910
    %v5091 = vpack.c.b16 %v4919, %v4915
    %v5092 = vpack.c.b16 %v4920, %v4916
    %v5093 = vpack.c.b16 %v4921, %v4917
    %v5094 = vpack.c.b16 %v4922, %v4918
    %v5095 = vpack.c.b16 %v4927, %v4923
    %v5096 = vpack.c.b16 %v4928, %v4924
    %v5097 = vpack.c.b16 %v4929, %v4925
    %v5098 = vpack.c.b16 %v4930, %v4926
    %v5099 = vpack.c.b16 %v4935, %v4931
    %v5100 = vpack.c.b16 %v4936, %v4932
    %v5101 = vpack.c.b16 %v4937, %v4933
    %v5102 = vpack.c.b16 %v4938, %v4934
    %v5103 = vpack.c.b16 %v4943, %v4939
    %v5104 = vpack.c.b16 %v4944, %v4940
    %v5105 = vpack.c.b16 %v4945, %v4941
    %v5106 = vpack.c.b16 %v4946, %v4942
    %v5107 = vpack.c.b16 %v4951, %v4947
    %v5108 = vpack.c.b16 %v4952, %v4948
    %v5109 = vpack.c.b16 %v4953, %v4949
    %v5110 = vpack.c.b16 %v4954, %v4950
    %v5111 = vpack.c.b16 %v4959, %v4955
    %v5112 = vpack.c.b16 %v4960, %v4956
    %v5113 = vpack.c.b16 %v4961, %v4957
    %v5114 = vpack.c.b16 %v4962, %v4958
    %v5115 = vpack.c.b16 %v4967, %v4963
    %v5116 = vpack.c.b16 %v4968, %v4964
    %v5117 = vpack.c.b16 %v4969, %v4965
    %v5118 = vpack.c.b16 %v4970, %v4966
    %v5119 = vpack.c.b16 %v4975, %v4971
    %v5120 = vpack.c.b16 %v4976, %v4972
    %v5121 = vpack.c.b16 %v4977, %v4973
    %v5122 = vpack.c.b16 %v4978, %v4974
    %v5123 = vpack.c.b16 %v4983, %v4979
    %v5124 = vpack.c.b16 %v4984, %v4980
    %v5125 = vpack.c.b16 %v4985, %v4981
    %v5126 = vpack.c.b16 %v4986, %v4982
    %v5127 = vpack.c.b16 %v4991, %v4987
    %v5128 = vpack.c.b16 %v4992, %v4988
    %v5129 = vpack.c.b16 %v4993, %v4989
    %v5130 = vpack.c.b16 %v4994, %v4990
    %v5131 = vpack.c.b16 %v4999, %v4995
    %v5132 = vpack.c.b16 %v5000, %v4996
    %v5133 = vpack.c.b16 %v5001, %v4997
    %v5134 = vpack.c.b16 %v5002, %v4998
    %v5135 = vpack.c.b16 %v5007, %v5003
    %v5136 = vpack.c.b16 %v5008, %v5004
    %v5137 = vpack.c.b16 %v5009, %v5005
    %v5138 = vpack.c.b16 %v5010, %v5006
    %5267 = vmatprep.subr.bf16.mxu0 %v5040
    %5268 = vmatpush1.bf16.msra.mxu0 %v5039
    %5269 = vmatprep.subr.bf16.mxu0 %v5036
    %5270 = vmatpush1.bf16.msra.mxu0 %v5035
    %5271 = vmatprep.subr.bf16.mxu0 %v5032
    %5272 = vmatpush1.bf16.msra.mxu0 %v5031
    %5273 = vmatprep.subr.bf16.mxu0 %v5028
    %5274 = vmatpush1.bf16.msra.mxu0 %v5027
    %5275 = vmatprep.subr.bf16.mxu0 %v5024
    %5276 = vmatpush1.bf16.msra.mxu0 %v5023
    %5277 = vmatprep.subr.bf16.mxu0 %v5020
    %5278 = vmatpush1.bf16.msra.mxu0 %v5019
    %5279 = vmatprep.subr.bf16.mxu0 %v5016
    %5280 = vmatpush1.bf16.msra.mxu0 %v5015
    %5281 = vmatprep.subr.bf16.mxu0 %v5012
    %5282 = vmatpush1.bf16.msra.mxu0 %v5011
    %5283 = vmatprep.subr.bf16.mxu0 %v5072
    %5284 = vmatpush2.bf16.msra.mxu0 %v5071
    %5285 = vmatprep.subr.bf16.mxu0 %v5068
    %5286 = vmatpush2.bf16.msra.mxu0 %v5067
    %5287 = vmatprep.subr.bf16.mxu0 %v5064
    %5288 = vmatpush2.bf16.msra.mxu0 %v5063
    %5289 = vmatprep.subr.bf16.mxu0 %v5060
    %5290 = vmatpush2.bf16.msra.mxu0 %v5059
    %5291 = vmatprep.subr.bf16.mxu0 %v5056
    %5292 = vmatpush2.bf16.msra.mxu0 %v5055
    %5293 = vmatprep.subr.bf16.mxu0 %v5052
    %5294 = vmatpush2.bf16.msra.mxu0 %v5051
    %5295 = vmatprep.subr.bf16.mxu0 %v5048
    %5296 = vmatpush2.bf16.msra.mxu0 %v5047
    %5297 = vmatprep.subr.bf16.mxu0 %v5044
    %5298 = vmatpush2.bf16.msra.mxu0 %v5043
    %5299 = vmatprep.mubr.bf16.mxu0 %v4446
    %5300 = vmatmul.mubr.bf16.gmra.mxu0 %v4445
    %v5301 = vpop.f32.mrf.mxu0
    %v5302 = vadd.f32 %v4610, %v5301
    %v5303 = vpop.f32.mrf.mxu0
    %v5304 = vadd.f32 %v4614, %v5303
    %v5305 = vpop.f32.mrf.mxu0
    %v5306 = vadd.f32 %v4610, %v5305
    %v5307 = vpop.f32.mrf.mxu0
    %v5308 = vadd.f32 %v4614, %v5307
    %5309 = vmatprep.mubr.bf16.mxu0 %v4450
    %5310 = vmatmul.mubr.bf16.gmra.mxu0 %v4449
    %v5311 = vpop.f32.mrf.mxu0
    %v5312 = vadd.f32 %v4610, %v5311
    %v5313 = vpop.f32.mrf.mxu0
    %v5314 = vadd.f32 %v4614, %v5313
    %v5315 = vpop.f32.mrf.mxu0
    %v5316 = vadd.f32 %v4610, %v5315
    %v5317 = vpop.f32.mrf.mxu0
    %v5318 = vadd.f32 %v4614, %v5317
    %5319 = vmatprep.mubr.bf16.mxu0 %v4454
    %5320 = vmatmul.mubr.bf16.gmra.mxu0 %v4453
    %v5321 = vpop.f32.mrf.mxu0
    %v5322 = vadd.f32 %v4610, %v5321
    %v5323 = vpop.f32.mrf.mxu0
    %v5324 = vadd.f32 %v4614, %v5323
    %v5325 = vpop.f32.mrf.mxu0
    %v5326 = vadd.f32 %v4610, %v5325
    %v5327 = vpop.f32.mrf.mxu0
    %v5328 = vadd.f32 %v4614, %v5327
    %5329 = vmatprep.mubr.bf16.mxu0 %v4458
    %5330 = vmatmul.mubr.bf16.gmra.mxu0 %v4457
    %v5331 = vpop.f32.mrf.mxu0
    %v5332 = vadd.f32 %v4610, %v5331
    %v5333 = vpop.f32.mrf.mxu0
    %v5334 = vadd.f32 %v4614, %v5333
    %v5335 = vpop.f32.mrf.mxu0
    %v5336 = vadd.f32 %v4610, %v5335
    %v5337 = vpop.f32.mrf.mxu0
    %v5338 = vadd.f32 %v4614, %v5337
    %5339 = vmatprep.mubr.bf16.mxu0 %v4462
    %5340 = vmatmul.mubr.bf16.gmra.mxu0 %v4461
    %v5341 = vpop.f32.mrf.mxu0
    %v5342 = vadd.f32 %v4610, %v5341
    %v5343 = vpop.f32.mrf.mxu0
    %v5344 = vadd.f32 %v4614, %v5343
    %v5345 = vpop.f32.mrf.mxu0
    %v5346 = vadd.f32 %v4610, %v5345
    %v5347 = vpop.f32.mrf.mxu0
    %v5348 = vadd.f32 %v4614, %v5347
    %5349 = vmatprep.mubr.bf16.mxu0 %v4466
    %5350 = vmatmul.mubr.bf16.gmra.mxu0 %v4465
    %v5351 = vpop.f32.mrf.mxu0
    %v5352 = vadd.f32 %v4610, %v5351
    %v5353 = vpop.f32.mrf.mxu0
    %v5354 = vadd.f32 %v4614, %v5353
    %v5355 = vpop.f32.mrf.mxu0
    %v5356 = vadd.f32 %v4610, %v5355
    %v5357 = vpop.f32.mrf.mxu0
    %v5358 = vadd.f32 %v4614, %v5357
    %5359 = vmatprep.mubr.bf16.mxu0 %v4470
    %5360 = vmatmul.mubr.bf16.gmra.mxu0 %v4469
    %v5361 = vpop.f32.mrf.mxu0
    %v5362 = vadd.f32 %v4610, %v5361
    %v5363 = vpop.f32.mrf.mxu0
    %v5364 = vadd.f32 %v4614, %v5363
    %v5365 = vpop.f32.mrf.mxu0
    %v5366 = vadd.f32 %v4610, %v5365
    %v5367 = vpop.f32.mrf.mxu0
    %v5368 = vadd.f32 %v4614, %v5367
    %5369 = vmatprep.mubr.bf16.mxu0 %v4474
    %5370 = vmatmul.mubr.bf16.gmra.mxu0 %v4473
    %v5371 = vpop.f32.mrf.mxu0
    %v5372 = vadd.f32 %v4610, %v5371
    %v5373 = vpop.f32.mrf.mxu0
    %v5374 = vadd.f32 %v4614, %v5373
    %v5375 = vpop.f32.mrf.mxu0
    %v5376 = vadd.f32 %v4610, %v5375
    %v5377 = vpop.f32.mrf.mxu0
    %v5378 = vadd.f32 %v4614, %v5377
    %5379 = vdwg.mxu0
    %5380 = vmatprep.subr.bf16.mxu0 %v5104
    %5381 = vmatpush1.bf16.msra.mxu0 %v5103
    %5382 = vmatprep.subr.bf16.mxu0 %v5100
    %5383 = vmatpush1.bf16.msra.mxu0 %v5099
    %5384 = vmatprep.subr.bf16.mxu0 %v5096
    %5385 = vmatpush1.bf16.msra.mxu0 %v5095
    %5386 = vmatprep.subr.bf16.mxu0 %v5092
    %5387 = vmatpush1.bf16.msra.mxu0 %v5091
    %5388 = vmatprep.subr.bf16.mxu0 %v5088
    %5389 = vmatpush1.bf16.msra.mxu0 %v5087
    %5390 = vmatprep.subr.bf16.mxu0 %v5084
    %5391 = vmatpush1.bf16.msra.mxu0 %v5083
    %5392 = vmatprep.subr.bf16.mxu0 %v5080
    %5393 = vmatpush1.bf16.msra.mxu0 %v5079
    %5394 = vmatprep.subr.bf16.mxu0 %v5076
    %5395 = vmatpush1.bf16.msra.mxu0 %v5075
    %5396 = vmatprep.subr.bf16.mxu0 %v5136
    %5397 = vmatpush2.bf16.msra.mxu0 %v5135
    %5398 = vmatprep.subr.bf16.mxu0 %v5132
    %5399 = vmatpush2.bf16.msra.mxu0 %v5131
    %5400 = vmatprep.subr.bf16.mxu0 %v5128
    %5401 = vmatpush2.bf16.msra.mxu0 %v5127
    %5402 = vmatprep.subr.bf16.mxu0 %v5124
    %5403 = vmatpush2.bf16.msra.mxu0 %v5123
    %5404 = vmatprep.subr.bf16.mxu0 %v5120
    %5405 = vmatpush2.bf16.msra.mxu0 %v5119
    %5406 = vmatprep.subr.bf16.mxu0 %v5116
    %5407 = vmatpush2.bf16.msra.mxu0 %v5115
    %5408 = vmatprep.subr.bf16.mxu0 %v5112
    %5409 = vmatpush2.bf16.msra.mxu0 %v5111
    %5410 = vmatprep.subr.bf16.mxu0 %v5108
    %5411 = vmatpush2.bf16.msra.mxu0 %v5107
    %5412 = vmatprep.mubr.bf16.mxu0 %v4448
    %5413 = vmatmul.mubr.bf16.gmra.mxu0 %v4447
    %v5414 = vpop.f32.mrf.mxu0
    %v5415 = vadd.f32 %v5302, %v5414
    %v5416 = vpop.f32.mrf.mxu0
    %v5417 = vadd.f32 %v5304, %v5416
    %v5418 = vpop.f32.mrf.mxu0
    %v5419 = vadd.f32 %v5306, %v5418
    %v5420 = vpop.f32.mrf.mxu0
    %v5421 = vadd.f32 %v5308, %v5420
    %5422 = vmatprep.mubr.bf16.mxu0 %v4452
    %5423 = vmatmul.mubr.bf16.gmra.mxu0 %v4451
    %v5424 = vpop.f32.mrf.mxu0
    %v5425 = vadd.f32 %v5312, %v5424
    %v5426 = vpop.f32.mrf.mxu0
    %v5427 = vadd.f32 %v5314, %v5426
    %v5428 = vpop.f32.mrf.mxu0
    %v5429 = vadd.f32 %v5316, %v5428
    %v5430 = vpop.f32.mrf.mxu0
    %v5431 = vadd.f32 %v5318, %v5430
    %5432 = vmatprep.mubr.bf16.mxu0 %v4456
    %5433 = vmatmul.mubr.bf16.gmra.mxu0 %v4455
    %v5434 = vpop.f32.mrf.mxu0
    %v5435 = vadd.f32 %v5322, %v5434
    %v5436 = vpop.f32.mrf.mxu0
    %v5437 = vadd.f32 %v5324, %v5436
    %v5438 = vpop.f32.mrf.mxu0
    %v5439 = vadd.f32 %v5326, %v5438
    %v5440 = vpop.f32.mrf.mxu0
    %v5441 = vadd.f32 %v5328, %v5440
    %5442 = vmatprep.mubr.bf16.mxu0 %v4460
    %5443 = vmatmul.mubr.bf16.gmra.mxu0 %v4459
    %v5444 = vpop.f32.mrf.mxu0
    %v5445 = vadd.f32 %v5332, %v5444
    %v5446 = vpop.f32.mrf.mxu0
    %v5447 = vadd.f32 %v5334, %v5446
    %v5448 = vpop.f32.mrf.mxu0
    %v5449 = vadd.f32 %v5336, %v5448
    %v5450 = vpop.f32.mrf.mxu0
    %v5451 = vadd.f32 %v5338, %v5450
    %5452 = vmatprep.mubr.bf16.mxu0 %v4464
    %5453 = vmatmul.mubr.bf16.gmra.mxu0 %v4463
    %v5454 = vpop.f32.mrf.mxu0
    %v5455 = vadd.f32 %v5342, %v5454
    %v5456 = vpop.f32.mrf.mxu0
    %v5457 = vadd.f32 %v5344, %v5456
    %v5458 = vpop.f32.mrf.mxu0
    %v5459 = vadd.f32 %v5346, %v5458
    %v5460 = vpop.f32.mrf.mxu0
    %v5461 = vadd.f32 %v5348, %v5460
    %5462 = vmatprep.mubr.bf16.mxu0 %v4468
    %5463 = vmatmul.mubr.bf16.gmra.mxu0 %v4467
    %v5464 = vpop.f32.mrf.mxu0
    %v5465 = vadd.f32 %v5352, %v5464
    %v5466 = vpop.f32.mrf.mxu0
    %v5467 = vadd.f32 %v5354, %v5466
    %v5468 = vpop.f32.mrf.mxu0
    %v5469 = vadd.f32 %v5356, %v5468
    %v5470 = vpop.f32.mrf.mxu0
    %v5471 = vadd.f32 %v5358, %v5470
    %5472 = vmatprep.mubr.bf16.mxu0 %v4472
    %5473 = vmatmul.mubr.bf16.gmra.mxu0 %v4471
    %v5474 = vpop.f32.mrf.mxu0
    %v5475 = vadd.f32 %v5362, %v5474
    %v5476 = vpop.f32.mrf.mxu0
    %v5477 = vadd.f32 %v5364, %v5476
    %v5478 = vpop.f32.mrf.mxu0
    %v5479 = vadd.f32 %v5366, %v5478
    %v5480 = vpop.f32.mrf.mxu0
    %v5481 = vadd.f32 %v5368, %v5480
    %5482 = vmatprep.mubr.bf16.mxu0 %v4476
    %5483 = vmatmul.mubr.bf16.gmra.mxu0 %v4475
    %v5484 = vpop.f32.mrf.mxu0
    %v5485 = vadd.f32 %v5372, %v5484
    %v5486 = vpop.f32.mrf.mxu0
    %v5487 = vadd.f32 %v5374, %v5486
    %v5488 = vpop.f32.mrf.mxu0
    %v5489 = vadd.f32 %v5376, %v5488
    %v5490 = vpop.f32.mrf.mxu0
    %v5491 = vadd.f32 %v5378, %v5490
    %5492 = vdwg.mxu0
    %5493 = vmatprep.subr.bf16.mxu0 %v5042
    %5494 = vmatpush1.bf16.msra.mxu0 %v5041
    %5495 = vmatprep.subr.bf16.mxu0 %v5038
    %5496 = vmatpush1.bf16.msra.mxu0 %v5037
    %5497 = vmatprep.subr.bf16.mxu0 %v5034
    %5498 = vmatpush1.bf16.msra.mxu0 %v5033
    %5499 = vmatprep.subr.bf16.mxu0 %v5030
    %5500 = vmatpush1.bf16.msra.mxu0 %v5029
    %5501 = vmatprep.subr.bf16.mxu0 %v5026
    %5502 = vmatpush1.bf16.msra.mxu0 %v5025
    %5503 = vmatprep.subr.bf16.mxu0 %v5022
    %5504 = vmatpush1.bf16.msra.mxu0 %v5021
    %5505 = vmatprep.subr.bf16.mxu0 %v5018
    %5506 = vmatpush1.bf16.msra.mxu0 %v5017
    %5507 = vmatprep.subr.bf16.mxu0 %v5014
    %5508 = vmatpush1.bf16.msra.mxu0 %v5013
    %5509 = vmatprep.subr.bf16.mxu0 %v5074
    %5510 = vmatpush2.bf16.msra.mxu0 %v5073
    %5511 = vmatprep.subr.bf16.mxu0 %v5070
    %5512 = vmatpush2.bf16.msra.mxu0 %v5069
    %5513 = vmatprep.subr.bf16.mxu0 %v5066
    %5514 = vmatpush2.bf16.msra.mxu0 %v5065
    %5515 = vmatprep.subr.bf16.mxu0 %v5062
    %5516 = vmatpush2.bf16.msra.mxu0 %v5061
    %5517 = vmatprep.subr.bf16.mxu0 %v5058
    %5518 = vmatpush2.bf16.msra.mxu0 %v5057
    %5519 = vmatprep.subr.bf16.mxu0 %v5054
    %5520 = vmatpush2.bf16.msra.mxu0 %v5053
    %5521 = vmatprep.subr.bf16.mxu0 %v5050
    %5522 = vmatpush2.bf16.msra.mxu0 %v5049
    %5523 = vmatprep.subr.bf16.mxu0 %v5046
    %5524 = vmatpush2.bf16.msra.mxu0 %v5045
    %5525 = vmatprep.mubr.bf16.mxu0 %v4446
    %5526 = vmatmul.mubr.bf16.gmra.mxu0 %v4445
    %v5527 = vpop.f32.mrf.mxu0
    %v5528 = vadd.f32 %v4618, %v5527
    %v5529 = vpop.f32.mrf.mxu0
    %v5530 = vadd.f32 %v4622, %v5529
    %v5531 = vpop.f32.mrf.mxu0
    %v5532 = vadd.f32 %v4618, %v5531
    %v5533 = vpop.f32.mrf.mxu0
    %v5534 = vadd.f32 %v4622, %v5533
    %5535 = vmatprep.mubr.bf16.mxu0 %v4450
    %5536 = vmatmul.mubr.bf16.gmra.mxu0 %v4449
    %v5537 = vpop.f32.mrf.mxu0
    %v5538 = vadd.f32 %v4618, %v5537
    %v5539 = vpop.f32.mrf.mxu0
    %v5540 = vadd.f32 %v4622, %v5539
    %v5541 = vpop.f32.mrf.mxu0
    %v5542 = vadd.f32 %v4618, %v5541
    %v5543 = vpop.f32.mrf.mxu0
    %v5544 = vadd.f32 %v4622, %v5543
    %5545 = vmatprep.mubr.bf16.mxu0 %v4454
    %5546 = vmatmul.mubr.bf16.gmra.mxu0 %v4453
    %v5547 = vpop.f32.mrf.mxu0
    %v5548 = vadd.f32 %v4618, %v5547
    %v5549 = vpop.f32.mrf.mxu0
    %v5550 = vadd.f32 %v4622, %v5549
    %v5551 = vpop.f32.mrf.mxu0
    %v5552 = vadd.f32 %v4618, %v5551
    %v5553 = vpop.f32.mrf.mxu0
    %v5554 = vadd.f32 %v4622, %v5553
    %5555 = vmatprep.mubr.bf16.mxu0 %v4458
    %5556 = vmatmul.mubr.bf16.gmra.mxu0 %v4457
    %v5557 = vpop.f32.mrf.mxu0
    %v5558 = vadd.f32 %v4618, %v5557
    %v5559 = vpop.f32.mrf.mxu0
    %v5560 = vadd.f32 %v4622, %v5559
    %v5561 = vpop.f32.mrf.mxu0
    %v5562 = vadd.f32 %v4618, %v5561
    %v5563 = vpop.f32.mrf.mxu0
    %v5564 = vadd.f32 %v4622, %v5563
    %5565 = vmatprep.mubr.bf16.mxu0 %v4462
    %5566 = vmatmul.mubr.bf16.gmra.mxu0 %v4461
    %v5567 = vpop.f32.mrf.mxu0
    %v5568 = vadd.f32 %v4618, %v5567
    %v5569 = vpop.f32.mrf.mxu0
    %v5570 = vadd.f32 %v4622, %v5569
    %v5571 = vpop.f32.mrf.mxu0
    %v5572 = vadd.f32 %v4618, %v5571
    %v5573 = vpop.f32.mrf.mxu0
    %v5574 = vadd.f32 %v4622, %v5573
    %5575 = vmatprep.mubr.bf16.mxu0 %v4466
    %5576 = vmatmul.mubr.bf16.gmra.mxu0 %v4465
    %v5577 = vpop.f32.mrf.mxu0
    %v5578 = vadd.f32 %v4618, %v5577
    %v5579 = vpop.f32.mrf.mxu0
    %v5580 = vadd.f32 %v4622, %v5579
    %v5581 = vpop.f32.mrf.mxu0
    %v5582 = vadd.f32 %v4618, %v5581
    %v5583 = vpop.f32.mrf.mxu0
    %v5584 = vadd.f32 %v4622, %v5583
    %5585 = vmatprep.mubr.bf16.mxu0 %v4470
    %5586 = vmatmul.mubr.bf16.gmra.mxu0 %v4469
    %v5587 = vpop.f32.mrf.mxu0
    %v5588 = vadd.f32 %v4618, %v5587
    %v5589 = vpop.f32.mrf.mxu0
    %v5590 = vadd.f32 %v4622, %v5589
    %v5591 = vpop.f32.mrf.mxu0
    %v5592 = vadd.f32 %v4618, %v5591
    %v5593 = vpop.f32.mrf.mxu0
    %v5594 = vadd.f32 %v4622, %v5593
    %5595 = vmatprep.mubr.bf16.mxu0 %v4474
    %5596 = vmatmul.mubr.bf16.gmra.mxu0 %v4473
    %v5597 = vpop.f32.mrf.mxu0
    %v5598 = vadd.f32 %v4618, %v5597
    %v5599 = vpop.f32.mrf.mxu0
    %v5600 = vadd.f32 %v4622, %v5599
    %v5601 = vpop.f32.mrf.mxu0
    %v5602 = vadd.f32 %v4618, %v5601
    %v5603 = vpop.f32.mrf.mxu0
    %v5604 = vadd.f32 %v4622, %v5603
    %5605 = vdwg.mxu0
    %5606 = vmatprep.subr.bf16.mxu0 %v5106
    %5607 = vmatpush1.bf16.msra.mxu0 %v5105
    %5608 = vmatprep.subr.bf16.mxu0 %v5102
    %5609 = vmatpush1.bf16.msra.mxu0 %v5101
    %5610 = vmatprep.subr.bf16.mxu0 %v5098
    %5611 = vmatpush1.bf16.msra.mxu0 %v5097
    %5612 = vmatprep.subr.bf16.mxu0 %v5094
    %5613 = vmatpush1.bf16.msra.mxu0 %v5093
    %5614 = vmatprep.subr.bf16.mxu0 %v5090
    %5615 = vmatpush1.bf16.msra.mxu0 %v5089
    %5616 = vmatprep.subr.bf16.mxu0 %v5086
    %5617 = vmatpush1.bf16.msra.mxu0 %v5085
    %5618 = vmatprep.subr.bf16.mxu0 %v5082
    %5619 = vmatpush1.bf16.msra.mxu0 %v5081
    %5620 = vmatprep.subr.bf16.mxu0 %v5078
    %5621 = vmatpush1.bf16.msra.mxu0 %v5077
    %5622 = vmatprep.subr.bf16.mxu0 %v5138
    %5623 = vmatpush2.bf16.msra.mxu0 %v5137
    %5624 = vmatprep.subr.bf16.mxu0 %v5134
    %5625 = vmatpush2.bf16.msra.mxu0 %v5133
    %5626 = vmatprep.subr.bf16.mxu0 %v5130
    %5627 = vmatpush2.bf16.msra.mxu0 %v5129
    %5628 = vmatprep.subr.bf16.mxu0 %v5126
    %5629 = vmatpush2.bf16.msra.mxu0 %v5125
    %5630 = vmatprep.subr.bf16.mxu0 %v5122
    %5631 = vmatpush2.bf16.msra.mxu0 %v5121
    %5632 = vmatprep.subr.bf16.mxu0 %v5118
    %5633 = vmatpush2.bf16.msra.mxu0 %v5117
    %5634 = vmatprep.subr.bf16.mxu0 %v5114
    %5635 = vmatpush2.bf16.msra.mxu0 %v5113
    %5636 = vmatprep.subr.bf16.mxu0 %v5110
    %5637 = vmatpush2.bf16.msra.mxu0 %v5109
    %5638 = vmatprep.mubr.bf16.mxu0 %v4448
    %5639 = vmatmul.mubr.bf16.gmra.mxu0 %v4447
    %v5640 = vpop.f32.mrf.mxu0
    %v5641 = vadd.f32 %v5528, %v5640
    %v5642 = vpop.f32.mrf.mxu0
    %v5643 = vadd.f32 %v5530, %v5642
    %v5644 = vpop.f32.mrf.mxu0
    %v5645 = vadd.f32 %v5532, %v5644
    %v5646 = vpop.f32.mrf.mxu0
    %v5647 = vadd.f32 %v5534, %v5646
    %5648 = vmatprep.mubr.bf16.mxu0 %v4452
    %5649 = vmatmul.mubr.bf16.gmra.mxu0 %v4451
    %v5650 = vpop.f32.mrf.mxu0
    %v5651 = vadd.f32 %v5538, %v5650
    %v5652 = vpop.f32.mrf.mxu0
    %v5653 = vadd.f32 %v5540, %v5652
    %v5654 = vpop.f32.mrf.mxu0
    %v5655 = vadd.f32 %v5542, %v5654
    %v5656 = vpop.f32.mrf.mxu0
    %v5657 = vadd.f32 %v5544, %v5656
    %5658 = vmatprep.mubr.bf16.mxu0 %v4456
    %5659 = vmatmul.mubr.bf16.gmra.mxu0 %v4455
    %v5660 = vpop.f32.mrf.mxu0
    %v5661 = vadd.f32 %v5548, %v5660
    %v5662 = vpop.f32.mrf.mxu0
    %v5663 = vadd.f32 %v5550, %v5662
    %v5664 = vpop.f32.mrf.mxu0
    %v5665 = vadd.f32 %v5552, %v5664
    %v5666 = vpop.f32.mrf.mxu0
    %v5667 = vadd.f32 %v5554, %v5666
    %5668 = vmatprep.mubr.bf16.mxu0 %v4460
    %5669 = vmatmul.mubr.bf16.gmra.mxu0 %v4459
    %v5670 = vpop.f32.mrf.mxu0
    %v5671 = vadd.f32 %v5558, %v5670
    %v5672 = vpop.f32.mrf.mxu0
    %v5673 = vadd.f32 %v5560, %v5672
    %v5674 = vpop.f32.mrf.mxu0
    %v5675 = vadd.f32 %v5562, %v5674
    %v5676 = vpop.f32.mrf.mxu0
    %v5677 = vadd.f32 %v5564, %v5676
    %5678 = vmatprep.mubr.bf16.mxu0 %v4464
    %5679 = vmatmul.mubr.bf16.gmra.mxu0 %v4463
    %v5680 = vpop.f32.mrf.mxu0
    %v5681 = vadd.f32 %v5568, %v5680
    %v5682 = vpop.f32.mrf.mxu0
    %v5683 = vadd.f32 %v5570, %v5682
    %v5684 = vpop.f32.mrf.mxu0
    %v5685 = vadd.f32 %v5572, %v5684
    %v5686 = vpop.f32.mrf.mxu0
    %v5687 = vadd.f32 %v5574, %v5686
    %5688 = vmatprep.mubr.bf16.mxu0 %v4468
    %5689 = vmatmul.mubr.bf16.gmra.mxu0 %v4467
    %v5690 = vpop.f32.mrf.mxu0
    %v5691 = vadd.f32 %v5578, %v5690
    %v5692 = vpop.f32.mrf.mxu0
    %v5693 = vadd.f32 %v5580, %v5692
    %v5694 = vpop.f32.mrf.mxu0
    %v5695 = vadd.f32 %v5582, %v5694
    %v5696 = vpop.f32.mrf.mxu0
    %v5697 = vadd.f32 %v5584, %v5696
    %5698 = vmatprep.mubr.bf16.mxu0 %v4472
    %5699 = vmatmul.mubr.bf16.gmra.mxu0 %v4471
    %v5700 = vpop.f32.mrf.mxu0
    %v5701 = vadd.f32 %v5588, %v5700
    %v5702 = vpop.f32.mrf.mxu0
    %v5703 = vadd.f32 %v5590, %v5702
    %v5704 = vpop.f32.mrf.mxu0
    %v5705 = vadd.f32 %v5592, %v5704
    %v5706 = vpop.f32.mrf.mxu0
    %v5707 = vadd.f32 %v5594, %v5706
    %5708 = vmatprep.mubr.bf16.mxu0 %v4476
    %5709 = vmatmul.mubr.bf16.gmra.mxu0 %v4475
    %v5710 = vpop.f32.mrf.mxu0
    %v5711 = vadd.f32 %v5598, %v5710
    %v5712 = vpop.f32.mrf.mxu0
    %v5713 = vadd.f32 %v5600, %v5712
    %v5714 = vpop.f32.mrf.mxu0
    %v5715 = vadd.f32 %v5602, %v5714
    %v5716 = vpop.f32.mrf.mxu0
    %v5717 = vadd.f32 %v5604, %v5716
    %5718 = vdwg.mxu0
    %v5719 = vxor.u32 %v5415, 2147483648
    %v5720 = vxor.u32 %v5417, 2147483648
    %v5721 = vxor.u32 %v5641, 2147483648
    %v5722 = vxor.u32 %v5643, 2147483648
    %v5723 = vxor.u32 %v5419, 2147483648
    %v5724 = vxor.u32 %v5421, 2147483648
    %v5725 = vxor.u32 %v5645, 2147483648
    %v5726 = vxor.u32 %v5647, 2147483648
    %v5727 = vxor.u32 %v5425, 2147483648
    %v5728 = vxor.u32 %v5427, 2147483648
    %v5729 = vxor.u32 %v5651, 2147483648
    %v5730 = vxor.u32 %v5653, 2147483648
    %v5731 = vxor.u32 %v5429, 2147483648
    %v5732 = vxor.u32 %v5431, 2147483648
    %v5733 = vxor.u32 %v5655, 2147483648
    %v5734 = vxor.u32 %v5657, 2147483648
    %v5735 = vxor.u32 %v5435, 2147483648
    %v5736 = vxor.u32 %v5437, 2147483648
    %v5737 = vxor.u32 %v5661, 2147483648
    %v5738 = vxor.u32 %v5663, 2147483648
    %v5739 = vxor.u32 %v5439, 2147483648
    %v5740 = vxor.u32 %v5441, 2147483648
    %v5741 = vxor.u32 %v5665, 2147483648
    %v5742 = vxor.u32 %v5667, 2147483648
    %v5743 = vxor.u32 %v5445, 2147483648
    %v5744 = vxor.u32 %v5447, 2147483648
    %v5745 = vxor.u32 %v5671, 2147483648
    %v5746 = vxor.u32 %v5673, 2147483648
    %v5747 = vxor.u32 %v5449, 2147483648
    %v5748 = vxor.u32 %v5451, 2147483648
    %v5749 = vxor.u32 %v5675, 2147483648
    %v5750 = vxor.u32 %v5677, 2147483648
    %v5751 = vxor.u32 %v5455, 2147483648
    %v5752 = vxor.u32 %v5457, 2147483648
    %v5753 = vxor.u32 %v5681, 2147483648
    %v5754 = vxor.u32 %v5683, 2147483648
    %v5755 = vxor.u32 %v5459, 2147483648
    %v5756 = vxor.u32 %v5461, 2147483648
    %v5757 = vxor.u32 %v5685, 2147483648
    %v5758 = vxor.u32 %v5687, 2147483648
    %v5759 = vxor.u32 %v5465, 2147483648
    %v5760 = vxor.u32 %v5467, 2147483648
    %v5761 = vxor.u32 %v5691, 2147483648
    %v5762 = vxor.u32 %v5693, 2147483648
    %v5763 = vxor.u32 %v5469, 2147483648
    %v5764 = vxor.u32 %v5471, 2147483648
    %v5765 = vxor.u32 %v5695, 2147483648
    %v5766 = vxor.u32 %v5697, 2147483648
    %v5767 = vxor.u32 %v5475, 2147483648
    %v5768 = vxor.u32 %v5477, 2147483648
    %v5769 = vxor.u32 %v5701, 2147483648
    %v5770 = vxor.u32 %v5703, 2147483648
    %v5771 = vxor.u32 %v5479, 2147483648
    %v5772 = vxor.u32 %v5481, 2147483648
    %v5773 = vxor.u32 %v5705, 2147483648
    %v5774 = vxor.u32 %v5707, 2147483648
    %v5775 = vxor.u32 %v5485, 2147483648
    %v5776 = vxor.u32 %v5487, 2147483648
    %v5777 = vxor.u32 %v5711, 2147483648
    %v5778 = vxor.u32 %v5713, 2147483648
    %v5779 = vxor.u32 %v5489, 2147483648
    %v5780 = vxor.u32 %v5491, 2147483648
    %v5781 = vxor.u32 %v5715, 2147483648
    %v5782 = vxor.u32 %v5717, 2147483648
    %v5783 = vmul.f32 %v5719, 1.442695
    %v5784 = vpow.pop %v5783
    %v5785 = vmul.f32 %v5720, 1.442695
    %v5786 = vpow.pop %v5785
    %v5787 = vmul.f32 %v5721, 1.442695
    %v5788 = vpow.pop %v5787
    %v5789 = vmul.f32 %v5722, 1.442695
    %v5790 = vpow.pop %v5789
    %v5791 = vmul.f32 %v5723, 1.442695
    %v5792 = vpow.pop %v5791
    %v5793 = vmul.f32 %v5724, 1.442695
    %v5794 = vpow.pop %v5793
    %v5795 = vmul.f32 %v5725, 1.442695
    %v5796 = vpow.pop %v5795
    %v5797 = vmul.f32 %v5726, 1.442695
    %v5798 = vpow.pop %v5797
    %v5799 = vmul.f32 %v5727, 1.442695
    %v5800 = vpow.pop %v5799
    %v5801 = vmul.f32 %v5728, 1.442695
    %v5802 = vpow.pop %v5801
    %v5803 = vmul.f32 %v5729, 1.442695
    %v5804 = vpow.pop %v5803
    %v5805 = vmul.f32 %v5730, 1.442695
    %v5806 = vpow.pop %v5805
    %v5807 = vmul.f32 %v5731, 1.442695
    %v5808 = vpow.pop %v5807
    %v5809 = vmul.f32 %v5732, 1.442695
    %v5810 = vpow.pop %v5809
    %v5811 = vmul.f32 %v5733, 1.442695
    %v5812 = vpow.pop %v5811
    %v5813 = vmul.f32 %v5734, 1.442695
    %v5814 = vpow.pop %v5813
    %v5815 = vmul.f32 %v5735, 1.442695
    %v5816 = vpow.pop %v5815
    %v5817 = vmul.f32 %v5736, 1.442695
    %v5818 = vpow.pop %v5817
    %v5819 = vmul.f32 %v5737, 1.442695
    %v5820 = vpow.pop %v5819
    %v5821 = vmul.f32 %v5738, 1.442695
    %v5822 = vpow.pop %v5821
    %v5823 = vmul.f32 %v5739, 1.442695
    %v5824 = vpow.pop %v5823
    %v5825 = vmul.f32 %v5740, 1.442695
    %v5826 = vpow.pop %v5825
    %v5827 = vmul.f32 %v5741, 1.442695
    %v5828 = vpow.pop %v5827
    %v5829 = vmul.f32 %v5742, 1.442695
    %v5830 = vpow.pop %v5829
    %v5831 = vmul.f32 %v5743, 1.442695
    %v5832 = vpow.pop %v5831
    %v5833 = vmul.f32 %v5744, 1.442695
    %v5834 = vpow.pop %v5833
    %v5835 = vmul.f32 %v5745, 1.442695
    %v5836 = vpow.pop %v5835
    %v5837 = vmul.f32 %v5746, 1.442695
    %v5838 = vpow.pop %v5837
    %v5839 = vmul.f32 %v5747, 1.442695
    %v5840 = vpow.pop %v5839
    %v5841 = vmul.f32 %v5748, 1.442695
    %v5842 = vpow.pop %v5841
    %v5843 = vmul.f32 %v5749, 1.442695
    %v5844 = vpow.pop %v5843
    %v5845 = vmul.f32 %v5750, 1.442695
    %v5846 = vpow.pop %v5845
    %v5847 = vmul.f32 %v5751, 1.442695
    %v5848 = vpow.pop %v5847
    %v5849 = vmul.f32 %v5752, 1.442695
    %v5850 = vpow.pop %v5849
    %v5851 = vmul.f32 %v5753, 1.442695
    %v5852 = vpow.pop %v5851
    %v5853 = vmul.f32 %v5754, 1.442695
    %v5854 = vpow.pop %v5853
    %v5855 = vmul.f32 %v5755, 1.442695
    %v5856 = vpow.pop %v5855
    %v5857 = vmul.f32 %v5756, 1.442695
    %v5858 = vpow.pop %v5857
    %v5859 = vmul.f32 %v5757, 1.442695
    %v5860 = vpow.pop %v5859
    %v5861 = vmul.f32 %v5758, 1.442695
    %v5862 = vpow.pop %v5861
    %v5863 = vmul.f32 %v5759, 1.442695
    %v5864 = vpow.pop %v5863
    %v5865 = vmul.f32 %v5760, 1.442695
    %v5866 = vpow.pop %v5865
    %v5867 = vmul.f32 %v5761, 1.442695
    %v5868 = vpow.pop %v5867
    %v5869 = vmul.f32 %v5762, 1.442695
    %v5870 = vpow.pop %v5869
    %v5871 = vmul.f32 %v5763, 1.442695
    %v5872 = vpow.pop %v5871
    %v5873 = vmul.f32 %v5764, 1.442695
    %v5874 = vpow.pop %v5873
    %v5875 = vmul.f32 %v5765, 1.442695
    %v5876 = vpow.pop %v5875
    %v5877 = vmul.f32 %v5766, 1.442695
    %v5878 = vpow.pop %v5877
    %v5879 = vmul.f32 %v5767, 1.442695
    %v5880 = vpow.pop %v5879
    %v5881 = vmul.f32 %v5768, 1.442695
    %v5882 = vpow.pop %v5881
    %v5883 = vmul.f32 %v5769, 1.442695
    %v5884 = vpow.pop %v5883
    %v5885 = vmul.f32 %v5770, 1.442695
    %v5886 = vpow.pop %v5885
    %v5887 = vmul.f32 %v5771, 1.442695
    %v5888 = vpow.pop %v5887
    %v5889 = vmul.f32 %v5772, 1.442695
    %v5890 = vpow.pop %v5889
    %v5891 = vmul.f32 %v5773, 1.442695
    %v5892 = vpow.pop %v5891
    %v5893 = vmul.f32 %v5774, 1.442695
    %v5894 = vpow.pop %v5893
    %v5895 = vmul.f32 %v5775, 1.442695
    %v5896 = vpow.pop %v5895
    %v5897 = vmul.f32 %v5776, 1.442695
    %v5898 = vpow.pop %v5897
    %v5899 = vmul.f32 %v5777, 1.442695
    %v5900 = vpow.pop %v5899
    %v5901 = vmul.f32 %v5778, 1.442695
    %v5902 = vpow.pop %v5901
    %v5903 = vmul.f32 %v5779, 1.442695
    %v5904 = vpow.pop %v5903
    %v5905 = vmul.f32 %v5780, 1.442695
    %v5906 = vpow.pop %v5905
    %v5907 = vmul.f32 %v5781, 1.442695
    %v5908 = vpow.pop %v5907
    %v5909 = vmul.f32 %v5782, 1.442695
    %v5910 = vpow.pop %v5909
    %v5911 = vadd.f32 %v5784, 1.0
    %v5912 = vadd.f32 %v5786, 1.0
    %v5913 = vadd.f32 %v5788, 1.0
    %v5914 = vadd.f32 %v5790, 1.0
    %v5915 = vadd.f32 %v5792, 1.0
    %v5916 = vadd.f32 %v5794, 1.0
    %v5917 = vadd.f32 %v5796, 1.0
    %v5918 = vadd.f32 %v5798, 1.0
    %v5919 = vadd.f32 %v5800, 1.0
    %v5920 = vadd.f32 %v5802, 1.0
    %v5921 = vadd.f32 %v5804, 1.0
    %v5922 = vadd.f32 %v5806, 1.0
    %v5923 = vadd.f32 %v5808, 1.0
    %v5924 = vadd.f32 %v5810, 1.0
    %v5925 = vadd.f32 %v5812, 1.0
    %v5926 = vadd.f32 %v5814, 1.0
    %v5927 = vadd.f32 %v5816, 1.0
    %v5928 = vadd.f32 %v5818, 1.0
    %v5929 = vadd.f32 %v5820, 1.0
    %v5930 = vadd.f32 %v5822, 1.0
    %v5931 = vadd.f32 %v5824, 1.0
    %v5932 = vadd.f32 %v5826, 1.0
    %v5933 = vadd.f32 %v5828, 1.0
    %v5934 = vadd.f32 %v5830, 1.0
    %v5935 = vadd.f32 %v5832, 1.0
    %v5936 = vadd.f32 %v5834, 1.0
    %v5937 = vadd.f32 %v5836, 1.0
    %v5938 = vadd.f32 %v5838, 1.0
    %v5939 = vadd.f32 %v5840, 1.0
    %v5940 = vadd.f32 %v5842, 1.0
    %v5941 = vadd.f32 %v5844, 1.0
    %v5942 = vadd.f32 %v5846, 1.0
    %v5943 = vadd.f32 %v5848, 1.0
    %v5944 = vadd.f32 %v5850, 1.0
    %v5945 = vadd.f32 %v5852, 1.0
    %v5946 = vadd.f32 %v5854, 1.0
    %v5947 = vadd.f32 %v5856, 1.0
    %v5948 = vadd.f32 %v5858, 1.0
    %v5949 = vadd.f32 %v5860, 1.0
    %v5950 = vadd.f32 %v5862, 1.0
    %v5951 = vadd.f32 %v5864, 1.0
    %v5952 = vadd.f32 %v5866, 1.0
    %v5953 = vadd.f32 %v5868, 1.0
    %v5954 = vadd.f32 %v5870, 1.0
    %v5955 = vadd.f32 %v5872, 1.0
    %v5956 = vadd.f32 %v5874, 1.0
    %v5957 = vadd.f32 %v5876, 1.0
    %v5958 = vadd.f32 %v5878, 1.0
    %v5959 = vadd.f32 %v5880, 1.0
    %v5960 = vadd.f32 %v5882, 1.0
    %v5961 = vadd.f32 %v5884, 1.0
    %v5962 = vadd.f32 %v5886, 1.0
    %v5963 = vadd.f32 %v5888, 1.0
    %v5964 = vadd.f32 %v5890, 1.0
    %v5965 = vadd.f32 %v5892, 1.0
    %v5966 = vadd.f32 %v5894, 1.0
    %v5967 = vadd.f32 %v5896, 1.0
    %v5968 = vadd.f32 %v5898, 1.0
    %v5969 = vadd.f32 %v5900, 1.0
    %v5970 = vadd.f32 %v5902, 1.0
    %v5971 = vadd.f32 %v5904, 1.0
    %v5972 = vadd.f32 %v5906, 1.0
    %v5973 = vadd.f32 %v5908, 1.0
    %v5974 = vadd.f32 %v5910, 1.0
    %v5975 = vrcp.pop %v5911
    %v5976 = vmul.f32 1.0, %v5975
    %v5977 = vrcp.pop %v5912
    %v5978 = vmul.f32 1.0, %v5977
    %v5979 = vrcp.pop %v5913
    %v5980 = vmul.f32 1.0, %v5979
    %v5981 = vrcp.pop %v5914
    %v5982 = vmul.f32 1.0, %v5981
    %v5983 = vrcp.pop %v5915
    %v5984 = vmul.f32 1.0, %v5983
    %v5985 = vrcp.pop %v5916
    %v5986 = vmul.f32 1.0, %v5985
    %v5987 = vrcp.pop %v5917
    %v5988 = vmul.f32 1.0, %v5987
    %v5989 = vrcp.pop %v5918
    %v5990 = vmul.f32 1.0, %v5989
    %v5991 = vrcp.pop %v5919
    %v5992 = vmul.f32 1.0, %v5991
    %v5993 = vrcp.pop %v5920
    %v5994 = vmul.f32 1.0, %v5993
    %v5995 = vrcp.pop %v5921
    %v5996 = vmul.f32 1.0, %v5995
    %v5997 = vrcp.pop %v5922
    %v5998 = vmul.f32 1.0, %v5997
    %v5999 = vrcp.pop %v5923
    %v6000 = vmul.f32 1.0, %v5999
    %v6001 = vrcp.pop %v5924
    %v6002 = vmul.f32 1.0, %v6001
    %v6003 = vrcp.pop %v5925
    %v6004 = vmul.f32 1.0, %v6003
    %v6005 = vrcp.pop %v5926
    %v6006 = vmul.f32 1.0, %v6005
    %v6007 = vrcp.pop %v5927
    %v6008 = vmul.f32 1.0, %v6007
    %v6009 = vrcp.pop %v5928
    %v6010 = vmul.f32 1.0, %v6009
    %v6011 = vrcp.pop %v5929
    %v6012 = vmul.f32 1.0, %v6011
    %v6013 = vrcp.pop %v5930
    %v6014 = vmul.f32 1.0, %v6013
    %v6015 = vrcp.pop %v5931
    %v6016 = vmul.f32 1.0, %v6015
    %v6017 = vrcp.pop %v5932
    %v6018 = vmul.f32 1.0, %v6017
    %v6019 = vrcp.pop %v5933
    %v6020 = vmul.f32 1.0, %v6019
    %v6021 = vrcp.pop %v5934
    %v6022 = vmul.f32 1.0, %v6021
    %v6023 = vrcp.pop %v5935
    %v6024 = vmul.f32 1.0, %v6023
    %v6025 = vrcp.pop %v5936
    %v6026 = vmul.f32 1.0, %v6025
    %v6027 = vrcp.pop %v5937
    %v6028 = vmul.f32 1.0, %v6027
    %v6029 = vrcp.pop %v5938
    %v6030 = vmul.f32 1.0, %v6029
    %v6031 = vrcp.pop %v5939
    %v6032 = vmul.f32 1.0, %v6031
    %v6033 = vrcp.pop %v5940
    %v6034 = vmul.f32 1.0, %v6033
    %v6035 = vrcp.pop %v5941
    %v6036 = vmul.f32 1.0, %v6035
    %v6037 = vrcp.pop %v5942
    %v6038 = vmul.f32 1.0, %v6037
    %v6039 = vrcp.pop %v5943
    %v6040 = vmul.f32 1.0, %v6039
    %v6041 = vrcp.pop %v5944
    %v6042 = vmul.f32 1.0, %v6041
    %v6043 = vrcp.pop %v5945
    %v6044 = vmul.f32 1.0, %v6043
    %v6045 = vrcp.pop %v5946
    %v6046 = vmul.f32 1.0, %v6045
    %v6047 = vrcp.pop %v5947
    %v6048 = vmul.f32 1.0, %v6047
    %v6049 = vrcp.pop %v5948
    %v6050 = vmul.f32 1.0, %v6049
    %v6051 = vrcp.pop %v5949
    %v6052 = vmul.f32 1.0, %v6051
    %v6053 = vrcp.pop %v5950
    %v6054 = vmul.f32 1.0, %v6053
    %v6055 = vrcp.pop %v5951
    %v6056 = vmul.f32 1.0, %v6055
    %v6057 = vrcp.pop %v5952
    %v6058 = vmul.f32 1.0, %v6057
    %v6059 = vrcp.pop %v5953
    %v6060 = vmul.f32 1.0, %v6059
    %v6061 = vrcp.pop %v5954
    %v6062 = vmul.f32 1.0, %v6061
    %v6063 = vrcp.pop %v5955
    %v6064 = vmul.f32 1.0, %v6063
    %v6065 = vrcp.pop %v5956
    %v6066 = vmul.f32 1.0, %v6065
    %v6067 = vrcp.pop %v5957
    %v6068 = vmul.f32 1.0, %v6067
    %v6069 = vrcp.pop %v5958
    %v6070 = vmul.f32 1.0, %v6069
    %v6071 = vrcp.pop %v5959
    %v6072 = vmul.f32 1.0, %v6071
    %v6073 = vrcp.pop %v5960
    %v6074 = vmul.f32 1.0, %v6073
    %v6075 = vrcp.pop %v5961
    %v6076 = vmul.f32 1.0, %v6075
    %v6077 = vrcp.pop %v5962
    %v6078 = vmul.f32 1.0, %v6077
    %v6079 = vrcp.pop %v5963
    %v6080 = vmul.f32 1.0, %v6079
    %v6081 = vrcp.pop %v5964
    %v6082 = vmul.f32 1.0, %v6081
    %v6083 = vrcp.pop %v5965
    %v6084 = vmul.f32 1.0, %v6083
    %v6085 = vrcp.pop %v5966
    %v6086 = vmul.f32 1.0, %v6085
    %v6087 = vrcp.pop %v5967
    %v6088 = vmul.f32 1.0, %v6087
    %v6089 = vrcp.pop %v5968
    %v6090 = vmul.f32 1.0, %v6089
    %v6091 = vrcp.pop %v5969
    %v6092 = vmul.f32 1.0, %v6091
    %v6093 = vrcp.pop %v5970
    %v6094 = vmul.f32 1.0, %v6093
    %v6095 = vrcp.pop %v5971
    %v6096 = vmul.f32 1.0, %v6095
    %v6097 = vrcp.pop %v5972
    %v6098 = vmul.f32 1.0, %v6097
    %v6099 = vrcp.pop %v5973
    %v6100 = vmul.f32 1.0, %v6099
    %v6101 = vrcp.pop %v5974
    %v6102 = vmul.f32 1.0, %v6101
    %v6103 = vmul.f32 %v5415, %v5976
    %v6104 = vmul.f32 %v5417, %v5978
    %v6105 = vmul.f32 %v5641, %v5980
    %v6106 = vmul.f32 %v5643, %v5982
    %v6107 = vmul.f32 %v5419, %v5984
    %v6108 = vmul.f32 %v5421, %v5986
    %v6109 = vmul.f32 %v5645, %v5988
    %v6110 = vmul.f32 %v5647, %v5990
    %v6111 = vmul.f32 %v5425, %v5992
    %v6112 = vmul.f32 %v5427, %v5994
    %v6113 = vmul.f32 %v5651, %v5996
    %v6114 = vmul.f32 %v5653, %v5998
    %v6115 = vmul.f32 %v5429, %v6000
    %v6116 = vmul.f32 %v5431, %v6002
    %v6117 = vmul.f32 %v5655, %v6004
    %v6118 = vmul.f32 %v5657, %v6006
    %v6119 = vmul.f32 %v5435, %v6008
    %v6120 = vmul.f32 %v5437, %v6010
    %v6121 = vmul.f32 %v5661, %v6012
    %v6122 = vmul.f32 %v5663, %v6014
    %v6123 = vmul.f32 %v5439, %v6016
    %v6124 = vmul.f32 %v5441, %v6018
    %v6125 = vmul.f32 %v5665, %v6020
    %v6126 = vmul.f32 %v5667, %v6022
    %v6127 = vmul.f32 %v5445, %v6024
    %v6128 = vmul.f32 %v5447, %v6026
    %v6129 = vmul.f32 %v5671, %v6028
    %v6130 = vmul.f32 %v5673, %v6030
    %v6131 = vmul.f32 %v5449, %v6032
    %v6132 = vmul.f32 %v5451, %v6034
    %v6133 = vmul.f32 %v5675, %v6036
    %v6134 = vmul.f32 %v5677, %v6038
    %v6135 = vmul.f32 %v5455, %v6040
    %v6136 = vmul.f32 %v5457, %v6042
    %v6137 = vmul.f32 %v5681, %v6044
    %v6138 = vmul.f32 %v5683, %v6046
    %v6139 = vmul.f32 %v5459, %v6048
    %v6140 = vmul.f32 %v5461, %v6050
    %v6141 = vmul.f32 %v5685, %v6052
    %v6142 = vmul.f32 %v5687, %v6054
    %v6143 = vmul.f32 %v5465, %v6056
    %v6144 = vmul.f32 %v5467, %v6058
    %v6145 = vmul.f32 %v5691, %v6060
    %v6146 = vmul.f32 %v5693, %v6062
    %v6147 = vmul.f32 %v5469, %v6064
    %v6148 = vmul.f32 %v5471, %v6066
    %v6149 = vmul.f32 %v5695, %v6068
    %v6150 = vmul.f32 %v5697, %v6070
    %v6151 = vmul.f32 %v5475, %v6072
    %v6152 = vmul.f32 %v5477, %v6074
    %v6153 = vmul.f32 %v5701, %v6076
    %v6154 = vmul.f32 %v5703, %v6078
    %v6155 = vmul.f32 %v5479, %v6080
    %v6156 = vmul.f32 %v5481, %v6082
    %v6157 = vmul.f32 %v5705, %v6084
    %v6158 = vmul.f32 %v5707, %v6086
    %v6159 = vmul.f32 %v5485, %v6088
    %v6160 = vmul.f32 %v5487, %v6090
    %v6161 = vmul.f32 %v5711, %v6092
    %v6162 = vmul.f32 %v5713, %v6094
    %v6163 = vmul.f32 %v5489, %v6096
    %v6164 = vmul.f32 %v5491, %v6098
    %v6165 = vmul.f32 %v5715, %v6100
    %v6166 = vmul.f32 %v5717, %v6102
    %v6167 = vpack.c.bf16 %v6107, %v6103
    %v6168 = vpack.c.bf16 %v6108, %v6104
    %v6169 = vpack.c.bf16 %v6109, %v6105
    %v6170 = vpack.c.bf16 %v6110, %v6106
    %v6171 = vpack.c.bf16 %v6115, %v6111
    %v6172 = vpack.c.bf16 %v6116, %v6112
    %v6173 = vpack.c.bf16 %v6117, %v6113
    %v6174 = vpack.c.bf16 %v6118, %v6114
    %v6175 = vpack.c.bf16 %v6123, %v6119
    %v6176 = vpack.c.bf16 %v6124, %v6120
    %v6177 = vpack.c.bf16 %v6125, %v6121
    %v6178 = vpack.c.bf16 %v6126, %v6122
    %v6179 = vpack.c.bf16 %v6131, %v6127
    %v6180 = vpack.c.bf16 %v6132, %v6128
    %v6181 = vpack.c.bf16 %v6133, %v6129
    %v6182 = vpack.c.bf16 %v6134, %v6130
    %v6183 = vpack.c.bf16 %v6139, %v6135
    %v6184 = vpack.c.bf16 %v6140, %v6136
    %v6185 = vpack.c.bf16 %v6141, %v6137
    %v6186 = vpack.c.bf16 %v6142, %v6138
    %v6187 = vpack.c.bf16 %v6147, %v6143
    %v6188 = vpack.c.bf16 %v6148, %v6144
    %v6189 = vpack.c.bf16 %v6149, %v6145
    %v6190 = vpack.c.bf16 %v6150, %v6146
    %v6191 = vpack.c.bf16 %v6155, %v6151
    %v6192 = vpack.c.bf16 %v6156, %v6152
    %v6193 = vpack.c.bf16 %v6157, %v6153
    %v6194 = vpack.c.bf16 %v6158, %v6154
    %v6195 = vpack.c.bf16 %v6163, %v6159
    %v6196 = vpack.c.bf16 %v6164, %v6160
    %v6197 = vpack.c.bf16 %v6165, %v6161
    %v6198 = vpack.c.bf16 %v6166, %v6162
    %v6199 = vunpack.c.l.bf16 %v6167
    %v6200 = vunpack.c.l.bf16 %v6168
    %v6201 = vunpack.c.l.bf16 %v6169
    %v6202 = vunpack.c.l.bf16 %v6170
    %v6203 = vunpack.c.h.bf16 %v6167
    %v6204 = vunpack.c.h.bf16 %v6168
    %v6205 = vunpack.c.h.bf16 %v6169
    %v6206 = vunpack.c.h.bf16 %v6170
    %v6207 = vunpack.c.l.bf16 %v6171
    %v6208 = vunpack.c.l.bf16 %v6172
    %v6209 = vunpack.c.l.bf16 %v6173
    %v6210 = vunpack.c.l.bf16 %v6174
    %v6211 = vunpack.c.h.bf16 %v6171
    %v6212 = vunpack.c.h.bf16 %v6172
    %v6213 = vunpack.c.h.bf16 %v6173
    %v6214 = vunpack.c.h.bf16 %v6174
    %v6215 = vunpack.c.l.bf16 %v6175
    %v6216 = vunpack.c.l.bf16 %v6176
    %v6217 = vunpack.c.l.bf16 %v6177
    %v6218 = vunpack.c.l.bf16 %v6178
    %v6219 = vunpack.c.h.bf16 %v6175
    %v6220 = vunpack.c.h.bf16 %v6176
    %v6221 = vunpack.c.h.bf16 %v6177
    %v6222 = vunpack.c.h.bf16 %v6178
    %v6223 = vunpack.c.l.bf16 %v6179
    %v6224 = vunpack.c.l.bf16 %v6180
    %v6225 = vunpack.c.l.bf16 %v6181
    %v6226 = vunpack.c.l.bf16 %v6182
    %v6227 = vunpack.c.h.bf16 %v6179
    %v6228 = vunpack.c.h.bf16 %v6180
    %v6229 = vunpack.c.h.bf16 %v6181
    %v6230 = vunpack.c.h.bf16 %v6182
    %v6231 = vunpack.c.l.bf16 %v6183
    %v6232 = vunpack.c.l.bf16 %v6184
    %v6233 = vunpack.c.l.bf16 %v6185
    %v6234 = vunpack.c.l.bf16 %v6186
    %v6235 = vunpack.c.h.bf16 %v6183
    %v6236 = vunpack.c.h.bf16 %v6184
    %v6237 = vunpack.c.h.bf16 %v6185
    %v6238 = vunpack.c.h.bf16 %v6186
    %v6239 = vunpack.c.l.bf16 %v6187
    %v6240 = vunpack.c.l.bf16 %v6188
    %v6241 = vunpack.c.l.bf16 %v6189
    %v6242 = vunpack.c.l.bf16 %v6190
    %v6243 = vunpack.c.h.bf16 %v6187
    %v6244 = vunpack.c.h.bf16 %v6188
    %v6245 = vunpack.c.h.bf16 %v6189
    %v6246 = vunpack.c.h.bf16 %v6190
    %v6247 = vunpack.c.l.bf16 %v6191
    %v6248 = vunpack.c.l.bf16 %v6192
    %v6249 = vunpack.c.l.bf16 %v6193
    %v6250 = vunpack.c.l.bf16 %v6194
    %v6251 = vunpack.c.h.bf16 %v6191
    %v6252 = vunpack.c.h.bf16 %v6192
    %v6253 = vunpack.c.h.bf16 %v6193
    %v6254 = vunpack.c.h.bf16 %v6194
    %v6255 = vunpack.c.l.bf16 %v6195
    %v6256 = vunpack.c.l.bf16 %v6196
    %v6257 = vunpack.c.l.bf16 %v6197
    %v6258 = vunpack.c.l.bf16 %v6198
    %v6259 = vunpack.c.h.bf16 %v6195
    %v6260 = vunpack.c.h.bf16 %v6196
    %v6261 = vunpack.c.h.bf16 %v6197
    %v6262 = vunpack.c.h.bf16 %v6198
    %v6263 = vld [vmem:[%s9] sm:$0xf]
    %v6265 = vlaneseq
    %v6266 = vshrl.u32 %v6265, 7
    %v6267 = vsub.s32 0, %v6266
    %v6268 = vrot.slane %v6263, %v6267
    %v6269 = vlaneseq
    %v6270 = vshrl.u32 %v6269, 7
    %v6271 = vsub.s32 1, %v6270
    %v6272 = vrot.slane %v6263, %v6271
    %v6273 = vlaneseq
    %v6274 = vshrl.u32 %v6273, 7
    %v6275 = vsub.s32 2, %v6274
    %v6276 = vrot.slane %v6263, %v6275
    %v6277 = vlaneseq
    %v6278 = vshrl.u32 %v6277, 7
    %v6279 = vsub.s32 3, %v6278
    %v6280 = vrot.slane %v6263, %v6279
    %v6285 = vmul.f32 %v6199, %v6268
    %v6286 = vmul.f32 %v6200, %v6272
    %v6287 = vmul.f32 %v6201, %v6276
    %v6288 = vmul.f32 %v6202, %v6280
    %v6289 = vmul.f32 %v6203, %v6268
    %v6290 = vmul.f32 %v6204, %v6272
    %v6291 = vmul.f32 %v6205, %v6276
    %v6292 = vmul.f32 %v6206, %v6280
    %v6293 = vmul.f32 %v6207, %v6268
    %v6294 = vmul.f32 %v6208, %v6272
    %v6295 = vmul.f32 %v6209, %v6276
    %v6296 = vmul.f32 %v6210, %v6280
    %v6297 = vmul.f32 %v6211, %v6268
    %v6298 = vmul.f32 %v6212, %v6272
    %v6299 = vmul.f32 %v6213, %v6276
    %v6300 = vmul.f32 %v6214, %v6280
    %v6301 = vmul.f32 %v6215, %v6268
    %v6302 = vmul.f32 %v6216, %v6272
    %v6303 = vmul.f32 %v6217, %v6276
    %v6304 = vmul.f32 %v6218, %v6280
    %v6305 = vmul.f32 %v6219, %v6268
    %v6306 = vmul.f32 %v6220, %v6272
    %v6307 = vmul.f32 %v6221, %v6276
    %v6308 = vmul.f32 %v6222, %v6280
    %v6309 = vmul.f32 %v6223, %v6268
    %v6310 = vmul.f32 %v6224, %v6272
    %v6311 = vmul.f32 %v6225, %v6276
    %v6312 = vmul.f32 %v6226, %v6280
    %v6313 = vmul.f32 %v6227, %v6268
    %v6314 = vmul.f32 %v6228, %v6272
    %v6315 = vmul.f32 %v6229, %v6276
    %v6316 = vmul.f32 %v6230, %v6280
    %v6317 = vmul.f32 %v6231, %v6268
    %v6318 = vmul.f32 %v6232, %v6272
    %v6319 = vmul.f32 %v6233, %v6276
    %v6320 = vmul.f32 %v6234, %v6280
    %v6321 = vmul.f32 %v6235, %v6268
    %v6322 = vmul.f32 %v6236, %v6272
    %v6323 = vmul.f32 %v6237, %v6276
    %v6324 = vmul.f32 %v6238, %v6280
    %v6325 = vmul.f32 %v6239, %v6268
    %v6326 = vmul.f32 %v6240, %v6272
    %v6327 = vmul.f32 %v6241, %v6276
    %v6328 = vmul.f32 %v6242, %v6280
    %v6329 = vmul.f32 %v6243, %v6268
    %v6330 = vmul.f32 %v6244, %v6272
    %v6331 = vmul.f32 %v6245, %v6276
    %v6332 = vmul.f32 %v6246, %v6280
    %v6333 = vmul.f32 %v6247, %v6268
    %v6334 = vmul.f32 %v6248, %v6272
    %v6335 = vmul.f32 %v6249, %v6276
    %v6336 = vmul.f32 %v6250, %v6280
    %v6337 = vmul.f32 %v6251, %v6268
    %v6338 = vmul.f32 %v6252, %v6272
    %v6339 = vmul.f32 %v6253, %v6276
    %v6340 = vmul.f32 %v6254, %v6280
    %v6341 = vmul.f32 %v6255, %v6268
    %v6342 = vmul.f32 %v6256, %v6272
    %v6343 = vmul.f32 %v6257, %v6276
    %v6344 = vmul.f32 %v6258, %v6280
    %v6345 = vmul.f32 %v6259, %v6268
    %v6346 = vmul.f32 %v6260, %v6272
    %v6347 = vmul.f32 %v6261, %v6276
    %v6348 = vmul.f32 %v6262, %v6280
    %v6349 = vadd.f32 %v6285, %v6286
    %v6350 = vadd.f32 %v6349, %v6287
    %v6351 = vadd.f32 %v6350, %v6288
    %6352 = vadd.xlane.f32.xlu0 %v6351
    %v6353 = vpop.xlane.xlu0 %6352
    %v6354 = vadd.f32 %v6289, %v6290
    %v6355 = vadd.f32 %v6354, %v6291
    %v6356 = vadd.f32 %v6355, %v6292
    %6357 = vadd.xlane.f32.xlu0 %v6356
    %v6358 = vpop.xlane.xlu0 %6357
    %v6359 = vadd.f32 %v6293, %v6294
    %v6360 = vadd.f32 %v6359, %v6295
    %v6361 = vadd.f32 %v6360, %v6296
    %6362 = vadd.xlane.f32.xlu0 %v6361
    %v6363 = vpop.xlane.xlu0 %6362
    %v6364 = vadd.f32 %v6297, %v6298
    %v6365 = vadd.f32 %v6364, %v6299
    %v6366 = vadd.f32 %v6365, %v6300
    %6367 = vadd.xlane.f32.xlu0 %v6366
    %v6368 = vpop.xlane.xlu0 %6367
    %v6369 = vadd.f32 %v6301, %v6302
    %v6370 = vadd.f32 %v6369, %v6303
    %v6371 = vadd.f32 %v6370, %v6304
    %6372 = vadd.xlane.f32.xlu0 %v6371
    %v6373 = vpop.xlane.xlu0 %6372
    %v6374 = vadd.f32 %v6305, %v6306
    %v6375 = vadd.f32 %v6374, %v6307
    %v6376 = vadd.f32 %v6375, %v6308
    %6377 = vadd.xlane.f32.xlu0 %v6376
    %v6378 = vpop.xlane.xlu0 %6377
    %v6379 = vadd.f32 %v6309, %v6310
    %v6380 = vadd.f32 %v6379, %v6311
    %v6381 = vadd.f32 %v6380, %v6312
    %6382 = vadd.xlane.f32.xlu0 %v6381
    %v6383 = vpop.xlane.xlu0 %6382
    %v6384 = vadd.f32 %v6313, %v6314
    %v6385 = vadd.f32 %v6384, %v6315
    %v6386 = vadd.f32 %v6385, %v6316
    %6387 = vadd.xlane.f32.xlu0 %v6386
    %v6388 = vpop.xlane.xlu0 %6387
    %v6389 = vadd.f32 %v6317, %v6318
    %v6390 = vadd.f32 %v6389, %v6319
    %v6391 = vadd.f32 %v6390, %v6320
    %6392 = vadd.xlane.f32.xlu0 %v6391
    %v6393 = vpop.xlane.xlu0 %6392
    %v6394 = vadd.f32 %v6321, %v6322
    %v6395 = vadd.f32 %v6394, %v6323
    %v6396 = vadd.f32 %v6395, %v6324
    %6397 = vadd.xlane.f32.xlu0 %v6396
    %v6398 = vpop.xlane.xlu0 %6397
    %v6399 = vadd.f32 %v6325, %v6326
    %v6400 = vadd.f32 %v6399, %v6327
    %v6401 = vadd.f32 %v6400, %v6328
    %6402 = vadd.xlane.f32.xlu0 %v6401
    %v6403 = vpop.xlane.xlu0 %6402
    %v6404 = vadd.f32 %v6329, %v6330
    %v6405 = vadd.f32 %v6404, %v6331
    %v6406 = vadd.f32 %v6405, %v6332
    %6407 = vadd.xlane.f32.xlu0 %v6406
    %v6408 = vpop.xlane.xlu0 %6407
    %v6409 = vadd.f32 %v6333, %v6334
    %v6410 = vadd.f32 %v6409, %v6335
    %v6411 = vadd.f32 %v6410, %v6336
    %6412 = vadd.xlane.f32.xlu0 %v6411
    %v6413 = vpop.xlane.xlu0 %6412
    %v6414 = vadd.f32 %v6337, %v6338
    %v6415 = vadd.f32 %v6414, %v6339
    %v6416 = vadd.f32 %v6415, %v6340
    %6417 = vadd.xlane.f32.xlu0 %v6416
    %v6418 = vpop.xlane.xlu0 %6417
    %v6419 = vadd.f32 %v6341, %v6342
    %v6420 = vadd.f32 %v6419, %v6343
    %v6421 = vadd.f32 %v6420, %v6344
    %6422 = vadd.xlane.f32.xlu0 %v6421
    %v6423 = vpop.xlane.xlu0 %6422
    %v6424 = vadd.f32 %v6345, %v6346
    %v6425 = vadd.f32 %v6424, %v6347
    %v6426 = vadd.f32 %v6425, %v6348
    %6427 = vadd.xlane.f32.xlu0 %v6426
    %v6428 = vpop.xlane.xlu0 %6427
    %v6429 = vld [vmem:[#allocation2] sm:$0x1]
    %6431 = vset.pattern.permute.xlu0 0
    %6432 = vperm.xlu0 %6431, %v6429
    %v6433 = vpop.permute.xlu0 %6432
    %v6435 = vlaneseq
    %v6436 = vshrl.u32 %v6435, 7
    %v6437 = vsub.s32 0, %v6436
    %v6438 = vrot.slane %v6433, %v6437
    %v6439 = vadd.f32 %v6353, %v6438
    %v6440 = vadd.f32 %v6358, %v6438
    %v6441 = vadd.f32 %v6363, %v6438
    %v6442 = vadd.f32 %v6368, %v6438
    %v6443 = vadd.f32 %v6373, %v6438
    %v6444 = vadd.f32 %v6378, %v6438
    %v6445 = vadd.f32 %v6383, %v6438
    %v6446 = vadd.f32 %v6388, %v6438
    %v6447 = vadd.f32 %v6393, %v6438
    %v6448 = vadd.f32 %v6398, %v6438
    %v6449 = vadd.f32 %v6403, %v6438
    %v6450 = vadd.f32 %v6408, %v6438
    %v6451 = vadd.f32 %v6413, %v6438
    %v6452 = vadd.f32 %v6418, %v6438
    %v6453 = vadd.f32 %v6423, %v6438
    %v6454 = vadd.f32 %v6428, %v6438
    %v6455 = vxor.u32 %v6439, 2147483648
    %v6456 = vxor.u32 %v6440, 2147483648
    %v6457 = vxor.u32 %v6441, 2147483648
    %v6458 = vxor.u32 %v6442, 2147483648
    %v6459 = vxor.u32 %v6443, 2147483648
    %v6460 = vxor.u32 %v6444, 2147483648
    %v6461 = vxor.u32 %v6445, 2147483648
    %v6462 = vxor.u32 %v6446, 2147483648
    %v6463 = vxor.u32 %v6447, 2147483648
    %v6464 = vxor.u32 %v6448, 2147483648
    %v6465 = vxor.u32 %v6449, 2147483648
    %v6466 = vxor.u32 %v6450, 2147483648
    %v6467 = vxor.u32 %v6451, 2147483648
    %v6468 = vxor.u32 %v6452, 2147483648
    %v6469 = vxor.u32 %v6453, 2147483648
    %v6470 = vxor.u32 %v6454, 2147483648
    %v6471 = vmul.f32 %v6455, 1.442695
    %v6472 = vpow.pop %v6471
    %v6473 = vmul.f32 %v6456, 1.442695
    %v6474 = vpow.pop %v6473
    %v6475 = vmul.f32 %v6457, 1.442695
    %v6476 = vpow.pop %v6475
    %v6477 = vmul.f32 %v6458, 1.442695
    %v6478 = vpow.pop %v6477
    %v6479 = vmul.f32 %v6459, 1.442695
    %v6480 = vpow.pop %v6479
    %v6481 = vmul.f32 %v6460, 1.442695
    %v6482 = vpow.pop %v6481
    %v6483 = vmul.f32 %v6461, 1.442695
    %v6484 = vpow.pop %v6483
    %v6485 = vmul.f32 %v6462, 1.442695
    %v6486 = vpow.pop %v6485
    %v6487 = vmul.f32 %v6463, 1.442695
    %v6488 = vpow.pop %v6487
    %v6489 = vmul.f32 %v6464, 1.442695
    %v6490 = vpow.pop %v6489
    %v6491 = vmul.f32 %v6465, 1.442695
    %v6492 = vpow.pop %v6491
    %v6493 = vmul.f32 %v6466, 1.442695
    %v6494 = vpow.pop %v6493
    %v6495 = vmul.f32 %v6467, 1.442695
    %v6496 = vpow.pop %v6495
    %v6497 = vmul.f32 %v6468, 1.442695
    %v6498 = vpow.pop %v6497
    %v6499 = vmul.f32 %v6469, 1.442695
    %v6500 = vpow.pop %v6499
    %v6501 = vmul.f32 %v6470, 1.442695
    %v6502 = vpow.pop %v6501
    %v6503 = vadd.f32 %v6472, 1.0
    %v6504 = vadd.f32 %v6474, 1.0
    %v6505 = vadd.f32 %v6476, 1.0
    %v6506 = vadd.f32 %v6478, 1.0
    %v6507 = vadd.f32 %v6480, 1.0
    %v6508 = vadd.f32 %v6482, 1.0
    %v6509 = vadd.f32 %v6484, 1.0
    %v6510 = vadd.f32 %v6486, 1.0
    %v6511 = vadd.f32 %v6488, 1.0
    %v6512 = vadd.f32 %v6490, 1.0
    %v6513 = vadd.f32 %v6492, 1.0
    %v6514 = vadd.f32 %v6494, 1.0
    %v6515 = vadd.f32 %v6496, 1.0
    %v6516 = vadd.f32 %v6498, 1.0
    %v6517 = vadd.f32 %v6500, 1.0
    %v6518 = vadd.f32 %v6502, 1.0
    %v6519 = vrcp.pop %v6503
    %v6520 = vmul.f32 1.0, %v6519
    %v6521 = vrcp.pop %v6504
    %v6522 = vmul.f32 1.0, %v6521
    %v6523 = vrcp.pop %v6505
    %v6524 = vmul.f32 1.0, %v6523
    %v6525 = vrcp.pop %v6506
    %v6526 = vmul.f32 1.0, %v6525
    %v6527 = vrcp.pop %v6507
    %v6528 = vmul.f32 1.0, %v6527
    %v6529 = vrcp.pop %v6508
    %v6530 = vmul.f32 1.0, %v6529
    %v6531 = vrcp.pop %v6509
    %v6532 = vmul.f32 1.0, %v6531
    %v6533 = vrcp.pop %v6510
    %v6534 = vmul.f32 1.0, %v6533
    %v6535 = vrcp.pop %v6511
    %v6536 = vmul.f32 1.0, %v6535
    %v6537 = vrcp.pop %v6512
    %v6538 = vmul.f32 1.0, %v6537
    %v6539 = vrcp.pop %v6513
    %v6540 = vmul.f32 1.0, %v6539
    %v6541 = vrcp.pop %v6514
    %v6542 = vmul.f32 1.0, %v6541
    %v6543 = vrcp.pop %v6515
    %v6544 = vmul.f32 1.0, %v6543
    %v6545 = vrcp.pop %v6516
    %v6546 = vmul.f32 1.0, %v6545
    %v6547 = vrcp.pop %v6517
    %v6548 = vmul.f32 1.0, %v6547
    %v6549 = vrcp.pop %v6518
    %v6550 = vmul.f32 1.0, %v6549
    %v6567 = vlaneseq
    %v6568 = vand.u32 %v6567, 127
    %v6569 = vlaneseq
    %v6570 = vshrl.u32 %v6569, 7
    %v6571 = vsub.s32 %v6568, %v6570
    %v6572 = vrot.slane %v6520, %v6571
    %v6573 = vadd.s32 %v6568, 4294967288
    %v6574 = vlaneseq
    %v6575 = vshrl.u32 %v6574, 7
    %v6576 = vsub.s32 %v6573, %v6575
    %v6577 = vrot.slane %v6522, %v6576
    %vm6578 = vcmask 130112
    %v6579 = vsel %vm6578, %v6577, %v6572
    %v6580 = vadd.s32 %v6568, 4294967280
    %v6581 = vlaneseq
    %v6582 = vshrl.u32 %v6581, 7
    %v6583 = vsub.s32 %v6580, %v6582
    %v6584 = vrot.slane %v6524, %v6583
    %vm6585 = vcmask 195712
    %v6586 = vsel %vm6585, %v6584, %v6579
    %v6587 = vadd.s32 %v6568, 4294967272
    %v6588 = vlaneseq
    %v6589 = vshrl.u32 %v6588, 7
    %v6590 = vsub.s32 %v6587, %v6589
    %v6591 = vrot.slane %v6526, %v6590
    %vm6592 = vcmask 261312
    %v6593 = vsel %vm6592, %v6591, %v6586
    %v6594 = vadd.s32 %v6568, 4294967264
    %v6595 = vlaneseq
    %v6596 = vshrl.u32 %v6595, 7
    %v6597 = vsub.s32 %v6594, %v6596
    %v6598 = vrot.slane %v6528, %v6597
    %vm6599 = vcmask 326912
    %v6600 = vsel %vm6599, %v6598, %v6593
    %v6601 = vadd.s32 %v6568, 4294967256
    %v6602 = vlaneseq
    %v6603 = vshrl.u32 %v6602, 7
    %v6604 = vsub.s32 %v6601, %v6603
    %v6605 = vrot.slane %v6530, %v6604
    %vm6606 = vcmask 392512
    %v6607 = vsel %vm6606, %v6605, %v6600
    %v6608 = vadd.s32 %v6568, 4294967248
    %v6609 = vlaneseq
    %v6610 = vshrl.u32 %v6609, 7
    %v6611 = vsub.s32 %v6608, %v6610
    %v6612 = vrot.slane %v6532, %v6611
    %vm6613 = vcmask 458112
    %v6614 = vsel %vm6613, %v6612, %v6607
    %v6615 = vadd.s32 %v6568, 4294967240
    %v6616 = vlaneseq
    %v6617 = vshrl.u32 %v6616, 7
    %v6618 = vsub.s32 %v6615, %v6617
    %v6619 = vrot.slane %v6534, %v6618
    %vm6620 = vcmask 523712
    %v6621 = vsel %vm6620, %v6619, %v6614
    %v6622 = vadd.s32 %v6568, 4294967232
    %v6623 = vlaneseq
    %v6624 = vshrl.u32 %v6623, 7
    %v6625 = vsub.s32 %v6622, %v6624
    %v6626 = vrot.slane %v6536, %v6625
    %vm6627 = vcmask 589312
    %v6628 = vsel %vm6627, %v6626, %v6621
    %v6629 = vadd.s32 %v6568, 4294967224
    %v6630 = vlaneseq
    %v6631 = vshrl.u32 %v6630, 7
    %v6632 = vsub.s32 %v6629, %v6631
    %v6633 = vrot.slane %v6538, %v6632
    %vm6634 = vcmask 654912
    %v6635 = vsel %vm6634, %v6633, %v6628
    %v6636 = vadd.s32 %v6568, 4294967216
    %v6637 = vlaneseq
    %v6638 = vshrl.u32 %v6637, 7
    %v6639 = vsub.s32 %v6636, %v6638
    %v6640 = vrot.slane %v6540, %v6639
    %vm6641 = vcmask 720512
    %v6642 = vsel %vm6641, %v6640, %v6635
    %v6643 = vadd.s32 %v6568, 4294967208
    %v6644 = vlaneseq
    %v6645 = vshrl.u32 %v6644, 7
    %v6646 = vsub.s32 %v6643, %v6645
    %v6647 = vrot.slane %v6542, %v6646
    %vm6648 = vcmask 786112
    %v6649 = vsel %vm6648, %v6647, %v6642
    %v6650 = vadd.s32 %v6568, 4294967200
    %v6651 = vlaneseq
    %v6652 = vshrl.u32 %v6651, 7
    %v6653 = vsub.s32 %v6650, %v6652
    %v6654 = vrot.slane %v6544, %v6653
    %vm6655 = vcmask 851712
    %v6656 = vsel %vm6655, %v6654, %v6649
    %v6657 = vadd.s32 %v6568, 4294967192
    %v6658 = vlaneseq
    %v6659 = vshrl.u32 %v6658, 7
    %v6660 = vsub.s32 %v6657, %v6659
    %v6661 = vrot.slane %v6546, %v6660
    %vm6662 = vcmask 917312
    %v6663 = vsel %vm6662, %v6661, %v6656
    %v6664 = vadd.s32 %v6568, 4294967184
    %v6665 = vlaneseq
    %v6666 = vshrl.u32 %v6665, 7
    %v6667 = vsub.s32 %v6664, %v6666
    %v6668 = vrot.slane %v6548, %v6667
    %vm6669 = vcmask 982912
    %v6670 = vsel %vm6669, %v6668, %v6663
    %v6671 = vadd.s32 %v6568, 4294967176
    %v6672 = vlaneseq
    %v6673 = vshrl.u32 %v6672, 7
    %v6674 = vsub.s32 %v6671, %v6673
    %v6675 = vrot.slane %v6550, %v6674
    %vm6676 = vcmask 1048512
    %v6677 = vsel %vm6676, %v6675, %v6670
    %6679 = vst [vmem:[#allocation3] sm:$0x1] %v6677
    // Predicated region
    $region46: #{classifier_forward.1} parent=1 // pred_check
      _
    $region47: #{classifier_forward.1} parent=1 // pred_check_branch
      %6681 = sbr.rel (0) target = $region49
    $region48: #{classifier_forward.1} parent=1 // pred_region
      %s6683 = ssub.s32 16, 16
      %6684 = vsyncadd [#allocation4], %s6683
      %s6686 = sshll.u32 [#allocation3], 4
      %s6687 = int_to_ptr.vmem [resolvable:$true] %s6686
      %6689 = dma.vmem_to_hbm [thread:$0]  %s6687, 16, %s11, [#allocation4]
    $region49: #{classifier_forward.1} parent=1 // pred_fallthru
      _
    // Predicated region
    $region50: #{classifier_forward.1} parent=1 // pred_check
      _
    $region51: #{classifier_forward.1} parent=1 // pred_check_branch
      %6691 = sbr.rel (0) target = $region53
    $region52: #{classifier_forward.1} parent=1 // pred_region
      %6692 = dma.done [#allocation4], 16
    $region53: #{classifier_forward.1} parent=1 // pred_fallthru
      _
    %6693 = vsyncpa [#allocation4], 1

</llo_original>
